<compile_context>
chip_gen: v7x
topology: tpu7x:2x2x1
jax: 0.10.0
libtpu: 0.0.40
codegen_flags: <defaults>
</compile_context>

<pallas_src>
import functools
import math

import jax
import jax.numpy as jnp
import numpy as np
from jax.experimental import pallas as pl
from jax.experimental.pallas import tpu as pltpu


def mha_kernel(q_ref, k_ref, v_ref,            # (Sq, Bb, E), (Sk, Bb, E), (Sk, Bb, E)  f32
               wq_ref, wk_ref, wv_ref,         # (E, E) bf16 (pre-transposed; wq pre-scaled)
               bq_ref, bk_ref, bv_ref,         # (1, E) f32  (bq pre-scaled)
               wo_ref, bo_ref,                 # (E, E) bf16, (1, E) f32
               o_ref,                          # (Sq, Bb, E) f32
               ctx_ref,                        # (Bb*Sq, E) bf16 VMEM scratch
               *, nhead):
    Sq, Bb, E = q_ref.shape
    Sk = k_ref.shape[0]
    Dh = E // nhead

    # Assemble batch-contiguous (Bb*S, E) activations in VMEM (layout plumbing
    # stays on-chip, no extra HBM pass) and cast to bf16 for the MXU.
    xq = jnp.concatenate([q_ref[:, b, :] for b in range(Bb)], axis=0).astype(jnp.bfloat16)
    xk = jnp.concatenate([k_ref[:, b, :] for b in range(Bb)], axis=0).astype(jnp.bfloat16)
    xv = jnp.concatenate([v_ref[:, b, :] for b in range(Bb)], axis=0).astype(jnp.bfloat16)

    # Full-width projections, M = Bb*S rows (bf16 MXU operands, f32 accumulate).
    q = (jnp.dot(xq, wq_ref[...], preferred_element_type=jnp.float32)
         + bq_ref[...]).astype(jnp.bfloat16)                            # (Bb*Sq, E)
    k = jnp.dot(xk, wk_ref[...], preferred_element_type=jnp.float32) + bk_ref[...]
    v = (jnp.dot(xv, wv_ref[...], preferred_element_type=jnp.float32)
         + bv_ref[...]).astype(jnp.bfloat16)                            # (Bb*Sk, E)

    # K transpose hoisted out of the (batch, head) loops: one f32 transpose,
    # then a single cast to bf16.
    k_t = k.T.astype(jnp.bfloat16)                                      # (E, Bb*Sk)

    # Per-(batch, head) attention; contexts go straight into the bf16 scratch.
    # TODO(synk): switch to lax.fori_loop + pl.ds if nhead/Bb become large.
    for b in range(Bb):
        qb = q[b * Sq:(b + 1) * Sq, :]                                  # (Sq, E)
        for h in range(nhead):
            qh = qb[:, h * Dh:(h + 1) * Dh]                             # (Sq, Dh)
            kt_bh = k_t[h * Dh:(h + 1) * Dh, b * Sk:(b + 1) * Sk]       # (Dh, Sk)
            s = jnp.dot(qh, kt_bh, preferred_element_type=jnp.float32)  # (Sq, Sk) f32

            # numerically-stable softmax (f32); divide -> EUP approx reciprocal
            s = s - jnp.max(s, axis=-1, keepdims=True)
            p = jnp.exp(s)
            p = p * pl.reciprocal(jnp.sum(p, axis=-1, keepdims=True), approx=True)

            vh = v[b * Sk:(b + 1) * Sk, h * Dh:(h + 1) * Dh]            # (Sk, Dh)
            ctx = jnp.dot(p.astype(jnp.bfloat16), vh,
                          preferred_element_type=jnp.float32)           # (Sq, Dh) f32
            ctx_ref[b * Sq:(b + 1) * Sq, h * Dh:(h + 1) * Dh] = ctx.astype(jnp.bfloat16)

    # Single K=E output projection + bias (f32 result).
    out = jnp.dot(ctx_ref[...], wo_ref[...],
                  preferred_element_type=jnp.float32) + bo_ref[...]     # (Bb*Sq, E)

    # Scatter rows back to the (Sq, Bb, E) torch layout (static slices only).
    for b in range(Bb):
        o_ref[:, b, :] = out[b * Sq:(b + 1) * Sq, :]


def multihead_attention_custom(query, key, value, params, nhead):
    """query: (Sq, N, E), key/value: (Sk, N, E) (PyTorch layout). Returns (Sq, N, E)."""
    Sq, N, E = query.shape
    Sk = key.shape[0]
    assert E % nhead == 0
    Dh = E // nhead
    scale = 1.0 / math.sqrt(Dh)

    # Batch block: multiple batch rows per grid step. The second-minor block
    # dim must be a multiple of 8 or equal the full batch dim.
    B_blk = 8 if N % 8 == 0 else N
    n_blocks = N // B_blk

    # Pre-transpose weights so the kernel computes x @ W; fold the 1/sqrt(Dh)
    # query scaling into wq / bq once here (f32 fold, then bf16 cast).
    wq = (params["q_w"].T * scale).astype(jnp.bfloat16)
    wk = params["k_w"].T.astype(jnp.bfloat16)
    wv = params["v_w"].T.astype(jnp.bfloat16)
    wo = params["o_w"].T.astype(jnp.bfloat16)
    bq = (params["q_b"] * scale).reshape(1, E).astype(jnp.float32)
    bk = params["k_b"].reshape(1, E).astype(jnp.float32)
    bv = params["v_b"].reshape(1, E).astype(jnp.float32)
    bo = params["o_b"].reshape(1, E).astype(jnp.float32)

    kernel = functools.partial(mha_kernel, nhead=nhead)

    # VMEM budget with headroom, derived from the actual chip (128 MiB on
    # v5e/v6e, 64 MiB per TC on v7x) instead of a hard-coded number.
    try:
        vmem_cap = pltpu.get_tpu_info().vmem_capacity_bytes
    except Exception:
        vmem_cap = 64 * 1024 * 1024
    vmem_limit = max(32 * 1024 * 1024,
                     min((int(vmem_cap) * 3) // 4, 100 * 1024 * 1024))

    def build(single_buffer_weights):
        w_kwargs = {"pipeline_mode": pl.Buffered(1)} if single_buffer_weights else {}

        def const_spec(shape):
            # Constant index_map: fetched once; single-buffered when supported.
            return pl.BlockSpec(shape, lambda n: (0,) * len(shape), **w_kwargs)

        return pl.pallas_call(
            kernel,
            out_shape=jax.ShapeDtypeStruct((Sq, N, E), jnp.float32),
            grid_spec=pltpu.PrefetchScalarGridSpec(
                num_scalar_prefetch=0,
                grid=(n_blocks,),
                in_specs=[
                    pl.BlockSpec((Sq, B_blk, E), lambda n: (0, n, 0)),   # query
                    pl.BlockSpec((Sk, B_blk, E), lambda n: (0, n, 0)),   # key
                    pl.BlockSpec((Sk, B_blk, E), lambda n: (0, n, 0)),   # value
                    const_spec((E, E)),                                  # wq
                    const_spec((E, E)),                                  # wk
                    const_spec((E, E)),                                  # wv
                    const_spec((1, E)),                                  # bq
                    const_spec((1, E)),                                  # bk
                    const_spec((1, E)),                                  # bv
                    const_spec((E, E)),                                  # wo
                    const_spec((1, E)),                                  # bo
                ],
                out_specs=pl.BlockSpec((Sq, B_blk, E), lambda n: (0, n, 0)),
                scratch_shapes=[pltpu.VMEM((B_blk * Sq, E), jnp.bfloat16)],
            ),
            compiler_params=pltpu.CompilerParams(
                dimension_semantics=("parallel",),
                vmem_limit_bytes=vmem_limit,
            ),
        )

    args = (query, key, value, wq, wk, wv, bq, bk, bv, wo, bo)
    try:
        out = build(single_buffer_weights=True)(*args)
    except Exception:
        # Fallback if this jax build rejects pl.Buffered(1) on input specs.
        out = build(single_buffer_weights=False)(*args)
    return out


def make_params(key, d_model):
    ks = jax.random.split(key, 5)

    def xavier(k, shape):
        a = math.sqrt(6.0 / (shape[0] + shape[1]))
        return jax.random.uniform(k, shape, jnp.float32, -a, a)

    return {
        "q_w": xavier(ks[0], (d_model, d_model)),
        "k_w": xavier(ks[1], (d_model, d_model)),
        "v_w": xavier(ks[2], (d_model, d_model)),
        # small non-zero biases to exercise the bias (and scale-fold) path
        "q_b": jnp.full((d_model,), 0.01, jnp.float32),
        "k_b": jnp.full((d_model,), 0.02, jnp.float32),
        "v_b": jnp.full((d_model,), 0.03, jnp.float32),
        "o_w": xavier(ks[3], (d_model, d_model)),
        "o_b": 0.02 * jax.random.normal(ks[4], (d_model,), jnp.float32),
    }


def reference_mha(query, key, value, p, nhead):
    """Pure-JAX f32 re-implementation of MultiheadAttentionCustom.forward."""
    tgt_len, bsz, d_model = query.shape
    head_dim = d_model // nhead
    q = query @ p["q_w"].T + p["q_b"]
    k = key @ p["k_w"].T + p["k_b"]
    v = value @ p["v_w"].T + p["v_b"]
    q = q.reshape(tgt_len, bsz * nhead, head_dim).transpose(1, 0, 2)
    k = k.reshape(-1, bsz * nhead, head_dim).transpose(1, 0, 2)
    v = v.reshape(-1, bsz * nhead, head_dim).transpose(1, 0, 2)
    q = q * (float(head_dim) ** -0.5)
    s = jnp.einsum("bqd,bkd->bqk", q, k)
    w = jax.nn.softmax(s, axis=-1)          # dropout(p=0) == identity
    o = jnp.einsum("bqk,bkd->bqd", w, v)
    o = o.transpose(1, 0, 2).reshape(tgt_len, bsz, d_model)
    return o @ p["o_w"].T + p["o_b"]


if __name__ == "__main__":
    D_MODEL, NHEAD = 32, 4
    S_Q, S_KV, BATCH = 8, 16, 2

    root = jax.random.PRNGKey(0)
    kq, kk, kv, kp = jax.random.split(root, 4)
    query = jax.random.normal(kq, (S_Q, BATCH, D_MODEL), jnp.float32)
    key_t = jax.random.normal(kk, (S_KV, BATCH, D_MODEL), jnp.float32)
    value = jax.random.normal(kv, (S_KV, BATCH, D_MODEL), jnp.float32)
    params = make_params(kp, D_MODEL)

    out = multihead_attention_custom(query, key_t, value, params, NHEAD)
    out = jax.block_until_ready(out)

    ref = jax.block_until_ready(reference_mha(query, key_t, value, params, NHEAD))
    # bf16 MXU operands + approx reciprocal => compare against the f32
    # reference with bf16-level tolerance.
    np.testing.assert_allclose(np.asarray(out), np.asarray(ref), atol=8e-2, rtol=8e-2)

    assert out.shape == (S_Q, BATCH, D_MODEL)
    print("KERNEL_OK")
</pallas_src>

<mosaic_0001>
module attributes {stable_mosaic.version = 11 : i64} {
  func.func @mha_kernel(%arg0: i32, %arg1: memref<8x2x32xf32, #tpu.memory_space<vmem>>, %arg2: memref<16x2x32xf32, #tpu.memory_space<vmem>>, %arg3: memref<16x2x32xf32, #tpu.memory_space<vmem>>, %arg4: memref<32x32xbf16, #tpu.memory_space<vmem>>, %arg5: memref<32x32xbf16, #tpu.memory_space<vmem>>, %arg6: memref<32x32xbf16, #tpu.memory_space<vmem>>, %arg7: memref<1x32xf32, #tpu.memory_space<vmem>>, %arg8: memref<1x32xf32, #tpu.memory_space<vmem>>, %arg9: memref<1x32xf32, #tpu.memory_space<vmem>>, %arg10: memref<32x32xbf16, #tpu.memory_space<vmem>>, %arg11: memref<1x32xf32, #tpu.memory_space<vmem>>, %arg12: memref<8x2x32xf32, #tpu.memory_space<vmem>>, %arg13: memref<16x32xbf16, #tpu.memory_space<vmem>>) attributes {dimension_semantics = [#tpu.dimension_semantics<parallel>], iteration_bounds = array<i64: 1>, scalar_prefetch = 0 : i64, scratch_operands = 1 : i64, tpu.core_type = #tpu.core_type<tc>, window_params = [{transform_indices = @transform_0, window_bounds = array<i64: 8, 2, 32>}, {transform_indices = @transform_1, window_bounds = array<i64: 16, 2, 32>}, {transform_indices = @transform_2, window_bounds = array<i64: 16, 2, 32>}, {pipeline_mode = #tpu.pipeline_mode<synchronous>, transform_indices = @transform_3, window_bounds = array<i64: 32, 32>}, {pipeline_mode = #tpu.pipeline_mode<synchronous>, transform_indices = @transform_4, window_bounds = array<i64: 32, 32>}, {pipeline_mode = #tpu.pipeline_mode<synchronous>, transform_indices = @transform_5, window_bounds = array<i64: 32, 32>}, {pipeline_mode = #tpu.pipeline_mode<synchronous>, transform_indices = @transform_6, window_bounds = array<i64: 1, 32>}, {pipeline_mode = #tpu.pipeline_mode<synchronous>, transform_indices = @transform_7, window_bounds = array<i64: 1, 32>}, {pipeline_mode = #tpu.pipeline_mode<synchronous>, transform_indices = @transform_8, window_bounds = array<i64: 1, 32>}, {pipeline_mode = #tpu.pipeline_mode<synchronous>, transform_indices = @transform_9, window_bounds = array<i64: 32, 32>}, {pipeline_mode = #tpu.pipeline_mode<synchronous>, transform_indices = @transform_10, window_bounds = array<i64: 1, 32>}, {transform_indices = @transform_11, window_bounds = array<i64: 8, 2, 32>}]} {
    %c0 = arith.constant 0 : index
    %c0_0 = arith.constant 0 : index
    %c0_1 = arith.constant 0 : index
    %0 = vector.load %arg1[%c0, %c0_0, %c0_1] : memref<8x2x32xf32, #tpu.memory_space<vmem>>, vector<8x1x32xf32>
    %1 = vector.shape_cast %0 : vector<8x1x32xf32> to vector<8x32xf32>
    %c0_2 = arith.constant 0 : index
    %c1 = arith.constant 1 : index
    %c0_3 = arith.constant 0 : index
    %2 = vector.load %arg1[%c0_2, %c1, %c0_3] : memref<8x2x32xf32, #tpu.memory_space<vmem>>, vector<8x1x32xf32>
    %3 = vector.shape_cast %2 : vector<8x1x32xf32> to vector<8x32xf32>
    %4 = tpu.concatenate %1, %3 in 0 : vector<8x32xf32>, vector<8x32xf32> -> vector<16x32xf32>
    %5 = arith.truncf %4 : vector<16x32xf32> to vector<16x32xbf16>
    %c0_4 = arith.constant 0 : index
    %c0_5 = arith.constant 0 : index
    %c0_6 = arith.constant 0 : index
    %6 = vector.load %arg2[%c0_4, %c0_5, %c0_6] : memref<16x2x32xf32, #tpu.memory_space<vmem>>, vector<16x1x32xf32>
    %7 = vector.shape_cast %6 : vector<16x1x32xf32> to vector<16x32xf32>
    %c0_7 = arith.constant 0 : index
    %c1_8 = arith.constant 1 : index
    %c0_9 = arith.constant 0 : index
    %8 = vector.load %arg2[%c0_7, %c1_8, %c0_9] : memref<16x2x32xf32, #tpu.memory_space<vmem>>, vector<16x1x32xf32>
    %9 = vector.shape_cast %8 : vector<16x1x32xf32> to vector<16x32xf32>
    %10 = tpu.concatenate %7, %9 in 0 : vector<16x32xf32>, vector<16x32xf32> -> vector<32x32xf32>
    %11 = arith.truncf %10 : vector<32x32xf32> to vector<32x32xbf16>
    %c0_10 = arith.constant 0 : index
    %c0_11 = arith.constant 0 : index
    %c0_12 = arith.constant 0 : index
    %12 = vector.load %arg3[%c0_10, %c0_11, %c0_12] : memref<16x2x32xf32, #tpu.memory_space<vmem>>, vector<16x1x32xf32>
    %13 = vector.shape_cast %12 : vector<16x1x32xf32> to vector<16x32xf32>
    %c0_13 = arith.constant 0 : index
    %c1_14 = arith.constant 1 : index
    %c0_15 = arith.constant 0 : index
    %14 = vector.load %arg3[%c0_13, %c1_14, %c0_15] : memref<16x2x32xf32, #tpu.memory_space<vmem>>, vector<16x1x32xf32>
    %15 = vector.shape_cast %14 : vector<16x1x32xf32> to vector<16x32xf32>
    %16 = tpu.concatenate %13, %15 in 0 : vector<16x32xf32>, vector<16x32xf32> -> vector<32x32xf32>
    %17 = arith.truncf %16 : vector<32x32xf32> to vector<32x32xbf16>
    %c0_16 = arith.constant 0 : index
    %c0_17 = arith.constant 0 : index
    %18 = vector.load %arg4[%c0_16, %c0_17] : memref<32x32xbf16, #tpu.memory_space<vmem>>, vector<32x32xbf16>
    %cst = arith.constant dense<0.000000e+00> : vector<16x32xf32>
    %19 = tpu.matmul %5, %18, %cst {dimension_numbers = #tpu.dot_dimension_numbers<[1], [0], [0], [1], [0, 0, 1, 1], [], []>} : vector<16x32xbf16>, vector<32x32xbf16>, vector<16x32xf32> -> vector<16x32xf32>
    %c0_18 = arith.constant 0 : index
    %c0_19 = arith.constant 0 : index
    %20 = vector.load %arg7[%c0_18, %c0_19] : memref<1x32xf32, #tpu.memory_space<vmem>>, vector<1x32xf32>
    %21 = vector.broadcast %20 : vector<1x32xf32> to vector<16x32xf32>
    %22 = arith.addf %19, %21 : vector<16x32xf32>
    %23 = arith.truncf %22 : vector<16x32xf32> to vector<16x32xbf16>
    %c0_20 = arith.constant 0 : index
    %c0_21 = arith.constant 0 : index
    %24 = vector.load %arg5[%c0_20, %c0_21] : memref<32x32xbf16, #tpu.memory_space<vmem>>, vector<32x32xbf16>
    %cst_22 = arith.constant dense<0.000000e+00> : vector<32x32xf32>
    %25 = tpu.matmul %11, %24, %cst_22 {dimension_numbers = #tpu.dot_dimension_numbers<[1], [0], [0], [1], [0, 0, 1, 1], [], []>} : vector<32x32xbf16>, vector<32x32xbf16>, vector<32x32xf32> -> vector<32x32xf32>
    %c0_23 = arith.constant 0 : index
    %c0_24 = arith.constant 0 : index
    %26 = vector.load %arg8[%c0_23, %c0_24] : memref<1x32xf32, #tpu.memory_space<vmem>>, vector<1x32xf32>
    %27 = vector.broadcast %26 : vector<1x32xf32> to vector<32x32xf32>
    %28 = arith.addf %25, %27 : vector<32x32xf32>
    %c0_25 = arith.constant 0 : index
    %c0_26 = arith.constant 0 : index
    %29 = vector.load %arg6[%c0_25, %c0_26] : memref<32x32xbf16, #tpu.memory_space<vmem>>, vector<32x32xbf16>
    %cst_27 = arith.constant dense<0.000000e+00> : vector<32x32xf32>
    %30 = tpu.matmul %17, %29, %cst_27 {dimension_numbers = #tpu.dot_dimension_numbers<[1], [0], [0], [1], [0, 0, 1, 1], [], []>} : vector<32x32xbf16>, vector<32x32xbf16>, vector<32x32xf32> -> vector<32x32xf32>
    %c0_28 = arith.constant 0 : index
    %c0_29 = arith.constant 0 : index
    %31 = vector.load %arg9[%c0_28, %c0_29] : memref<1x32xf32, #tpu.memory_space<vmem>>, vector<1x32xf32>
    %32 = vector.broadcast %31 : vector<1x32xf32> to vector<32x32xf32>
    %33 = arith.addf %30, %32 : vector<32x32xf32>
    %34 = arith.truncf %33 : vector<32x32xf32> to vector<32x32xbf16>
    %35 = tpu.transpose %28, [1, 0] : vector<32x32xf32> -> vector<32x32xf32>
    %36 = arith.truncf %35 : vector<32x32xf32> to vector<32x32xbf16>
    %37 = vector.extract_strided_slice %23 {offsets = [0, 0], sizes = [8, 32], strides = [1, 1]} : vector<16x32xbf16> to vector<8x32xbf16>
    %38 = vector.extract_strided_slice %37 {offsets = [0, 0], sizes = [8, 8], strides = [1, 1]} : vector<8x32xbf16> to vector<8x8xbf16>
    %39 = vector.extract_strided_slice %36 {offsets = [0, 0], sizes = [8, 16], strides = [1, 1]} : vector<32x32xbf16> to vector<8x16xbf16>
    %cst_30 = arith.constant dense<0.000000e+00> : vector<8x16xf32>
    %40 = tpu.matmul %38, %39, %cst_30 {dimension_numbers = #tpu.dot_dimension_numbers<[1], [0], [0], [1], [0, 0, 1, 1], [], []>} : vector<8x8xbf16>, vector<8x16xbf16>, vector<8x16xf32> -> vector<8x16xf32>
    %cst_31 = arith.constant dense<0xFF800000> : vector<8xf32>
    %41 = vector.multi_reduction <maximumf>, %40, %cst_31 [1] : vector<8x16xf32> to vector<8xf32>
    %42 = vector.shape_cast %41 : vector<8xf32> to vector<8x1xf32>
    %43 = vector.broadcast %42 : vector<8x1xf32> to vector<8x16xf32>
    %44 = arith.subf %40, %43 : vector<8x16xf32>
    %45 = math.exp %44 : vector<8x16xf32>
    %cst_32 = arith.constant dense<0.000000e+00> : vector<8xf32>
    %46 = vector.multi_reduction <add>, %45, %cst_32 [1] : vector<8x16xf32> to vector<8xf32>
    %47 = vector.shape_cast %46 : vector<8xf32> to vector<8x1xf32>
    %48 = tpu.reciprocal %47 {approx = true} : vector<8x1xf32> -> vector<8x1xf32>
    %49 = vector.broadcast %48 : vector<8x1xf32> to vector<8x16xf32>
    %50 = arith.mulf %45, %49 : vector<8x16xf32>
    %51 = vector.extract_strided_slice %34 {offsets = [0, 0], sizes = [16, 8], strides = [1, 1]} : vector<32x32xbf16> to vector<16x8xbf16>
    %52 = arith.truncf %50 : vector<8x16xf32> to vector<8x16xbf16>
    %cst_33 = arith.constant dense<0.000000e+00> : vector<8x8xf32>
    %53 = tpu.matmul %52, %51, %cst_33 {dimension_numbers = #tpu.dot_dimension_numbers<[1], [0], [0], [1], [0, 0, 1, 1], [], []>} : vector<8x16xbf16>, vector<16x8xbf16>, vector<8x8xf32> -> vector<8x8xf32>
    %54 = arith.truncf %53 : vector<8x8xf32> to vector<8x8xbf16>
    %c0_34 = arith.constant 0 : index
    %c0_35 = arith.constant 0 : index
    %55 = vector.load %arg13[%c0_34, %c0_35] : memref<16x32xbf16, #tpu.memory_space<vmem>>, vector<8x8xbf16>
    tpu.vector_store %arg13[%c0_34, %c0_35], %54 {strides = array<i32>} : memref<16x32xbf16, #tpu.memory_space<vmem>>, vector<8x8xbf16>,
    %56 = vector.extract_strided_slice %37 {offsets = [0, 8], sizes = [8, 8], strides = [1, 1]} : vector<8x32xbf16> to vector<8x8xbf16>
    %57 = vector.extract_strided_slice %36 {offsets = [8, 0], sizes = [8, 16], strides = [1, 1]} : vector<32x32xbf16> to vector<8x16xbf16>
    %cst_36 = arith.constant dense<0.000000e+00> : vector<8x16xf32>
    %58 = tpu.matmul %56, %57, %cst_36 {dimension_numbers = #tpu.dot_dimension_numbers<[1], [0], [0], [1], [0, 0, 1, 1], [], []>} : vector<8x8xbf16>, vector<8x16xbf16>, vector<8x16xf32> -> vector<8x16xf32>
    %cst_37 = arith.constant dense<0xFF800000> : vector<8xf32>
    %59 = vector.multi_reduction <maximumf>, %58, %cst_37 [1] : vector<8x16xf32> to vector<8xf32>
    %60 = vector.shape_cast %59 : vector<8xf32> to vector<8x1xf32>
    %61 = vector.broadcast %60 : vector<8x1xf32> to vector<8x16xf32>
    %62 = arith.subf %58, %61 : vector<8x16xf32>
    %63 = math.exp %62 : vector<8x16xf32>
    %cst_38 = arith.constant dense<0.000000e+00> : vector<8xf32>
    %64 = vector.multi_reduction <add>, %63, %cst_38 [1] : vector<8x16xf32> to vector<8xf32>
    %65 = vector.shape_cast %64 : vector<8xf32> to vector<8x1xf32>
    %66 = tpu.reciprocal %65 {approx = true} : vector<8x1xf32> -> vector<8x1xf32>
    %67 = vector.broadcast %66 : vector<8x1xf32> to vector<8x16xf32>
    %68 = arith.mulf %63, %67 : vector<8x16xf32>
    %69 = vector.extract_strided_slice %34 {offsets = [0, 8], sizes = [16, 8], strides = [1, 1]} : vector<32x32xbf16> to vector<16x8xbf16>
    %70 = arith.truncf %68 : vector<8x16xf32> to vector<8x16xbf16>
    %cst_39 = arith.constant dense<0.000000e+00> : vector<8x8xf32>
    %71 = tpu.matmul %70, %69, %cst_39 {dimension_numbers = #tpu.dot_dimension_numbers<[1], [0], [0], [1], [0, 0, 1, 1], [], []>} : vector<8x16xbf16>, vector<16x8xbf16>, vector<8x8xf32> -> vector<8x8xf32>
    %72 = arith.truncf %71 : vector<8x8xf32> to vector<8x8xbf16>
    %c0_40 = arith.constant 0 : index
    %c8 = arith.constant 8 : index
    %73 = vector.load %arg13[%c0_40, %c8] : memref<16x32xbf16, #tpu.memory_space<vmem>>, vector<8x8xbf16>
    tpu.vector_store %arg13[%c0_40, %c8], %72 {strides = array<i32>} : memref<16x32xbf16, #tpu.memory_space<vmem>>, vector<8x8xbf16>,
    %74 = vector.extract_strided_slice %37 {offsets = [0, 16], sizes = [8, 8], strides = [1, 1]} : vector<8x32xbf16> to vector<8x8xbf16>
    %75 = vector.extract_strided_slice %36 {offsets = [16, 0], sizes = [8, 16], strides = [1, 1]} : vector<32x32xbf16> to vector<8x16xbf16>
    %cst_41 = arith.constant dense<0.000000e+00> : vector<8x16xf32>
    %76 = tpu.matmul %74, %75, %cst_41 {dimension_numbers = #tpu.dot_dimension_numbers<[1], [0], [0], [1], [0, 0, 1, 1], [], []>} : vector<8x8xbf16>, vector<8x16xbf16>, vector<8x16xf32> -> vector<8x16xf32>
    %cst_42 = arith.constant dense<0xFF800000> : vector<8xf32>
    %77 = vector.multi_reduction <maximumf>, %76, %cst_42 [1] : vector<8x16xf32> to vector<8xf32>
    %78 = vector.shape_cast %77 : vector<8xf32> to vector<8x1xf32>
    %79 = vector.broadcast %78 : vector<8x1xf32> to vector<8x16xf32>
    %80 = arith.subf %76, %79 : vector<8x16xf32>
    %81 = math.exp %80 : vector<8x16xf32>
    %cst_43 = arith.constant dense<0.000000e+00> : vector<8xf32>
    %82 = vector.multi_reduction <add>, %81, %cst_43 [1] : vector<8x16xf32> to vector<8xf32>
    %83 = vector.shape_cast %82 : vector<8xf32> to vector<8x1xf32>
    %84 = tpu.reciprocal %83 {approx = true} : vector<8x1xf32> -> vector<8x1xf32>
    %85 = vector.broadcast %84 : vector<8x1xf32> to vector<8x16xf32>
    %86 = arith.mulf %81, %85 : vector<8x16xf32>
    %87 = vector.extract_strided_slice %34 {offsets = [0, 16], sizes = [16, 8], strides = [1, 1]} : vector<32x32xbf16> to vector<16x8xbf16>
    %88 = arith.truncf %86 : vector<8x16xf32> to vector<8x16xbf16>
    %cst_44 = arith.constant dense<0.000000e+00> : vector<8x8xf32>
    %89 = tpu.matmul %88, %87, %cst_44 {dimension_numbers = #tpu.dot_dimension_numbers<[1], [0], [0], [1], [0, 0, 1, 1], [], []>} : vector<8x16xbf16>, vector<16x8xbf16>, vector<8x8xf32> -> vector<8x8xf32>
    %90 = arith.truncf %89 : vector<8x8xf32> to vector<8x8xbf16>
    %c0_45 = arith.constant 0 : index
    %c16 = arith.constant 16 : index
    %91 = vector.load %arg13[%c0_45, %c16] : memref<16x32xbf16, #tpu.memory_space<vmem>>, vector<8x8xbf16>
    tpu.vector_store %arg13[%c0_45, %c16], %90 {strides = array<i32>} : memref<16x32xbf16, #tpu.memory_space<vmem>>, vector<8x8xbf16>,
    %92 = vector.extract_strided_slice %37 {offsets = [0, 24], sizes = [8, 8], strides = [1, 1]} : vector<8x32xbf16> to vector<8x8xbf16>
    %93 = vector.extract_strided_slice %36 {offsets = [24, 0], sizes = [8, 16], strides = [1, 1]} : vector<32x32xbf16> to vector<8x16xbf16>
    %cst_46 = arith.constant dense<0.000000e+00> : vector<8x16xf32>
    %94 = tpu.matmul %92, %93, %cst_46 {dimension_numbers = #tpu.dot_dimension_numbers<[1], [0], [0], [1], [0, 0, 1, 1], [], []>} : vector<8x8xbf16>, vector<8x16xbf16>, vector<8x16xf32> -> vector<8x16xf32>
    %cst_47 = arith.constant dense<0xFF800000> : vector<8xf32>
    %95 = vector.multi_reduction <maximumf>, %94, %cst_47 [1] : vector<8x16xf32> to vector<8xf32>
    %96 = vector.shape_cast %95 : vector<8xf32> to vector<8x1xf32>
    %97 = vector.broadcast %96 : vector<8x1xf32> to vector<8x16xf32>
    %98 = arith.subf %94, %97 : vector<8x16xf32>
    %99 = math.exp %98 : vector<8x16xf32>
    %cst_48 = arith.constant dense<0.000000e+00> : vector<8xf32>
    %100 = vector.multi_reduction <add>, %99, %cst_48 [1] : vector<8x16xf32> to vector<8xf32>
    %101 = vector.shape_cast %100 : vector<8xf32> to vector<8x1xf32>
    %102 = tpu.reciprocal %101 {approx = true} : vector<8x1xf32> -> vector<8x1xf32>
    %103 = vector.broadcast %102 : vector<8x1xf32> to vector<8x16xf32>
    %104 = arith.mulf %99, %103 : vector<8x16xf32>
    %105 = vector.extract_strided_slice %34 {offsets = [0, 24], sizes = [16, 8], strides = [1, 1]} : vector<32x32xbf16> to vector<16x8xbf16>
    %106 = arith.truncf %104 : vector<8x16xf32> to vector<8x16xbf16>
    %cst_49 = arith.constant dense<0.000000e+00> : vector<8x8xf32>
    %107 = tpu.matmul %106, %105, %cst_49 {dimension_numbers = #tpu.dot_dimension_numbers<[1], [0], [0], [1], [0, 0, 1, 1], [], []>} : vector<8x16xbf16>, vector<16x8xbf16>, vector<8x8xf32> -> vector<8x8xf32>
    %108 = arith.truncf %107 : vector<8x8xf32> to vector<8x8xbf16>
    %c0_50 = arith.constant 0 : index
    %c24 = arith.constant 24 : index
    %109 = vector.load %arg13[%c0_50, %c24] : memref<16x32xbf16, #tpu.memory_space<vmem>>, vector<8x8xbf16>
    tpu.vector_store %arg13[%c0_50, %c24], %108 {strides = array<i32>} : memref<16x32xbf16, #tpu.memory_space<vmem>>, vector<8x8xbf16>,
    %110 = vector.extract_strided_slice %23 {offsets = [8, 0], sizes = [8, 32], strides = [1, 1]} : vector<16x32xbf16> to vector<8x32xbf16>
    %111 = vector.extract_strided_slice %110 {offsets = [0, 0], sizes = [8, 8], strides = [1, 1]} : vector<8x32xbf16> to vector<8x8xbf16>
    %112 = vector.extract_strided_slice %36 {offsets = [0, 16], sizes = [8, 16], strides = [1, 1]} : vector<32x32xbf16> to vector<8x16xbf16>
    %cst_51 = arith.constant dense<0.000000e+00> : vector<8x16xf32>
    %113 = tpu.matmul %111, %112, %cst_51 {dimension_numbers = #tpu.dot_dimension_numbers<[1], [0], [0], [1], [0, 0, 1, 1], [], []>} : vector<8x8xbf16>, vector<8x16xbf16>, vector<8x16xf32> -> vector<8x16xf32>
    %cst_52 = arith.constant dense<0xFF800000> : vector<8xf32>
    %114 = vector.multi_reduction <maximumf>, %113, %cst_52 [1] : vector<8x16xf32> to vector<8xf32>
    %115 = vector.shape_cast %114 : vector<8xf32> to vector<8x1xf32>
    %116 = vector.broadcast %115 : vector<8x1xf32> to vector<8x16xf32>
    %117 = arith.subf %113, %116 : vector<8x16xf32>
    %118 = math.exp %117 : vector<8x16xf32>
    %cst_53 = arith.constant dense<0.000000e+00> : vector<8xf32>
    %119 = vector.multi_reduction <add>, %118, %cst_53 [1] : vector<8x16xf32> to vector<8xf32>
    %120 = vector.shape_cast %119 : vector<8xf32> to vector<8x1xf32>
    %121 = tpu.reciprocal %120 {approx = true} : vector<8x1xf32> -> vector<8x1xf32>
    %122 = vector.broadcast %121 : vector<8x1xf32> to vector<8x16xf32>
    %123 = arith.mulf %118, %122 : vector<8x16xf32>
    %124 = vector.extract_strided_slice %34 {offsets = [16, 0], sizes = [16, 8], strides = [1, 1]} : vector<32x32xbf16> to vector<16x8xbf16>
    %125 = arith.truncf %123 : vector<8x16xf32> to vector<8x16xbf16>
    %cst_54 = arith.constant dense<0.000000e+00> : vector<8x8xf32>
    %126 = tpu.matmul %125, %124, %cst_54 {dimension_numbers = #tpu.dot_dimension_numbers<[1], [0], [0], [1], [0, 0, 1, 1], [], []>} : vector<8x16xbf16>, vector<16x8xbf16>, vector<8x8xf32> -> vector<8x8xf32>
    %127 = arith.truncf %126 : vector<8x8xf32> to vector<8x8xbf16>
    %c8_55 = arith.constant 8 : index
    %c0_56 = arith.constant 0 : index
    %128 = vector.load %arg13[%c8_55, %c0_56] : memref<16x32xbf16, #tpu.memory_space<vmem>>, vector<8x8xbf16>
    tpu.vector_store %arg13[%c8_55, %c0_56], %127 {strides = array<i32>} : memref<16x32xbf16, #tpu.memory_space<vmem>>, vector<8x8xbf16>,
    %129 = vector.extract_strided_slice %110 {offsets = [0, 8], sizes = [8, 8], strides = [1, 1]} : vector<8x32xbf16> to vector<8x8xbf16>
    %130 = vector.extract_strided_slice %36 {offsets = [8, 16], sizes = [8, 16], strides = [1, 1]} : vector<32x32xbf16> to vector<8x16xbf16>
    %cst_57 = arith.constant dense<0.000000e+00> : vector<8x16xf32>
    %131 = tpu.matmul %129, %130, %cst_57 {dimension_numbers = #tpu.dot_dimension_numbers<[1], [0], [0], [1], [0, 0, 1, 1], [], []>} : vector<8x8xbf16>, vector<8x16xbf16>, vector<8x16xf32> -> vector<8x16xf32>
    %cst_58 = arith.constant dense<0xFF800000> : vector<8xf32>
    %132 = vector.multi_reduction <maximumf>, %131, %cst_58 [1] : vector<8x16xf32> to vector<8xf32>
    %133 = vector.shape_cast %132 : vector<8xf32> to vector<8x1xf32>
    %134 = vector.broadcast %133 : vector<8x1xf32> to vector<8x16xf32>
    %135 = arith.subf %131, %134 : vector<8x16xf32>
    %136 = math.exp %135 : vector<8x16xf32>
    %cst_59 = arith.constant dense<0.000000e+00> : vector<8xf32>
    %137 = vector.multi_reduction <add>, %136, %cst_59 [1] : vector<8x16xf32> to vector<8xf32>
    %138 = vector.shape_cast %137 : vector<8xf32> to vector<8x1xf32>
    %139 = tpu.reciprocal %138 {approx = true} : vector<8x1xf32> -> vector<8x1xf32>
    %140 = vector.broadcast %139 : vector<8x1xf32> to vector<8x16xf32>
    %141 = arith.mulf %136, %140 : vector<8x16xf32>
    %142 = vector.extract_strided_slice %34 {offsets = [16, 8], sizes = [16, 8], strides = [1, 1]} : vector<32x32xbf16> to vector<16x8xbf16>
    %143 = arith.truncf %141 : vector<8x16xf32> to vector<8x16xbf16>
    %cst_60 = arith.constant dense<0.000000e+00> : vector<8x8xf32>
    %144 = tpu.matmul %143, %142, %cst_60 {dimension_numbers = #tpu.dot_dimension_numbers<[1], [0], [0], [1], [0, 0, 1, 1], [], []>} : vector<8x16xbf16>, vector<16x8xbf16>, vector<8x8xf32> -> vector<8x8xf32>
    %145 = arith.truncf %144 : vector<8x8xf32> to vector<8x8xbf16>
    %c8_61 = arith.constant 8 : index
    %c8_62 = arith.constant 8 : index
    %146 = vector.load %arg13[%c8_61, %c8_62] : memref<16x32xbf16, #tpu.memory_space<vmem>>, vector<8x8xbf16>
    tpu.vector_store %arg13[%c8_61, %c8_62], %145 {strides = array<i32>} : memref<16x32xbf16, #tpu.memory_space<vmem>>, vector<8x8xbf16>,
    %147 = vector.extract_strided_slice %110 {offsets = [0, 16], sizes = [8, 8], strides = [1, 1]} : vector<8x32xbf16> to vector<8x8xbf16>
    %148 = vector.extract_strided_slice %36 {offsets = [16, 16], sizes = [8, 16], strides = [1, 1]} : vector<32x32xbf16> to vector<8x16xbf16>
    %cst_63 = arith.constant dense<0.000000e+00> : vector<8x16xf32>
    %149 = tpu.matmul %147, %148, %cst_63 {dimension_numbers = #tpu.dot_dimension_numbers<[1], [0], [0], [1], [0, 0, 1, 1], [], []>} : vector<8x8xbf16>, vector<8x16xbf16>, vector<8x16xf32> -> vector<8x16xf32>
    %cst_64 = arith.constant dense<0xFF800000> : vector<8xf32>
    %150 = vector.multi_reduction <maximumf>, %149, %cst_64 [1] : vector<8x16xf32> to vector<8xf32>
    %151 = vector.shape_cast %150 : vector<8xf32> to vector<8x1xf32>
    %152 = vector.broadcast %151 : vector<8x1xf32> to vector<8x16xf32>
    %153 = arith.subf %149, %152 : vector<8x16xf32>
    %154 = math.exp %153 : vector<8x16xf32>
    %cst_65 = arith.constant dense<0.000000e+00> : vector<8xf32>
    %155 = vector.multi_reduction <add>, %154, %cst_65 [1] : vector<8x16xf32> to vector<8xf32>
    %156 = vector.shape_cast %155 : vector<8xf32> to vector<8x1xf32>
    %157 = tpu.reciprocal %156 {approx = true} : vector<8x1xf32> -> vector<8x1xf32>
    %158 = vector.broadcast %157 : vector<8x1xf32> to vector<8x16xf32>
    %159 = arith.mulf %154, %158 : vector<8x16xf32>
    %160 = vector.extract_strided_slice %34 {offsets = [16, 16], sizes = [16, 8], strides = [1, 1]} : vector<32x32xbf16> to vector<16x8xbf16>
    %161 = arith.truncf %159 : vector<8x16xf32> to vector<8x16xbf16>
    %cst_66 = arith.constant dense<0.000000e+00> : vector<8x8xf32>
    %162 = tpu.matmul %161, %160, %cst_66 {dimension_numbers = #tpu.dot_dimension_numbers<[1], [0], [0], [1], [0, 0, 1, 1], [], []>} : vector<8x16xbf16>, vector<16x8xbf16>, vector<8x8xf32> -> vector<8x8xf32>
    %163 = arith.truncf %162 : vector<8x8xf32> to vector<8x8xbf16>
    %c8_67 = arith.constant 8 : index
    %c16_68 = arith.constant 16 : index
    %164 = vector.load %arg13[%c8_67, %c16_68] : memref<16x32xbf16, #tpu.memory_space<vmem>>, vector<8x8xbf16>
    tpu.vector_store %arg13[%c8_67, %c16_68], %163 {strides = array<i32>} : memref<16x32xbf16, #tpu.memory_space<vmem>>, vector<8x8xbf16>,
    %165 = vector.extract_strided_slice %110 {offsets = [0, 24], sizes = [8, 8], strides = [1, 1]} : vector<8x32xbf16> to vector<8x8xbf16>
    %166 = vector.extract_strided_slice %36 {offsets = [24, 16], sizes = [8, 16], strides = [1, 1]} : vector<32x32xbf16> to vector<8x16xbf16>
    %cst_69 = arith.constant dense<0.000000e+00> : vector<8x16xf32>
    %167 = tpu.matmul %165, %166, %cst_69 {dimension_numbers = #tpu.dot_dimension_numbers<[1], [0], [0], [1], [0, 0, 1, 1], [], []>} : vector<8x8xbf16>, vector<8x16xbf16>, vector<8x16xf32> -> vector<8x16xf32>
    %cst_70 = arith.constant dense<0xFF800000> : vector<8xf32>
    %168 = vector.multi_reduction <maximumf>, %167, %cst_70 [1] : vector<8x16xf32> to vector<8xf32>
    %169 = vector.shape_cast %168 : vector<8xf32> to vector<8x1xf32>
    %170 = vector.broadcast %169 : vector<8x1xf32> to vector<8x16xf32>
    %171 = arith.subf %167, %170 : vector<8x16xf32>
    %172 = math.exp %171 : vector<8x16xf32>
    %cst_71 = arith.constant dense<0.000000e+00> : vector<8xf32>
    %173 = vector.multi_reduction <add>, %172, %cst_71 [1] : vector<8x16xf32> to vector<8xf32>
    %174 = vector.shape_cast %173 : vector<8xf32> to vector<8x1xf32>
    %175 = tpu.reciprocal %174 {approx = true} : vector<8x1xf32> -> vector<8x1xf32>
    %176 = vector.broadcast %175 : vector<8x1xf32> to vector<8x16xf32>
    %177 = arith.mulf %172, %176 : vector<8x16xf32>
    %178 = vector.extract_strided_slice %34 {offsets = [16, 24], sizes = [16, 8], strides = [1, 1]} : vector<32x32xbf16> to vector<16x8xbf16>
    %179 = arith.truncf %177 : vector<8x16xf32> to vector<8x16xbf16>
    %cst_72 = arith.constant dense<0.000000e+00> : vector<8x8xf32>
    %180 = tpu.matmul %179, %178, %cst_72 {dimension_numbers = #tpu.dot_dimension_numbers<[1], [0], [0], [1], [0, 0, 1, 1], [], []>} : vector<8x16xbf16>, vector<16x8xbf16>, vector<8x8xf32> -> vector<8x8xf32>
    %181 = arith.truncf %180 : vector<8x8xf32> to vector<8x8xbf16>
    %c8_73 = arith.constant 8 : index
    %c24_74 = arith.constant 24 : index
    %182 = vector.load %arg13[%c8_73, %c24_74] : memref<16x32xbf16, #tpu.memory_space<vmem>>, vector<8x8xbf16>
    tpu.vector_store %arg13[%c8_73, %c24_74], %181 {strides = array<i32>} : memref<16x32xbf16, #tpu.memory_space<vmem>>, vector<8x8xbf16>,
    %c0_75 = arith.constant 0 : index
    %c0_76 = arith.constant 0 : index
    %183 = vector.load %arg13[%c0_75, %c0_76] : memref<16x32xbf16, #tpu.memory_space<vmem>>, vector<16x32xbf16>
    %c0_77 = arith.constant 0 : index
    %c0_78 = arith.constant 0 : index
    %184 = vector.load %arg10[%c0_77, %c0_78] : memref<32x32xbf16, #tpu.memory_space<vmem>>, vector<32x32xbf16>
    %cst_79 = arith.constant dense<0.000000e+00> : vector<16x32xf32>
    %185 = tpu.matmul %183, %184, %cst_79 {dimension_numbers = #tpu.dot_dimension_numbers<[1], [0], [0], [1], [0, 0, 1, 1], [], []>} : vector<16x32xbf16>, vector<32x32xbf16>, vector<16x32xf32> -> vector<16x32xf32>
    %c0_80 = arith.constant 0 : index
    %c0_81 = arith.constant 0 : index
    %186 = vector.load %arg11[%c0_80, %c0_81] : memref<1x32xf32, #tpu.memory_space<vmem>>, vector<1x32xf32>
    %187 = vector.broadcast %186 : vector<1x32xf32> to vector<16x32xf32>
    %188 = arith.addf %185, %187 : vector<16x32xf32>
    %189 = vector.extract_strided_slice %188 {offsets = [0, 0], sizes = [8, 32], strides = [1, 1]} : vector<16x32xf32> to vector<8x32xf32>
    %c0_82 = arith.constant 0 : index
    %c0_83 = arith.constant 0 : index
    %c0_84 = arith.constant 0 : index
    %190 = vector.load %arg12[%c0_82, %c0_83, %c0_84] : memref<8x2x32xf32, #tpu.memory_space<vmem>>, vector<8x1x32xf32>
    %191 = vector.shape_cast %190 : vector<8x1x32xf32> to vector<8x32xf32>
    %192 = vector.shape_cast %189 : vector<8x32xf32> to vector<8x1x32xf32>
    tpu.vector_store %arg12[%c0_82, %c0_83, %c0_84], %192 {strides = array<i32>} : memref<8x2x32xf32, #tpu.memory_space<vmem>>, vector<8x1x32xf32>,
    %193 = vector.extract_strided_slice %188 {offsets = [8, 0], sizes = [8, 32], strides = [1, 1]} : vector<16x32xf32> to vector<8x32xf32>
    %c0_85 = arith.constant 0 : index
    %c1_86 = arith.constant 1 : index
    %c0_87 = arith.constant 0 : index
    %194 = vector.load %arg12[%c0_85, %c1_86, %c0_87] : memref<8x2x32xf32, #tpu.memory_space<vmem>>, vector<8x1x32xf32>
    %195 = vector.shape_cast %194 : vector<8x1x32xf32> to vector<8x32xf32>
    %196 = vector.shape_cast %193 : vector<8x32xf32> to vector<8x1x32xf32>
    tpu.vector_store %arg12[%c0_85, %c1_86, %c0_87], %196 {strides = array<i32>} : memref<8x2x32xf32, #tpu.memory_space<vmem>>, vector<8x1x32xf32>,
    return
  }
  func.func @transform_0(%arg0: i32) -> (i32, i32, i32) {
    %c0_i32 = arith.constant 0 : i32
    %c0_i32_0 = arith.constant 0 : i32
    %c0_i32_1 = arith.constant 0 : i32
    return %c0_i32, %arg0, %c0_i32_0 : i32, i32, i32
  }
  func.func @transform_1(%arg0: i32) -> (i32, i32, i32) {
    %c0_i32 = arith.constant 0 : i32
    %c0_i32_0 = arith.constant 0 : i32
    %c0_i32_1 = arith.constant 0 : i32
    return %c0_i32, %arg0, %c0_i32_0 : i32, i32, i32
  }
  func.func @transform_2(%arg0: i32) -> (i32, i32, i32) {
    %c0_i32 = arith.constant 0 : i32
    %c0_i32_0 = arith.constant 0 : i32
    %c0_i32_1 = arith.constant 0 : i32
    return %c0_i32, %arg0, %c0_i32_0 : i32, i32, i32
  }
  func.func @transform_3(%arg0: i32) -> (i32, i32) {
    %c0_i32 = arith.constant 0 : i32
    %c0_i32_0 = arith.constant 0 : i32
    %c0_i32_1 = arith.constant 0 : i32
    return %c0_i32, %c0_i32_0 : i32, i32
  }
  func.func @transform_4(%arg0: i32) -> (i32, i32) {
    %c0_i32 = arith.constant 0 : i32
    %c0_i32_0 = arith.constant 0 : i32
    %c0_i32_1 = arith.constant 0 : i32
    return %c0_i32, %c0_i32_0 : i32, i32
  }
  func.func @transform_5(%arg0: i32) -> (i32, i32) {
    %c0_i32 = arith.constant 0 : i32
    %c0_i32_0 = arith.constant 0 : i32
    %c0_i32_1 = arith.constant 0 : i32
    return %c0_i32, %c0_i32_0 : i32, i32
  }
  func.func @transform_6(%arg0: i32) -> (i32, i32) {
    %c0_i32 = arith.constant 0 : i32
    %c0_i32_0 = arith.constant 0 : i32
    %c0_i32_1 = arith.constant 0 : i32
    return %c0_i32, %c0_i32_0 : i32, i32
  }
  func.func @transform_7(%arg0: i32) -> (i32, i32) {
    %c0_i32 = arith.constant 0 : i32
    %c0_i32_0 = arith.constant 0 : i32
    %c0_i32_1 = arith.constant 0 : i32
    return %c0_i32, %c0_i32_0 : i32, i32
  }
  func.func @transform_8(%arg0: i32) -> (i32, i32) {
    %c0_i32 = arith.constant 0 : i32
    %c0_i32_0 = arith.constant 0 : i32
    %c0_i32_1 = arith.constant 0 : i32
    return %c0_i32, %c0_i32_0 : i32, i32
  }
  func.func @transform_9(%arg0: i32) -> (i32, i32) {
    %c0_i32 = arith.constant 0 : i32
    %c0_i32_0 = arith.constant 0 : i32
    %c0_i32_1 = arith.constant 0 : i32
    return %c0_i32, %c0_i32_0 : i32, i32
  }
  func.func @transform_10(%arg0: i32) -> (i32, i32) {
    %c0_i32 = arith.constant 0 : i32
    %c0_i32_0 = arith.constant 0 : i32
    %c0_i32_1 = arith.constant 0 : i32
    return %c0_i32, %c0_i32_0 : i32, i32
  }
  func.func @transform_11(%arg0: i32) -> (i32, i32, i32) {
    %c0_i32 = arith.constant 0 : i32
    %c0_i32_0 = arith.constant 0 : i32
    %c0_i32_1 = arith.constant 0 : i32
    return %c0_i32, %arg0, %c0_i32_0 : i32, i32, i32
  }
}

module attributes {stable_mosaic.version = 11 : i64} {
  func.func @mha_kernel(%arg0: i32, %arg1: memref<8x2x32xf32, #tpu.memory_space<vmem>>, %arg2: memref<16x2x32xf32, #tpu.memory_space<vmem>>, %arg3: memref<16x2x32xf32, #tpu.memory_space<vmem>>, %arg4: memref<32x32xbf16, #tpu.memory_space<vmem>>, %arg5: memref<32x32xbf16, #tpu.memory_space<vmem>>, %arg6: memref<32x32xbf16, #tpu.memory_space<vmem>>, %arg7: memref<1x32xf32, #tpu.memory_space<vmem>>, %arg8: memref<1x32xf32, #tpu.memory_space<vmem>>, %arg9: memref<1x32xf32, #tpu.memory_space<vmem>>, %arg10: memref<32x32xbf16, #tpu.memory_space<vmem>>, %arg11: memref<1x32xf32, #tpu.memory_space<vmem>>, %arg12: memref<8x2x32xf32, #tpu.memory_space<vmem>>, %arg13: memref<16x32xbf16, #tpu.memory_space<vmem>>) attributes {dimension_semantics = [#tpu.dimension_semantics<parallel>], iteration_bounds = array<i64: 1>, scalar_prefetch = 0 : i64, scratch_operands = 1 : i64, tpu.core_type = #tpu.core_type<tc>, window_params = [{transform_indices = @transform_0, window_bounds = array<i64: 8, 2, 32>}, {transform_indices = @transform_1, window_bounds = array<i64: 16, 2, 32>}, {transform_indices = @transform_2, window_bounds = array<i64: 16, 2, 32>}, {pipeline_mode = #tpu.pipeline_mode<synchronous>, transform_indices = @transform_3, window_bounds = array<i64: 32, 32>}, {pipeline_mode = #tpu.pipeline_mode<synchronous>, transform_indices = @transform_4, window_bounds = array<i64: 32, 32>}, {pipeline_mode = #tpu.pipeline_mode<synchronous>, transform_indices = @transform_5, window_bounds = array<i64: 32, 32>}, {pipeline_mode = #tpu.pipeline_mode<synchronous>, transform_indices = @transform_6, window_bounds = array<i64: 1, 32>}, {pipeline_mode = #tpu.pipeline_mode<synchronous>, transform_indices = @transform_7, window_bounds = array<i64: 1, 32>}, {pipeline_mode = #tpu.pipeline_mode<synchronous>, transform_indices = @transform_8, window_bounds = array<i64: 1, 32>}, {pipeline_mode = #tpu.pipeline_mode<synchronous>, transform_indices = @transform_9, window_bounds = array<i64: 32, 32>}, {pipeline_mode = #tpu.pipeline_mode<synchronous>, transform_indices = @transform_10, window_bounds = array<i64: 1, 32>}, {transform_indices = @transform_11, window_bounds = array<i64: 8, 2, 32>}]} {
    %c0 = arith.constant 0 : index
    %c0_0 = arith.constant 0 : index
    %c0_1 = arith.constant 0 : index
    %0 = vector.load %arg1[%c0, %c0_0, %c0_1] : memref<8x2x32xf32, #tpu.memory_space<vmem>>, vector<8x1x32xf32>
    %1 = vector.shape_cast %0 : vector<8x1x32xf32> to vector<8x32xf32>
    %c0_2 = arith.constant 0 : index
    %c1 = arith.constant 1 : index
    %c0_3 = arith.constant 0 : index
    %2 = vector.load %arg1[%c0_2, %c1, %c0_3] : memref<8x2x32xf32, #tpu.memory_space<vmem>>, vector<8x1x32xf32>
    %3 = vector.shape_cast %2 : vector<8x1x32xf32> to vector<8x32xf32>
    %4 = tpu.concatenate %1, %3 in 0 : vector<8x32xf32>, vector<8x32xf32> -> vector<16x32xf32>
    %5 = arith.truncf %4 : vector<16x32xf32> to vector<16x32xbf16>
    %c0_4 = arith.constant 0 : index
    %c0_5 = arith.constant 0 : index
    %c0_6 = arith.constant 0 : index
    %6 = vector.load %arg2[%c0_4, %c0_5, %c0_6] : memref<16x2x32xf32, #tpu.memory_space<vmem>>, vector<16x1x32xf32>
    %7 = vector.shape_cast %6 : vector<16x1x32xf32> to vector<16x32xf32>
    %c0_7 = arith.constant 0 : index
    %c1_8 = arith.constant 1 : index
    %c0_9 = arith.constant 0 : index
    %8 = vector.load %arg2[%c0_7, %c1_8, %c0_9] : memref<16x2x32xf32, #tpu.memory_space<vmem>>, vector<16x1x32xf32>
    %9 = vector.shape_cast %8 : vector<16x1x32xf32> to vector<16x32xf32>
    %10 = tpu.concatenate %7, %9 in 0 : vector<16x32xf32>, vector<16x32xf32> -> vector<32x32xf32>
    %11 = arith.truncf %10 : vector<32x32xf32> to vector<32x32xbf16>
    %c0_10 = arith.constant 0 : index
    %c0_11 = arith.constant 0 : index
    %c0_12 = arith.constant 0 : index
    %12 = vector.load %arg3[%c0_10, %c0_11, %c0_12] : memref<16x2x32xf32, #tpu.memory_space<vmem>>, vector<16x1x32xf32>
    %13 = vector.shape_cast %12 : vector<16x1x32xf32> to vector<16x32xf32>
    %c0_13 = arith.constant 0 : index
    %c1_14 = arith.constant 1 : index
    %c0_15 = arith.constant 0 : index
    %14 = vector.load %arg3[%c0_13, %c1_14, %c0_15] : memref<16x2x32xf32, #tpu.memory_space<vmem>>, vector<16x1x32xf32>
    %15 = vector.shape_cast %14 : vector<16x1x32xf32> to vector<16x32xf32>
    %16 = tpu.concatenate %13, %15 in 0 : vector<16x32xf32>, vector<16x32xf32> -> vector<32x32xf32>
    %17 = arith.truncf %16 : vector<32x32xf32> to vector<32x32xbf16>
    %c0_16 = arith.constant 0 : index
    %c0_17 = arith.constant 0 : index
    %18 = vector.load %arg4[%c0_16, %c0_17] : memref<32x32xbf16, #tpu.memory_space<vmem>>, vector<32x32xbf16>
    %cst = arith.constant dense<0.000000e+00> : vector<16x32xf32>
    %19 = tpu.matmul %5, %18, %cst {dimension_numbers = #tpu.dot_dimension_numbers<[1], [0], [0], [1], [0, 0, 1, 1], [], []>} : vector<16x32xbf16>, vector<32x32xbf16>, vector<16x32xf32> -> vector<16x32xf32>
    %c0_18 = arith.constant 0 : index
    %c0_19 = arith.constant 0 : index
    %20 = vector.load %arg7[%c0_18, %c0_19] : memref<1x32xf32, #tpu.memory_space<vmem>>, vector<1x32xf32>
    %21 = vector.broadcast %20 : vector<1x32xf32> to vector<16x32xf32>
    %22 = arith.addf %19, %21 : vector<16x32xf32>
    %23 = arith.truncf %22 : vector<16x32xf32> to vector<16x32xbf16>
    %c0_20 = arith.constant 0 : index
    %c0_21 = arith.constant 0 : index
    %24 = vector.load %arg5[%c0_20, %c0_21] : memref<32x32xbf16, #tpu.memory_space<vmem>>, vector<32x32xbf16>
    %cst_22 = arith.constant dense<0.000000e+00> : vector<32x32xf32>
    %25 = tpu.matmul %11, %24, %cst_22 {dimension_numbers = #tpu.dot_dimension_numbers<[1], [0], [0], [1], [0, 0, 1, 1], [], []>} : vector<32x32xbf16>, vector<32x32xbf16>, vector<32x32xf32> -> vector<32x32xf32>
    %c0_23 = arith.constant 0 : index
    %c0_24 = arith.constant 0 : index
    %26 = vector.load %arg8[%c0_23, %c0_24] : memref<1x32xf32, #tpu.memory_space<vmem>>, vector<1x32xf32>
    %27 = vector.broadcast %26 : vector<1x32xf32> to vector<32x32xf32>
    %28 = arith.addf %25, %27 : vector<32x32xf32>
    %c0_25 = arith.constant 0 : index
    %c0_26 = arith.constant 0 : index
    %29 = vector.load %arg6[%c0_25, %c0_26] : memref<32x32xbf16, #tpu.memory_space<vmem>>, vector<32x32xbf16>
    %cst_27 = arith.constant dense<0.000000e+00> : vector<32x32xf32>
    %30 = tpu.matmul %17, %29, %cst_27 {dimension_numbers = #tpu.dot_dimension_numbers<[1], [0], [0], [1], [0, 0, 1, 1], [], []>} : vector<32x32xbf16>, vector<32x32xbf16>, vector<32x32xf32> -> vector<32x32xf32>
    %c0_28 = arith.constant 0 : index
    %c0_29 = arith.constant 0 : index
    %31 = vector.load %arg9[%c0_28, %c0_29] : memref<1x32xf32, #tpu.memory_space<vmem>>, vector<1x32xf32>
    %32 = vector.broadcast %31 : vector<1x32xf32> to vector<32x32xf32>
    %33 = arith.addf %30, %32 : vector<32x32xf32>
    %34 = arith.truncf %33 : vector<32x32xf32> to vector<32x32xbf16>
    %35 = tpu.transpose %28, [1, 0] : vector<32x32xf32> -> vector<32x32xf32>
    %36 = arith.truncf %35 : vector<32x32xf32> to vector<32x32xbf16>
    %37 = vector.extract_strided_slice %23 {offsets = [0, 0], sizes = [8, 32], strides = [1, 1]} : vector<16x32xbf16> to vector<8x32xbf16>
    %38 = vector.extract_strided_slice %37 {offsets = [0, 0], sizes = [8, 8], strides = [1, 1]} : vector<8x32xbf16> to vector<8x8xbf16>
    %39 = vector.extract_strided_slice %36 {offsets = [0, 0], sizes = [8, 16], strides = [1, 1]} : vector<32x32xbf16> to vector<8x16xbf16>
    %cst_30 = arith.constant dense<0.000000e+00> : vector<8x16xf32>
    %40 = tpu.matmul %38, %39, %cst_30 {dimension_numbers = #tpu.dot_dimension_numbers<[1], [0], [0], [1], [0, 0, 1, 1], [], []>} : vector<8x8xbf16>, vector<8x16xbf16>, vector<8x16xf32> -> vector<8x16xf32>
    %cst_31 = arith.constant dense<0xFF800000> : vector<8xf32>
    %41 = vector.multi_reduction <maximumf>, %40, %cst_31 [1] : vector<8x16xf32> to vector<8xf32>
    %42 = vector.shape_cast %41 : vector<8xf32> to vector<8x1xf32>
    %43 = vector.broadcast %42 : vector<8x1xf32> to vector<8x16xf32>
    %44 = arith.subf %40, %43 : vector<8x16xf32>
    %45 = math.exp %44 : vector<8x16xf32>
    %cst_32 = arith.constant dense<0.000000e+00> : vector<8xf32>
    %46 = vector.multi_reduction <add>, %45, %cst_32 [1] : vector<8x16xf32> to vector<8xf32>
    %47 = vector.shape_cast %46 : vector<8xf32> to vector<8x1xf32>
    %48 = tpu.reciprocal %47 {approx = true} : vector<8x1xf32> -> vector<8x1xf32>
    %49 = vector.broadcast %48 : vector<8x1xf32> to vector<8x16xf32>
    %50 = arith.mulf %45, %49 : vector<8x16xf32>
    %51 = vector.extract_strided_slice %34 {offsets = [0, 0], sizes = [16, 8], strides = [1, 1]} : vector<32x32xbf16> to vector<16x8xbf16>
    %52 = arith.truncf %50 : vector<8x16xf32> to vector<8x16xbf16>
    %cst_33 = arith.constant dense<0.000000e+00> : vector<8x8xf32>
    %53 = tpu.matmul %52, %51, %cst_33 {dimension_numbers = #tpu.dot_dimension_numbers<[1], [0], [0], [1], [0, 0, 1, 1], [], []>} : vector<8x16xbf16>, vector<16x8xbf16>, vector<8x8xf32> -> vector<8x8xf32>
    %54 = arith.truncf %53 : vector<8x8xf32> to vector<8x8xbf16>
    %c0_34 = arith.constant 0 : index
    %c0_35 = arith.constant 0 : index
    %55 = vector.load %arg13[%c0_34, %c0_35] : memref<16x32xbf16, #tpu.memory_space<vmem>>, vector<8x8xbf16>
    tpu.vector_store %arg13[%c0_34, %c0_35], %54 {strides = array<i32>} : memref<16x32xbf16, #tpu.memory_space<vmem>>, vector<8x8xbf16>,
    %56 = vector.extract_strided_slice %37 {offsets = [0, 8], sizes = [8, 8], strides = [1, 1]} : vector<8x32xbf16> to vector<8x8xbf16>
    %57 = vector.extract_strided_slice %36 {offsets = [8, 0], sizes = [8, 16], strides = [1, 1]} : vector<32x32xbf16> to vector<8x16xbf16>
    %cst_36 = arith.constant dense<0.000000e+00> : vector<8x16xf32>
    %58 = tpu.matmul %56, %57, %cst_36 {dimension_numbers = #tpu.dot_dimension_numbers<[1], [0], [0], [1], [0, 0, 1, 1], [], []>} : vector<8x8xbf16>, vector<8x16xbf16>, vector<8x16xf32> -> vector<8x16xf32>
    %cst_37 = arith.constant dense<0xFF800000> : vector<8xf32>
    %59 = vector.multi_reduction <maximumf>, %58, %cst_37 [1] : vector<8x16xf32> to vector<8xf32>
    %60 = vector.shape_cast %59 : vector<8xf32> to vector<8x1xf32>
    %61 = vector.broadcast %60 : vector<8x1xf32> to vector<8x16xf32>
    %62 = arith.subf %58, %61 : vector<8x16xf32>
    %63 = math.exp %62 : vector<8x16xf32>
    %cst_38 = arith.constant dense<0.000000e+00> : vector<8xf32>
    %64 = vector.multi_reduction <add>, %63, %cst_38 [1] : vector<8x16xf32> to vector<8xf32>
    %65 = vector.shape_cast %64 : vector<8xf32> to vector<8x1xf32>
    %66 = tpu.reciprocal %65 {approx = true} : vector<8x1xf32> -> vector<8x1xf32>
    %67 = vector.broadcast %66 : vector<8x1xf32> to vector<8x16xf32>
    %68 = arith.mulf %63, %67 : vector<8x16xf32>
    %69 = vector.extract_strided_slice %34 {offsets = [0, 8], sizes = [16, 8], strides = [1, 1]} : vector<32x32xbf16> to vector<16x8xbf16>
    %70 = arith.truncf %68 : vector<8x16xf32> to vector<8x16xbf16>
    %cst_39 = arith.constant dense<0.000000e+00> : vector<8x8xf32>
    %71 = tpu.matmul %70, %69, %cst_39 {dimension_numbers = #tpu.dot_dimension_numbers<[1], [0], [0], [1], [0, 0, 1, 1], [], []>} : vector<8x16xbf16>, vector<16x8xbf16>, vector<8x8xf32> -> vector<8x8xf32>
    %72 = arith.truncf %71 : vector<8x8xf32> to vector<8x8xbf16>
    %c0_40 = arith.constant 0 : index
    %c8 = arith.constant 8 : index
    %73 = vector.load %arg13[%c0_40, %c8] : memref<16x32xbf16, #tpu.memory_space<vmem>>, vector<8x8xbf16>
    tpu.vector_store %arg13[%c0_40, %c8], %72 {strides = array<i32>} : memref<16x32xbf16, #tpu.memory_space<vmem>>, vector<8x8xbf16>,
    %74 = vector.extract_strided_slice %37 {offsets = [0, 16], sizes = [8, 8], strides = [1, 1]} : vector<8x32xbf16> to vector<8x8xbf16>
    %75 = vector.extract_strided_slice %36 {offsets = [16, 0], sizes = [8, 16], strides = [1, 1]} : vector<32x32xbf16> to vector<8x16xbf16>
    %cst_41 = arith.constant dense<0.000000e+00> : vector<8x16xf32>
    %76 = tpu.matmul %74, %75, %cst_41 {dimension_numbers = #tpu.dot_dimension_numbers<[1], [0], [0], [1], [0, 0, 1, 1], [], []>} : vector<8x8xbf16>, vector<8x16xbf16>, vector<8x16xf32> -> vector<8x16xf32>
    %cst_42 = arith.constant dense<0xFF800000> : vector<8xf32>
    %77 = vector.multi_reduction <maximumf>, %76, %cst_42 [1] : vector<8x16xf32> to vector<8xf32>
    %78 = vector.shape_cast %77 : vector<8xf32> to vector<8x1xf32>
    %79 = vector.broadcast %78 : vector<8x1xf32> to vector<8x16xf32>
    %80 = arith.subf %76, %79 : vector<8x16xf32>
    %81 = math.exp %80 : vector<8x16xf32>
    %cst_43 = arith.constant dense<0.000000e+00> : vector<8xf32>
    %82 = vector.multi_reduction <add>, %81, %cst_43 [1] : vector<8x16xf32> to vector<8xf32>
    %83 = vector.shape_cast %82 : vector<8xf32> to vector<8x1xf32>
    %84 = tpu.reciprocal %83 {approx = true} : vector<8x1xf32> -> vector<8x1xf32>
    %85 = vector.broadcast %84 : vector<8x1xf32> to vector<8x16xf32>
    %86 = arith.mulf %81, %85 : vector<8x16xf32>
    %87 = vector.extract_strided_slice %34 {offsets = [0, 16], sizes = [16, 8], strides = [1, 1]} : vector<32x32xbf16> to vector<16x8xbf16>
    %88 = arith.truncf %86 : vector<8x16xf32> to vector<8x16xbf16>
    %cst_44 = arith.constant dense<0.000000e+00> : vector<8x8xf32>
    %89 = tpu.matmul %88, %87, %cst_44 {dimension_numbers = #tpu.dot_dimension_numbers<[1], [0], [0], [1], [0, 0, 1, 1], [], []>} : vector<8x16xbf16>, vector<16x8xbf16>, vector<8x8xf32> -> vector<8x8xf32>
    %90 = arith.truncf %89 : vector<8x8xf32> to vector<8x8xbf16>
    %c0_45 = arith.constant 0 : index
    %c16 = arith.constant 16 : index
    %91 = vector.load %arg13[%c0_45, %c16] : memref<16x32xbf16, #tpu.memory_space<vmem>>, vector<8x8xbf16>
    tpu.vector_store %arg13[%c0_45, %c16], %90 {strides = array<i32>} : memref<16x32xbf16, #tpu.memory_space<vmem>>, vector<8x8xbf16>,
    %92 = vector.extract_strided_slice %37 {offsets = [0, 24], sizes = [8, 8], strides = [1, 1]} : vector<8x32xbf16> to vector<8x8xbf16>
    %93 = vector.extract_strided_slice %36 {offsets = [24, 0], sizes = [8, 16], strides = [1, 1]} : vector<32x32xbf16> to vector<8x16xbf16>
    %cst_46 = arith.constant dense<0.000000e+00> : vector<8x16xf32>
    %94 = tpu.matmul %92, %93, %cst_46 {dimension_numbers = #tpu.dot_dimension_numbers<[1], [0], [0], [1], [0, 0, 1, 1], [], []>} : vector<8x8xbf16>, vector<8x16xbf16>, vector<8x16xf32> -> vector<8x16xf32>
    %cst_47 = arith.constant dense<0xFF800000> : vector<8xf32>
    %95 = vector.multi_reduction <maximumf>, %94, %cst_47 [1] : vector<8x16xf32> to vector<8xf32>
    %96 = vector.shape_cast %95 : vector<8xf32> to vector<8x1xf32>
    %97 = vector.broadcast %96 : vector<8x1xf32> to vector<8x16xf32>
    %98 = arith.subf %94, %97 : vector<8x16xf32>
    %99 = math.exp %98 : vector<8x16xf32>
    %cst_48 = arith.constant dense<0.000000e+00> : vector<8xf32>
    %100 = vector.multi_reduction <add>, %99, %cst_48 [1] : vector<8x16xf32> to vector<8xf32>
    %101 = vector.shape_cast %100 : vector<8xf32> to vector<8x1xf32>
    %102 = tpu.reciprocal %101 {approx = true} : vector<8x1xf32> -> vector<8x1xf32>
    %103 = vector.broadcast %102 : vector<8x1xf32> to vector<8x16xf32>
    %104 = arith.mulf %99, %103 : vector<8x16xf32>
    %105 = vector.extract_strided_slice %34 {offsets = [0, 24], sizes = [16, 8], strides = [1, 1]} : vector<32x32xbf16> to vector<16x8xbf16>
    %106 = arith.truncf %104 : vector<8x16xf32> to vector<8x16xbf16>
    %cst_49 = arith.constant dense<0.000000e+00> : vector<8x8xf32>
    %107 = tpu.matmul %106, %105, %cst_49 {dimension_numbers = #tpu.dot_dimension_numbers<[1], [0], [0], [1], [0, 0, 1, 1], [], []>} : vector<8x16xbf16>, vector<16x8xbf16>, vector<8x8xf32> -> vector<8x8xf32>
    %108 = arith.truncf %107 : vector<8x8xf32> to vector<8x8xbf16>
    %c0_50 = arith.constant 0 : index
    %c24 = arith.constant 24 : index
    %109 = vector.load %arg13[%c0_50, %c24] : memref<16x32xbf16, #tpu.memory_space<vmem>>, vector<8x8xbf16>
    tpu.vector_store %arg13[%c0_50, %c24], %108 {strides = array<i32>} : memref<16x32xbf16, #tpu.memory_space<vmem>>, vector<8x8xbf16>,
    %110 = vector.extract_strided_slice %23 {offsets = [8, 0], sizes = [8, 32], strides = [1, 1]} : vector<16x32xbf16> to vector<8x32xbf16>
    %111 = vector.extract_strided_slice %110 {offsets = [0, 0], sizes = [8, 8], strides = [1, 1]} : vector<8x32xbf16> to vector<8x8xbf16>
    %112 = vector.extract_strided_slice %36 {offsets = [0, 16], sizes = [8, 16], strides = [1, 1]} : vector<32x32xbf16> to vector<8x16xbf16>
    %cst_51 = arith.constant dense<0.000000e+00> : vector<8x16xf32>
    %113 = tpu.matmul %111, %112, %cst_51 {dimension_numbers = #tpu.dot_dimension_numbers<[1], [0], [0], [1], [0, 0, 1, 1], [], []>} : vector<8x8xbf16>, vector<8x16xbf16>, vector<8x16xf32> -> vector<8x16xf32>
    %cst_52 = arith.constant dense<0xFF800000> : vector<8xf32>
    %114 = vector.multi_reduction <maximumf>, %113, %cst_52 [1] : vector<8x16xf32> to vector<8xf32>
    %115 = vector.shape_cast %114 : vector<8xf32> to vector<8x1xf32>
    %116 = vector.broadcast %115 : vector<8x1xf32> to vector<8x16xf32>
    %117 = arith.subf %113, %116 : vector<8x16xf32>
    %118 = math.exp %117 : vector<8x16xf32>
    %cst_53 = arith.constant dense<0.000000e+00> : vector<8xf32>
    %119 = vector.multi_reduction <add>, %118, %cst_53 [1] : vector<8x16xf32> to vector<8xf32>
    %120 = vector.shape_cast %119 : vector<8xf32> to vector<8x1xf32>
    %121 = tpu.reciprocal %120 {approx = true} : vector<8x1xf32> -> vector<8x1xf32>
    %122 = vector.broadcast %121 : vector<8x1xf32> to vector<8x16xf32>
    %123 = arith.mulf %118, %122 : vector<8x16xf32>
    %124 = vector.extract_strided_slice %34 {offsets = [16, 0], sizes = [16, 8], strides = [1, 1]} : vector<32x32xbf16> to vector<16x8xbf16>
    %125 = arith.truncf %123 : vector<8x16xf32> to vector<8x16xbf16>
    %cst_54 = arith.constant dense<0.000000e+00> : vector<8x8xf32>
    %126 = tpu.matmul %125, %124, %cst_54 {dimension_numbers = #tpu.dot_dimension_numbers<[1], [0], [0], [1], [0, 0, 1, 1], [], []>} : vector<8x16xbf16>, vector<16x8xbf16>, vector<8x8xf32> -> vector<8x8xf32>
    %127 = arith.truncf %126 : vector<8x8xf32> to vector<8x8xbf16>
    %c8_55 = arith.constant 8 : index
    %c0_56 = arith.constant 0 : index
    %128 = vector.load %arg13[%c8_55, %c0_56] : memref<16x32xbf16, #tpu.memory_space<vmem>>, vector<8x8xbf16>
    tpu.vector_store %arg13[%c8_55, %c0_56], %127 {strides = array<i32>} : memref<16x32xbf16, #tpu.memory_space<vmem>>, vector<8x8xbf16>,
    %129 = vector.extract_strided_slice %110 {offsets = [0, 8], sizes = [8, 8], strides = [1, 1]} : vector<8x32xbf16> to vector<8x8xbf16>
    %130 = vector.extract_strided_slice %36 {offsets = [8, 16], sizes = [8, 16], strides = [1, 1]} : vector<32x32xbf16> to vector<8x16xbf16>
    %cst_57 = arith.constant dense<0.000000e+00> : vector<8x16xf32>
    %131 = tpu.matmul %129, %130, %cst_57 {dimension_numbers = #tpu.dot_dimension_numbers<[1], [0], [0], [1], [0, 0, 1, 1], [], []>} : vector<8x8xbf16>, vector<8x16xbf16>, vector<8x16xf32> -> vector<8x16xf32>
    %cst_58 = arith.constant dense<0xFF800000> : vector<8xf32>
    %132 = vector.multi_reduction <maximumf>, %131, %cst_58 [1] : vector<8x16xf32> to vector<8xf32>
    %133 = vector.shape_cast %132 : vector<8xf32> to vector<8x1xf32>
    %134 = vector.broadcast %133 : vector<8x1xf32> to vector<8x16xf32>
    %135 = arith.subf %131, %134 : vector<8x16xf32>
    %136 = math.exp %135 : vector<8x16xf32>
    %cst_59 = arith.constant dense<0.000000e+00> : vector<8xf32>
    %137 = vector.multi_reduction <add>, %136, %cst_59 [1] : vector<8x16xf32> to vector<8xf32>
    %138 = vector.shape_cast %137 : vector<8xf32> to vector<8x1xf32>
    %139 = tpu.reciprocal %138 {approx = true} : vector<8x1xf32> -> vector<8x1xf32>
    %140 = vector.broadcast %139 : vector<8x1xf32> to vector<8x16xf32>
    %141 = arith.mulf %136, %140 : vector<8x16xf32>
    %142 = vector.extract_strided_slice %34 {offsets = [16, 8], sizes = [16, 8], strides = [1, 1]} : vector<32x32xbf16> to vector<16x8xbf16>
    %143 = arith.truncf %141 : vector<8x16xf32> to vector<8x16xbf16>
    %cst_60 = arith.constant dense<0.000000e+00> : vector<8x8xf32>
    %144 = tpu.matmul %143, %142, %cst_60 {dimension_numbers = #tpu.dot_dimension_numbers<[1], [0], [0], [1], [0, 0, 1, 1], [], []>} : vector<8x16xbf16>, vector<16x8xbf16>, vector<8x8xf32> -> vector<8x8xf32>
    %145 = arith.truncf %144 : vector<8x8xf32> to vector<8x8xbf16>
    %c8_61 = arith.constant 8 : index
    %c8_62 = arith.constant 8 : index
    %146 = vector.load %arg13[%c8_61, %c8_62] : memref<16x32xbf16, #tpu.memory_space<vmem>>, vector<8x8xbf16>
    tpu.vector_store %arg13[%c8_61, %c8_62], %145 {strides = array<i32>} : memref<16x32xbf16, #tpu.memory_space<vmem>>, vector<8x8xbf16>,
    %147 = vector.extract_strided_slice %110 {offsets = [0, 16], sizes = [8, 8], strides = [1, 1]} : vector<8x32xbf16> to vector<8x8xbf16>
    %148 = vector.extract_strided_slice %36 {offsets = [16, 16], sizes = [8, 16], strides = [1, 1]} : vector<32x32xbf16> to vector<8x16xbf16>
    %cst_63 = arith.constant dense<0.000000e+00> : vector<8x16xf32>
    %149 = tpu.matmul %147, %148, %cst_63 {dimension_numbers = #tpu.dot_dimension_numbers<[1], [0], [0], [1], [0, 0, 1, 1], [], []>} : vector<8x8xbf16>, vector<8x16xbf16>, vector<8x16xf32> -> vector<8x16xf32>
    %cst_64 = arith.constant dense<0xFF800000> : vector<8xf32>
    %150 = vector.multi_reduction <maximumf>, %149, %cst_64 [1] : vector<8x16xf32> to vector<8xf32>
    %151 = vector.shape_cast %150 : vector<8xf32> to vector<8x1xf32>
    %152 = vector.broadcast %151 : vector<8x1xf32> to vector<8x16xf32>
    %153 = arith.subf %149, %152 : vector<8x16xf32>
    %154 = math.exp %153 : vector<8x16xf32>
    %cst_65 = arith.constant dense<0.000000e+00> : vector<8xf32>
    %155 = vector.multi_reduction <add>, %154, %cst_65 [1] : vector<8x16xf32> to vector<8xf32>
    %156 = vector.shape_cast %155 : vector<8xf32> to vector<8x1xf32>
    %157 = tpu.reciprocal %156 {approx = true} : vector<8x1xf32> -> vector<8x1xf32>
    %158 = vector.broadcast %157 : vector<8x1xf32> to vector<8x16xf32>
    %159 = arith.mulf %154, %158 : vector<8x16xf32>
    %160 = vector.extract_strided_slice %34 {offsets = [16, 16], sizes = [16, 8], strides = [1, 1]} : vector<32x32xbf16> to vector<16x8xbf16>
    %161 = arith.truncf %159 : vector<8x16xf32> to vector<8x16xbf16>
    %cst_66 = arith.constant dense<0.000000e+00> : vector<8x8xf32>
    %162 = tpu.matmul %161, %160, %cst_66 {dimension_numbers = #tpu.dot_dimension_numbers<[1], [0], [0], [1], [0, 0, 1, 1], [], []>} : vector<8x16xbf16>, vector<16x8xbf16>, vector<8x8xf32> -> vector<8x8xf32>
    %163 = arith.truncf %162 : vector<8x8xf32> to vector<8x8xbf16>
    %c8_67 = arith.constant 8 : index
    %c16_68 = arith.constant 16 : index
    %164 = vector.load %arg13[%c8_67, %c16_68] : memref<16x32xbf16, #tpu.memory_space<vmem>>, vector<8x8xbf16>
    tpu.vector_store %arg13[%c8_67, %c16_68], %163 {strides = array<i32>} : memref<16x32xbf16, #tpu.memory_space<vmem>>, vector<8x8xbf16>,
    %165 = vector.extract_strided_slice %110 {offsets = [0, 24], sizes = [8, 8], strides = [1, 1]} : vector<8x32xbf16> to vector<8x8xbf16>
    %166 = vector.extract_strided_slice %36 {offsets = [24, 16], sizes = [8, 16], strides = [1, 1]} : vector<32x32xbf16> to vector<8x16xbf16>
    %cst_69 = arith.constant dense<0.000000e+00> : vector<8x16xf32>
    %167 = tpu.matmul %165, %166, %cst_69 {dimension_numbers = #tpu.dot_dimension_numbers<[1], [0], [0], [1], [0, 0, 1, 1], [], []>} : vector<8x8xbf16>, vector<8x16xbf16>, vector<8x16xf32> -> vector<8x16xf32>
    %cst_70 = arith.constant dense<0xFF800000> : vector<8xf32>
    %168 = vector.multi_reduction <maximumf>, %167, %cst_70 [1] : vector<8x16xf32> to vector<8xf32>
    %169 = vector.shape_cast %168 : vector<8xf32> to vector<8x1xf32>
    %170 = vector.broadcast %169 : vector<8x1xf32> to vector<8x16xf32>
    %171 = arith.subf %167, %170 : vector<8x16xf32>
    %172 = math.exp %171 : vector<8x16xf32>
    %cst_71 = arith.constant dense<0.000000e+00> : vector<8xf32>
    %173 = vector.multi_reduction <add>, %172, %cst_71 [1] : vector<8x16xf32> to vector<8xf32>
    %174 = vector.shape_cast %173 : vector<8xf32> to vector<8x1xf32>
    %175 = tpu.reciprocal %174 {approx = true} : vector<8x1xf32> -> vector<8x1xf32>
    %176 = vector.broadcast %175 : vector<8x1xf32> to vector<8x16xf32>
    %177 = arith.mulf %172, %176 : vector<8x16xf32>
    %178 = vector.extract_strided_slice %34 {offsets = [16, 24], sizes = [16, 8], strides = [1, 1]} : vector<32x32xbf16> to vector<16x8xbf16>
    %179 = arith.truncf %177 : vector<8x16xf32> to vector<8x16xbf16>
    %cst_72 = arith.constant dense<0.000000e+00> : vector<8x8xf32>
    %180 = tpu.matmul %179, %178, %cst_72 {dimension_numbers = #tpu.dot_dimension_numbers<[1], [0], [0], [1], [0, 0, 1, 1], [], []>} : vector<8x16xbf16>, vector<16x8xbf16>, vector<8x8xf32> -> vector<8x8xf32>
    %181 = arith.truncf %180 : vector<8x8xf32> to vector<8x8xbf16>
    %c8_73 = arith.constant 8 : index
    %c24_74 = arith.constant 24 : index
    %182 = vector.load %arg13[%c8_73, %c24_74] : memref<16x32xbf16, #tpu.memory_space<vmem>>, vector<8x8xbf16>
    tpu.vector_store %arg13[%c8_73, %c24_74], %181 {strides = array<i32>} : memref<16x32xbf16, #tpu.memory_space<vmem>>, vector<8x8xbf16>,
    %c0_75 = arith.constant 0 : index
    %c0_76 = arith.constant 0 : index
    %183 = vector.load %arg13[%c0_75, %c0_76] : memref<16x32xbf16, #tpu.memory_space<vmem>>, vector<16x32xbf16>
    %c0_77 = arith.constant 0 : index
    %c0_78 = arith.constant 0 : index
    %184 = vector.load %arg10[%c0_77, %c0_78] : memref<32x32xbf16, #tpu.memory_space<vmem>>, vector<32x32xbf16>
    %cst_79 = arith.constant dense<0.000000e+00> : vector<16x32xf32>
    %185 = tpu.matmul %183, %184, %cst_79 {dimension_numbers = #tpu.dot_dimension_numbers<[1], [0], [0], [1], [0, 0, 1, 1], [], []>} : vector<16x32xbf16>, vector<32x32xbf16>, vector<16x32xf32> -> vector<16x32xf32>
    %c0_80 = arith.constant 0 : index
    %c0_81 = arith.constant 0 : index
    %186 = vector.load %arg11[%c0_80, %c0_81] : memref<1x32xf32, #tpu.memory_space<vmem>>, vector<1x32xf32>
    %187 = vector.broadcast %186 : vector<1x32xf32> to vector<16x32xf32>
    %188 = arith.addf %185, %187 : vector<16x32xf32>
    %189 = vector.extract_strided_slice %188 {offsets = [0, 0], sizes = [8, 32], strides = [1, 1]} : vector<16x32xf32> to vector<8x32xf32>
    %c0_82 = arith.constant 0 : index
    %c0_83 = arith.constant 0 : index
    %c0_84 = arith.constant 0 : index
    %190 = vector.load %arg12[%c0_82, %c0_83, %c0_84] : memref<8x2x32xf32, #tpu.memory_space<vmem>>, vector<8x1x32xf32>
    %191 = vector.shape_cast %190 : vector<8x1x32xf32> to vector<8x32xf32>
    %192 = vector.shape_cast %189 : vector<8x32xf32> to vector<8x1x32xf32>
    tpu.vector_store %arg12[%c0_82, %c0_83, %c0_84], %192 {strides = array<i32>} : memref<8x2x32xf32, #tpu.memory_space<vmem>>, vector<8x1x32xf32>,
    %193 = vector.extract_strided_slice %188 {offsets = [8, 0], sizes = [8, 32], strides = [1, 1]} : vector<16x32xf32> to vector<8x32xf32>
    %c0_85 = arith.constant 0 : index
    %c1_86 = arith.constant 1 : index
    %c0_87 = arith.constant 0 : index
    %194 = vector.load %arg12[%c0_85, %c1_86, %c0_87] : memref<8x2x32xf32, #tpu.memory_space<vmem>>, vector<8x1x32xf32>
    %195 = vector.shape_cast %194 : vector<8x1x32xf32> to vector<8x32xf32>
    %196 = vector.shape_cast %193 : vector<8x32xf32> to vector<8x1x32xf32>
    tpu.vector_store %arg12[%c0_85, %c1_86, %c0_87], %196 {strides = array<i32>} : memref<8x2x32xf32, #tpu.memory_space<vmem>>, vector<8x1x32xf32>,
    return
  }
  func.func @transform_0(%arg0: i32) -> (i32, i32, i32) {
    %c0_i32 = arith.constant 0 : i32
    %c0_i32_0 = arith.constant 0 : i32
    %c0_i32_1 = arith.constant 0 : i32
    return %c0_i32, %arg0, %c0_i32_0 : i32, i32, i32
  }
  func.func @transform_1(%arg0: i32) -> (i32, i32, i32) {
    %c0_i32 = arith.constant 0 : i32
    %c0_i32_0 = arith.constant 0 : i32
    %c0_i32_1 = arith.constant 0 : i32
    return %c0_i32, %arg0, %c0_i32_0 : i32, i32, i32
  }
  func.func @transform_2(%arg0: i32) -> (i32, i32, i32) {
    %c0_i32 = arith.constant 0 : i32
    %c0_i32_0 = arith.constant 0 : i32
    %c0_i32_1 = arith.constant 0 : i32
    return %c0_i32, %arg0, %c0_i32_0 : i32, i32, i32
  }
  func.func @transform_3(%arg0: i32) -> (i32, i32) {
    %c0_i32 = arith.constant 0 : i32
    %c0_i32_0 = arith.constant 0 : i32
    %c0_i32_1 = arith.constant 0 : i32
    return %c0_i32, %c0_i32_0 : i32, i32
  }
  func.func @transform_4(%arg0: i32) -> (i32, i32) {
    %c0_i32 = arith.constant 0 : i32
    %c0_i32_0 = arith.constant 0 : i32
    %c0_i32_1 = arith.constant 0 : i32
    return %c0_i32, %c0_i32_0 : i32, i32
  }
  func.func @transform_5(%arg0: i32) -> (i32, i32) {
    %c0_i32 = arith.constant 0 : i32
    %c0_i32_0 = arith.constant 0 : i32
    %c0_i32_1 = arith.constant 0 : i32
    return %c0_i32, %c0_i32_0 : i32, i32
  }
  func.func @transform_6(%arg0: i32) -> (i32, i32) {
    %c0_i32 = arith.constant 0 : i32
    %c0_i32_0 = arith.constant 0 : i32
    %c0_i32_1 = arith.constant 0 : i32
    return %c0_i32, %c0_i32_0 : i32, i32
  }
  func.func @transform_7(%arg0: i32) -> (i32, i32) {
    %c0_i32 = arith.constant 0 : i32
    %c0_i32_0 = arith.constant 0 : i32
    %c0_i32_1 = arith.constant 0 : i32
    return %c0_i32, %c0_i32_0 : i32, i32
  }
  func.func @transform_8(%arg0: i32) -> (i32, i32) {
    %c0_i32 = arith.constant 0 : i32
    %c0_i32_0 = arith.constant 0 : i32
    %c0_i32_1 = arith.constant 0 : i32
    return %c0_i32, %c0_i32_0 : i32, i32
  }
  func.func @transform_9(%arg0: i32) -> (i32, i32) {
    %c0_i32 = arith.constant 0 : i32
    %c0_i32_0 = arith.constant 0 : i32
    %c0_i32_1 = arith.constant 0 : i32
    return %c0_i32, %c0_i32_0 : i32, i32
  }
  func.func @transform_10(%arg0: i32) -> (i32, i32) {
    %c0_i32 = arith.constant 0 : i32
    %c0_i32_0 = arith.constant 0 : i32
    %c0_i32_1 = arith.constant 0 : i32
    return %c0_i32, %c0_i32_0 : i32, i32
  }
  func.func @transform_11(%arg0: i32) -> (i32, i32, i32) {
    %c0_i32 = arith.constant 0 : i32
    %c0_i32_0 = arith.constant 0 : i32
    %c0_i32_1 = arith.constant 0 : i32
    return %c0_i32, %arg0, %c0_i32_0 : i32, i32, i32
  }
}

</mosaic_0001>

<llo_original>
// kernel: tpu_custom_call.1
$region0: #{tpu_custom_call.1}
  #allocation0 [shape = 'u32[]', space=smem, size = 0x4, offset = 0x4, fixed_abs, tag = 'smem constant byte address 0x4 - core index']
  #allocation1 [shape = 'u32[144,128]{1,0:T(1,128)}', space=vmem, size = 0x12000, scoped, tag = 'internal scratch']
  #allocation2 [shape = 'bf16[16,32]{1,0:T(16,128)(2,1)}', space=vmem, size = 0x1000, scoped, tag = 'scratch operand']
  %s0 = inlined_call_operand.hbm [shape: f32[8,2,32], index: 0, kind: input, shape index: {}]
  %s1 = inlined_call_operand.hbm [shape: f32[16,2,32], index: 1, kind: input, shape index: {}]
  %s2 = inlined_call_operand.hbm [shape: f32[16,2,32], index: 2, kind: input, shape index: {}]
  %s3 = inlined_call_operand.hbm [shape: bf16[32,32], index: 3, kind: input, shape index: {}]
  %s4 = inlined_call_operand.hbm [shape: bf16[32,32], index: 4, kind: input, shape index: {}]
  %s5 = inlined_call_operand.vmem [shape: bf16[32,32], index: 5, kind: input, shape index: {}]
  %s6 = inlined_call_operand.vmem [shape: f32[1,32], index: 6, kind: input, shape index: {}]
  %s7 = inlined_call_operand.vmem [shape: f32[1,32], index: 7, kind: input, shape index: {}]
  %s8 = inlined_call_operand.hbm [shape: f32[1,32], index: 8, kind: input, shape index: {}]
  %s9 = inlined_call_operand.vmem [shape: bf16[32,32], index: 9, kind: input, shape index: {}]
  %s10 = inlined_call_operand.vmem [shape: f32[1,32], index: 10, kind: input, shape index: {}]
  %s11 = inlined_call_operand.hbm [shape: f32[8,2,32], index: 11, kind: output, shape index: {}]
  %s12 = sld [smem:[#allocation0]]
  $region78: #{tpu_custom_call.1} parent=0
    _
  %s14 = ssub.s32 1, %s12
  %s15 = scalar_select 0, %s14, %s12
  $region1: #{tpu_custom_call.1} parent=0
    #allocation3 [shape = 'u8[8192]{0}', space=vmem, size = 0x2000, scoped, tag = 'input window, operand 0, single buffered']
    #allocation4 [shape = 's32[1]{0}', space=sflag, size = 0x4, scoped, tag = 'scoped memory for tpu_custom_call.1']
    #allocation5 [shape = 's32[1]{0}', space=sflag, size = 0x4, scoped, tag = 'scoped memory for tpu_custom_call.1']
    #allocation6 [shape = 'u8[16384]{0}', space=vmem, size = 0x4000, scoped, tag = 'input window, operand 1, single buffered']
    #allocation7 [shape = 's32[1]{0}', space=sflag, size = 0x4, scoped, tag = 'scoped memory for tpu_custom_call.1']
    #allocation8 [shape = 'u8[16384]{0}', space=vmem, size = 0x4000, scoped, tag = 'input window, operand 2, single buffered']
    #allocation9 [shape = 'u8[8192]{0}', space=vmem, size = 0x2000, scoped, tag = 'input window, operand 3, single buffered']
    #allocation10 [shape = 's32[1]{0}', space=sflag, size = 0x4, scoped, tag = 'scoped memory for tpu_custom_call.1']
    #allocation11 [shape = 'u8[8192]{0}', space=vmem, size = 0x2000, scoped, tag = 'input window, operand 4, single buffered']
    #allocation12 [shape = 'u8[512]{0}', space=vmem, size = 0x400, scoped, tag = 'input window, operand 8, single buffered']
    #allocation13 [shape = 's32[1]{0}', space=sflag, size = 0x4, scoped, tag = 'scoped memory for tpu_custom_call.1']
    #allocation14 [shape = 'u8[8192]{0}', space=vmem, size = 0x2000, scoped, tag = 'output window, operand 0, single buffered']
    %16 = vsyncpa [#allocation4], 0
    %17 = vsyncpa [#allocation7], 0
    %18 = vsyncpa [#allocation10], 0
    %19 = vsyncpa [#allocation13], 0
    %20 = vsyncpa [#allocation5], 0
    // Predicated region
    $region2: #{tpu_custom_call.1} parent=1 // pred_check
      _
    $region3: #{tpu_custom_call.1} parent=1 // pred_check_branch
      %22 = sbr.rel (0) target = $region5
    $region4: #{tpu_custom_call.1} parent=1 // pred_region
      %s24 = ssub.s32 256, 256
      %25 = vsyncadd [#allocation4], %s24
      %s26 = sshll.u32 [#allocation3], 4
      %s27 = int_to_ptr.vmem [resolvable:$true] %s26
      %32 = dma.hbm_to_vmem [thread:$0]  %s0, 256, %s27, [#allocation4], 32, 32, 2
    $region5: #{tpu_custom_call.1} parent=1 // pred_fallthru
      _
    // Predicated region
    $region6: #{tpu_custom_call.1} parent=1 // pred_check
      _
    $region7: #{tpu_custom_call.1} parent=1 // pred_check_branch
      %34 = sbr.rel (0) target = $region9
    $region8: #{tpu_custom_call.1} parent=1 // pred_region
      %s36 = ssub.s32 512, 512
      %37 = vsyncadd [#allocation7], %s36
      %s38 = sshll.u32 [#allocation6], 4
      %s39 = int_to_ptr.vmem [resolvable:$true] %s38
      %44 = dma.hbm_to_vmem [thread:$0]  %s1, 512, %s39, [#allocation7], 32, 32, 2
    $region9: #{tpu_custom_call.1} parent=1 // pred_fallthru
      _
    // Predicated region
    $region10: #{tpu_custom_call.1} parent=1 // pred_check
      _
    $region11: #{tpu_custom_call.1} parent=1 // pred_check_branch
      %46 = sbr.rel (0) target = $region13
    $region12: #{tpu_custom_call.1} parent=1 // pred_region
      %s48 = ssub.s32 512, 512
      %49 = vsyncadd [#allocation7], %s48
      %s50 = sshll.u32 [#allocation8], 4
      %s51 = int_to_ptr.vmem [resolvable:$true] %s50
      %56 = dma.hbm_to_vmem [thread:$0]  %s2, 512, %s51, [#allocation7], 32, 32, 2
    $region13: #{tpu_custom_call.1} parent=1 // pred_fallthru
      _
    // Predicated region
    $region14: #{tpu_custom_call.1} parent=1 // pred_check
      _
    $region15: #{tpu_custom_call.1} parent=1 // pred_check_branch
      %58 = sbr.rel (0) target = $region17
    $region16: #{tpu_custom_call.1} parent=1 // pred_region
      %s60 = ssub.s32 256, 256
      %61 = vsyncadd [#allocation10], %s60
      %s62 = sshll.u32 [#allocation9], 4
      %s63 = int_to_ptr.vmem [resolvable:$true] %s62
      %68 = dma.hbm_to_vmem [thread:$0]  %s3, 256, %s63, [#allocation10], 64, 64, 4
    $region17: #{tpu_custom_call.1} parent=1 // pred_fallthru
      _
    // Predicated region
    $region18: #{tpu_custom_call.1} parent=1 // pred_check
      _
    $region19: #{tpu_custom_call.1} parent=1 // pred_check_branch
      %70 = sbr.rel (0) target = $region21
    $region20: #{tpu_custom_call.1} parent=1 // pred_region
      %s72 = ssub.s32 256, 256
      %73 = vsyncadd [#allocation10], %s72
      %s74 = sshll.u32 [#allocation11], 4
      %s75 = int_to_ptr.vmem [resolvable:$true] %s74
      %80 = dma.hbm_to_vmem [thread:$0]  %s4, 256, %s75, [#allocation10], 64, 64, 4
    $region21: #{tpu_custom_call.1} parent=1 // pred_fallthru
      _
    // Predicated region
    $region22: #{tpu_custom_call.1} parent=1 // pred_check
      _
    $region23: #{tpu_custom_call.1} parent=1 // pred_check_branch
      %82 = sbr.rel (0) target = $region25
    $region24: #{tpu_custom_call.1} parent=1 // pred_region
      _
    $region25: #{tpu_custom_call.1} parent=1 // pred_fallthru
      _
    // Predicated region
    $region26: #{tpu_custom_call.1} parent=1 // pred_check
      _
    $region27: #{tpu_custom_call.1} parent=1 // pred_check_branch
      %84 = sbr.rel (0) target = $region29
    $region28: #{tpu_custom_call.1} parent=1 // pred_region
      _
    $region29: #{tpu_custom_call.1} parent=1 // pred_fallthru
      _
    // Predicated region
    $region30: #{tpu_custom_call.1} parent=1 // pred_check
      _
    $region31: #{tpu_custom_call.1} parent=1 // pred_check_branch
      %86 = sbr.rel (0) target = $region33
    $region32: #{tpu_custom_call.1} parent=1 // pred_region
      _
    $region33: #{tpu_custom_call.1} parent=1 // pred_fallthru
      _
    // Predicated region
    $region34: #{tpu_custom_call.1} parent=1 // pred_check
      _
    $region35: #{tpu_custom_call.1} parent=1 // pred_check_branch
      %88 = sbr.rel (0) target = $region37
    $region36: #{tpu_custom_call.1} parent=1 // pred_region
      %s90 = ssub.s32 16, 16
      %91 = vsyncadd [#allocation13], %s90
      %s93 = sshll.u32 [#allocation12], 4
      %s94 = int_to_ptr.vmem [resolvable:$true] %s93
      %96 = dma.hbm_to_vmem [thread:$0]  %s8, 16, %s94, [#allocation13]
    $region37: #{tpu_custom_call.1} parent=1 // pred_fallthru
      _
    // Predicated region
    $region38: #{tpu_custom_call.1} parent=1 // pred_check
      _
    $region39: #{tpu_custom_call.1} parent=1 // pred_check_branch
      %98 = sbr.rel (0) target = $region41
    $region40: #{tpu_custom_call.1} parent=1 // pred_region
      _
    $region41: #{tpu_custom_call.1} parent=1 // pred_fallthru
      _
    // Predicated region
    $region42: #{tpu_custom_call.1} parent=1 // pred_check
      _
    $region43: #{tpu_custom_call.1} parent=1 // pred_check_branch
      %100 = sbr.rel (0) target = $region45
    $region44: #{tpu_custom_call.1} parent=1 // pred_region
      _
    $region45: #{tpu_custom_call.1} parent=1 // pred_fallthru
      _
    // Predicated region
    $region46: #{tpu_custom_call.1} parent=1 // pred_check
      _
    $region47: #{tpu_custom_call.1} parent=1 // pred_check_branch
      %102 = sbr.rel (0) target = $region49
    $region48: #{tpu_custom_call.1} parent=1 // pred_region
      %103 = dma.done [#allocation4], 256
    $region49: #{tpu_custom_call.1} parent=1 // pred_fallthru
      _
    // Predicated region
    $region50: #{tpu_custom_call.1} parent=1 // pred_check
      _
    $region51: #{tpu_custom_call.1} parent=1 // pred_check_branch
      %105 = sbr.rel (0) target = $region53
    $region52: #{tpu_custom_call.1} parent=1 // pred_region
      %106 = dma.done [#allocation7], 512
    $region53: #{tpu_custom_call.1} parent=1 // pred_fallthru
      _
    // Predicated region
    $region54: #{tpu_custom_call.1} parent=1 // pred_check
      _
    $region55: #{tpu_custom_call.1} parent=1 // pred_check_branch
      %108 = sbr.rel (0) target = $region57
    $region56: #{tpu_custom_call.1} parent=1 // pred_region
      %109 = dma.done [#allocation7], 512
    $region57: #{tpu_custom_call.1} parent=1 // pred_fallthru
      _
    // Predicated region
    $region58: #{tpu_custom_call.1} parent=1 // pred_check
      _
    $region59: #{tpu_custom_call.1} parent=1 // pred_check_branch
      %111 = sbr.rel (0) target = $region61
    $region60: #{tpu_custom_call.1} parent=1 // pred_region
      %112 = dma.done [#allocation10], 256
    $region61: #{tpu_custom_call.1} parent=1 // pred_fallthru
      _
    // Predicated region
    $region62: #{tpu_custom_call.1} parent=1 // pred_check
      _
    $region63: #{tpu_custom_call.1} parent=1 // pred_check_branch
      %114 = sbr.rel (0) target = $region65
    $region64: #{tpu_custom_call.1} parent=1 // pred_region
      %115 = dma.done [#allocation10], 256
    $region65: #{tpu_custom_call.1} parent=1 // pred_fallthru
      _
    // Predicated region
    $region66: #{tpu_custom_call.1} parent=1 // pred_check
      _
    $region67: #{tpu_custom_call.1} parent=1 // pred_check_branch
      %117 = sbr.rel (0) target = $region69
    $region68: #{tpu_custom_call.1} parent=1 // pred_region
      %118 = dma.done [#allocation13], 16
    $region69: #{tpu_custom_call.1} parent=1 // pred_fallthru
      _
    %v120 = vld [vmem:[#allocation3] sm:$0x1]
    %v121 = vld [vmem:[#allocation3 + $0x2] sm:$0x1]
    %v122 = vld [vmem:[#allocation3 + $0x4] sm:$0x1]
    %v123 = vld [vmem:[#allocation3 + $0x6] sm:$0x1]
    %v124 = vld [vmem:[#allocation3 + $0x8] sm:$0x1]
    %v125 = vld [vmem:[#allocation3 + $0xa] sm:$0x1]
    %v126 = vld [vmem:[#allocation3 + $0xc] sm:$0x1]
    %v127 = vld [vmem:[#allocation3 + $0xe] sm:$0x1]
    %v128 = vld [vmem:[#allocation3 + $0x1] sm:$0x1]
    %v129 = vld [vmem:[#allocation3 + $0x3] sm:$0x1]
    %v130 = vld [vmem:[#allocation3 + $0x5] sm:$0x1]
    %v131 = vld [vmem:[#allocation3 + $0x7] sm:$0x1]
    %v132 = vld [vmem:[#allocation3 + $0x9] sm:$0x1]
    %v133 = vld [vmem:[#allocation3 + $0xb] sm:$0x1]
    %v134 = vld [vmem:[#allocation3 + $0xd] sm:$0x1]
    %v135 = vld [vmem:[#allocation3 + $0xf] sm:$0x1]
    %v144 = vrot.slane %v121, 7
    %vm145 = vcmask 1041409
    %v146 = vsel %vm145, %v144, %v120
    %v147 = vrot.slane %v122, 6
    %vm148 = vcmask 1042434
    %v149 = vsel %vm148, %v147, %v146
    %v150 = vrot.slane %v123, 5
    %vm151 = vcmask 1043459
    %v152 = vsel %vm151, %v150, %v149
    %v153 = vrot.slane %v124, 4
    %vm154 = vcmask 1044484
    %v155 = vsel %vm154, %v153, %v152
    %v156 = vrot.slane %v125, 3
    %vm157 = vcmask 1045509
    %v158 = vsel %vm157, %v156, %v155
    %v159 = vrot.slane %v126, 2
    %vm160 = vcmask 1046534
    %v161 = vsel %vm160, %v159, %v158
    %v162 = vrot.slane %v127, 1
    %vm163 = vcmask 1047559
    %v164 = vsel %vm163, %v162, %v161
    %v174 = vrot.slane %v129, 7
    %v175 = vsel %vm145, %v174, %v128
    %v176 = vrot.slane %v130, 6
    %v177 = vsel %vm148, %v176, %v175
    %v178 = vrot.slane %v131, 5
    %v179 = vsel %vm151, %v178, %v177
    %v180 = vrot.slane %v132, 4
    %v181 = vsel %vm154, %v180, %v179
    %v182 = vrot.slane %v133, 3
    %v183 = vsel %vm157, %v182, %v181
    %v184 = vrot.slane %v134, 2
    %v185 = vsel %vm160, %v184, %v183
    %v186 = vrot.slane %v135, 1
    %v187 = vsel %vm163, %v186, %v185
    %v189 = vpack.c.bf16 %v187, %v164
    %v190 = vld [vmem:[#allocation6] sm:$0x1]
    %v191 = vld [vmem:[#allocation6 + $0x2] sm:$0x1]
    %v192 = vld [vmem:[#allocation6 + $0x4] sm:$0x1]
    %v193 = vld [vmem:[#allocation6 + $0x6] sm:$0x1]
    %v194 = vld [vmem:[#allocation6 + $0x8] sm:$0x1]
    %v195 = vld [vmem:[#allocation6 + $0xa] sm:$0x1]
    %v196 = vld [vmem:[#allocation6 + $0xc] sm:$0x1]
    %v197 = vld [vmem:[#allocation6 + $0xe] sm:$0x1]
    %v198 = vld [vmem:[#allocation6 + $0x10] sm:$0x1]
    %v199 = vld [vmem:[#allocation6 + $0x12] sm:$0x1]
    %v200 = vld [vmem:[#allocation6 + $0x14] sm:$0x1]
    %v201 = vld [vmem:[#allocation6 + $0x16] sm:$0x1]
    %v202 = vld [vmem:[#allocation6 + $0x18] sm:$0x1]
    %v203 = vld [vmem:[#allocation6 + $0x1a] sm:$0x1]
    %v204 = vld [vmem:[#allocation6 + $0x1c] sm:$0x1]
    %v205 = vld [vmem:[#allocation6 + $0x1e] sm:$0x1]
    %v206 = vld [vmem:[#allocation6 + $0x1] sm:$0x1]
    %v207 = vld [vmem:[#allocation6 + $0x3] sm:$0x1]
    %v208 = vld [vmem:[#allocation6 + $0x5] sm:$0x1]
    %v209 = vld [vmem:[#allocation6 + $0x7] sm:$0x1]
    %v210 = vld [vmem:[#allocation6 + $0x9] sm:$0x1]
    %v211 = vld [vmem:[#allocation6 + $0xb] sm:$0x1]
    %v212 = vld [vmem:[#allocation6 + $0xd] sm:$0x1]
    %v213 = vld [vmem:[#allocation6 + $0xf] sm:$0x1]
    %v214 = vld [vmem:[#allocation6 + $0x11] sm:$0x1]
    %v215 = vld [vmem:[#allocation6 + $0x13] sm:$0x1]
    %v216 = vld [vmem:[#allocation6 + $0x15] sm:$0x1]
    %v217 = vld [vmem:[#allocation6 + $0x17] sm:$0x1]
    %v218 = vld [vmem:[#allocation6 + $0x19] sm:$0x1]
    %v219 = vld [vmem:[#allocation6 + $0x1b] sm:$0x1]
    %v220 = vld [vmem:[#allocation6 + $0x1d] sm:$0x1]
    %v221 = vld [vmem:[#allocation6 + $0x1f] sm:$0x1]
    %v238 = vrot.slane %v191, 7
    %v239 = vsel %vm145, %v238, %v190
    %v240 = vrot.slane %v192, 6
    %v241 = vsel %vm148, %v240, %v239
    %v242 = vrot.slane %v193, 5
    %v243 = vsel %vm151, %v242, %v241
    %v244 = vrot.slane %v194, 4
    %v245 = vsel %vm154, %v244, %v243
    %v246 = vrot.slane %v195, 3
    %v247 = vsel %vm157, %v246, %v245
    %v248 = vrot.slane %v196, 2
    %v249 = vsel %vm160, %v248, %v247
    %v250 = vrot.slane %v197, 1
    %v251 = vsel %vm163, %v250, %v249
    %v252 = vrot.slane %v199, 7
    %v253 = vsel %vm145, %v252, %v198
    %v254 = vrot.slane %v200, 6
    %v255 = vsel %vm148, %v254, %v253
    %v256 = vrot.slane %v201, 5
    %v257 = vsel %vm151, %v256, %v255
    %v258 = vrot.slane %v202, 4
    %v259 = vsel %vm154, %v258, %v257
    %v260 = vrot.slane %v203, 3
    %v261 = vsel %vm157, %v260, %v259
    %v262 = vrot.slane %v204, 2
    %v263 = vsel %vm160, %v262, %v261
    %v264 = vrot.slane %v205, 1
    %v265 = vsel %vm163, %v264, %v263
    %v284 = vrot.slane %v207, 7
    %v285 = vsel %vm145, %v284, %v206
    %v286 = vrot.slane %v208, 6
    %v287 = vsel %vm148, %v286, %v285
    %v288 = vrot.slane %v209, 5
    %v289 = vsel %vm151, %v288, %v287
    %v290 = vrot.slane %v210, 4
    %v291 = vsel %vm154, %v290, %v289
    %v292 = vrot.slane %v211, 3
    %v293 = vsel %vm157, %v292, %v291
    %v294 = vrot.slane %v212, 2
    %v295 = vsel %vm160, %v294, %v293
    %v296 = vrot.slane %v213, 1
    %v297 = vsel %vm163, %v296, %v295
    %v298 = vrot.slane %v215, 7
    %v299 = vsel %vm145, %v298, %v214
    %v300 = vrot.slane %v216, 6
    %v301 = vsel %vm148, %v300, %v299
    %v302 = vrot.slane %v217, 5
    %v303 = vsel %vm151, %v302, %v301
    %v304 = vrot.slane %v218, 4
    %v305 = vsel %vm154, %v304, %v303
    %v306 = vrot.slane %v219, 3
    %v307 = vsel %vm157, %v306, %v305
    %v308 = vrot.slane %v220, 2
    %v309 = vsel %vm160, %v308, %v307
    %v310 = vrot.slane %v221, 1
    %v311 = vsel %vm163, %v310, %v309
    %v314 = vpack.c.bf16 %v265, %v251
    %v315 = vpack.c.bf16 %v311, %v297
    %v316 = vld [vmem:[#allocation8] sm:$0x1]
    %v317 = vld [vmem:[#allocation8 + $0x2] sm:$0x1]
    %v318 = vld [vmem:[#allocation8 + $0x4] sm:$0x1]
    %v319 = vld [vmem:[#allocation8 + $0x6] sm:$0x1]
    %v320 = vld [vmem:[#allocation8 + $0x8] sm:$0x1]
    %v321 = vld [vmem:[#allocation8 + $0xa] sm:$0x1]
    %v322 = vld [vmem:[#allocation8 + $0xc] sm:$0x1]
    %v323 = vld [vmem:[#allocation8 + $0xe] sm:$0x1]
    %v324 = vld [vmem:[#allocation8 + $0x10] sm:$0x1]
    %v325 = vld [vmem:[#allocation8 + $0x12] sm:$0x1]
    %v326 = vld [vmem:[#allocation8 + $0x14] sm:$0x1]
    %v327 = vld [vmem:[#allocation8 + $0x16] sm:$0x1]
    %v328 = vld [vmem:[#allocation8 + $0x18] sm:$0x1]
    %v329 = vld [vmem:[#allocation8 + $0x1a] sm:$0x1]
    %v330 = vld [vmem:[#allocation8 + $0x1c] sm:$0x1]
    %v331 = vld [vmem:[#allocation8 + $0x1e] sm:$0x1]
    %v332 = vld [vmem:[#allocation8 + $0x1] sm:$0x1]
    %v333 = vld [vmem:[#allocation8 + $0x3] sm:$0x1]
    %v334 = vld [vmem:[#allocation8 + $0x5] sm:$0x1]
    %v335 = vld [vmem:[#allocation8 + $0x7] sm:$0x1]
    %v336 = vld [vmem:[#allocation8 + $0x9] sm:$0x1]
    %v337 = vld [vmem:[#allocation8 + $0xb] sm:$0x1]
    %v338 = vld [vmem:[#allocation8 + $0xd] sm:$0x1]
    %v339 = vld [vmem:[#allocation8 + $0xf] sm:$0x1]
    %v340 = vld [vmem:[#allocation8 + $0x11] sm:$0x1]
    %v341 = vld [vmem:[#allocation8 + $0x13] sm:$0x1]
    %v342 = vld [vmem:[#allocation8 + $0x15] sm:$0x1]
    %v343 = vld [vmem:[#allocation8 + $0x17] sm:$0x1]
    %v344 = vld [vmem:[#allocation8 + $0x19] sm:$0x1]
    %v345 = vld [vmem:[#allocation8 + $0x1b] sm:$0x1]
    %v346 = vld [vmem:[#allocation8 + $0x1d] sm:$0x1]
    %v347 = vld [vmem:[#allocation8 + $0x1f] sm:$0x1]
    %v364 = vrot.slane %v317, 7
    %v365 = vsel %vm145, %v364, %v316
    %v366 = vrot.slane %v318, 6
    %v367 = vsel %vm148, %v366, %v365
    %v368 = vrot.slane %v319, 5
    %v369 = vsel %vm151, %v368, %v367
    %v370 = vrot.slane %v320, 4
    %v371 = vsel %vm154, %v370, %v369
    %v372 = vrot.slane %v321, 3
    %v373 = vsel %vm157, %v372, %v371
    %v374 = vrot.slane %v322, 2
    %v375 = vsel %vm160, %v374, %v373
    %v376 = vrot.slane %v323, 1
    %v377 = vsel %vm163, %v376, %v375
    %v378 = vrot.slane %v325, 7
    %v379 = vsel %vm145, %v378, %v324
    %v380 = vrot.slane %v326, 6
    %v381 = vsel %vm148, %v380, %v379
    %v382 = vrot.slane %v327, 5
    %v383 = vsel %vm151, %v382, %v381
    %v384 = vrot.slane %v328, 4
    %v385 = vsel %vm154, %v384, %v383
    %v386 = vrot.slane %v329, 3
    %v387 = vsel %vm157, %v386, %v385
    %v388 = vrot.slane %v330, 2
    %v389 = vsel %vm160, %v388, %v387
    %v390 = vrot.slane %v331, 1
    %v391 = vsel %vm163, %v390, %v389
    %v410 = vrot.slane %v333, 7
    %v411 = vsel %vm145, %v410, %v332
    %v412 = vrot.slane %v334, 6
    %v413 = vsel %vm148, %v412, %v411
    %v414 = vrot.slane %v335, 5
    %v415 = vsel %vm151, %v414, %v413
    %v416 = vrot.slane %v336, 4
    %v417 = vsel %vm154, %v416, %v415
    %v418 = vrot.slane %v337, 3
    %v419 = vsel %vm157, %v418, %v417
    %v420 = vrot.slane %v338, 2
    %v421 = vsel %vm160, %v420, %v419
    %v422 = vrot.slane %v339, 1
    %v423 = vsel %vm163, %v422, %v421
    %v424 = vrot.slane %v341, 7
    %v425 = vsel %vm145, %v424, %v340
    %v426 = vrot.slane %v342, 6
    %v427 = vsel %vm148, %v426, %v425
    %v428 = vrot.slane %v343, 5
    %v429 = vsel %vm151, %v428, %v427
    %v430 = vrot.slane %v344, 4
    %v431 = vsel %vm154, %v430, %v429
    %v432 = vrot.slane %v345, 3
    %v433 = vsel %vm157, %v432, %v431
    %v434 = vrot.slane %v346, 2
    %v435 = vsel %vm160, %v434, %v433
    %v436 = vrot.slane %v347, 1
    %v437 = vsel %vm163, %v436, %v435
    %v440 = vpack.c.bf16 %v391, %v377
    %v441 = vpack.c.bf16 %v437, %v423
    %v442 = vld [vmem:[#allocation9] sm:$0xf]
    %v443 = vld [vmem:[#allocation9 + $0x4] sm:$0xf]
    %v444 = vld [vmem:[#allocation9 + $0x8] sm:$0xf]
    %v445 = vld [vmem:[#allocation9 + $0xc] sm:$0xf]
    %v446 = vld [vmem:[%s6] sm:$0x1]
    %v448 = vlaneseq
    %v449 = vshrl.u32 %v448, 7
    %v450 = vsub.s32 0, %v449
    %v451 = vrot.slane %v446, %v450
    %v457 = vunpack.c.l.b16 %v442
    %v458 = vunpack.c.l.b16 %v443
    %v459 = vunpack.c.l.b16 %v444
    %v460 = vunpack.c.l.b16 %v445
    %v461 = vpack.c.b16 %v458, %v457
    %v462 = vpack.c.b16 %v460, %v459
    %vm465 = vcmask 261120
    %v467 = vsel %vm465, %v189, 0
    %469 = vmatprep.subr.bf16.mxu0 0
    %470 = vmatpush1.bf16.msra.mxu0 %v461
    %471 = vmatprep.subr.bf16.mxu0 0
    %472 = vmatpush1.bf16.msra.mxu0 %v462
    %473 = vmatprep.subr.bf16.mxu0 0
    %474 = vmatpush1.bf16.msra.mxu0 0
    %475 = vmatprep.subr.bf16.mxu0 0
    %476 = vmatpush1.bf16.msra.mxu0 0
    %477 = vmatprep.subr.bf16.mxu0 0
    %478 = vmatpush1.bf16.msra.mxu0 0
    %479 = vmatprep.subr.bf16.mxu0 0
    %480 = vmatpush1.bf16.msra.mxu0 0
    %481 = vmatprep.subr.bf16.mxu0 0
    %482 = vmatpush1.bf16.msra.mxu0 0
    %483 = vmatprep.subr.bf16.mxu0 0
    %484 = vmatpush1.bf16.msra.mxu0 0
    %485 = vmatprep.subr.bf16.mxu0 0
    %486 = vmatpush1.bf16.msra.mxu0 0
    %487 = vmatprep.subr.bf16.mxu0 0
    %488 = vmatpush1.bf16.msra.mxu0 0
    %489 = vmatprep.subr.bf16.mxu0 0
    %490 = vmatpush1.bf16.msra.mxu0 0
    %491 = vmatprep.subr.bf16.mxu0 0
    %492 = vmatpush1.bf16.msra.mxu0 0
    %493 = vmatprep.subr.bf16.mxu0 0
    %494 = vmatpush1.bf16.msra.mxu0 0
    %495 = vmatprep.subr.bf16.mxu0 0
    %496 = vmatpush1.bf16.msra.mxu0 0
    %497 = vmatprep.subr.bf16.mxu0 0
    %498 = vmatpush1.bf16.msra.mxu0 0
    %499 = vmatprep.subr.bf16.mxu0 0
    %500 = vmatpush1.bf16.msra.mxu0 0
    %501 = vmatprep.mubr.bf16.mxu0 0
    %502 = vmatmul.mubr.bf16.gmra.mrb[0].mxu0 %v467
    %v503 = vpop.f32.mrb[0].mxu0
    %v504 = vadd.f32 %v451, %v503
    %v505 = vpop.f32.mrb[0].mxu0
    %v506 = vpop.f32.mrb[0].mxu0
    %v507 = vadd.f32 %v451, %v506
    %v508 = vpop.f32.mrb[0].mxu0
    %509 = vdwg.mxu0
    %v510 = vpack.c.bf16 %v507, %v504
    %v511 = vld [vmem:[#allocation11] sm:$0xf]
    %v512 = vld [vmem:[#allocation11 + $0x4] sm:$0xf]
    %v513 = vld [vmem:[#allocation11 + $0x8] sm:$0xf]
    %v514 = vld [vmem:[#allocation11 + $0xc] sm:$0xf]
    %v515 = vld [vmem:[%s7] sm:$0x1]
    %v517 = vlaneseq
    %v518 = vshrl.u32 %v517, 7
    %v519 = vsub.s32 0, %v518
    %v520 = vrot.slane %v515, %v519
    %v526 = vunpack.c.l.b16 %v511
    %v527 = vunpack.c.l.b16 %v512
    %v528 = vunpack.c.l.b16 %v513
    %v529 = vunpack.c.l.b16 %v514
    %v530 = vpack.c.b16 %v527, %v526
    %v531 = vpack.c.b16 %v529, %v528
    %v535 = vsel %vm465, %v314, 0
    %v538 = vsel %vm465, %v315, 0
    %540 = vmatprep.subr.bf16.mxu0 0
    %541 = vmatpush1.bf16.msra.mxu0 %v530
    %542 = vmatprep.subr.bf16.mxu0 0
    %543 = vmatpush1.bf16.msra.mxu0 %v531
    %544 = vmatprep.subr.bf16.mxu0 0
    %545 = vmatpush1.bf16.msra.mxu0 0
    %546 = vmatprep.subr.bf16.mxu0 0
    %547 = vmatpush1.bf16.msra.mxu0 0
    %548 = vmatprep.subr.bf16.mxu0 0
    %549 = vmatpush1.bf16.msra.mxu0 0
    %550 = vmatprep.subr.bf16.mxu0 0
    %551 = vmatpush1.bf16.msra.mxu0 0
    %552 = vmatprep.subr.bf16.mxu0 0
    %553 = vmatpush1.bf16.msra.mxu0 0
    %554 = vmatprep.subr.bf16.mxu0 0
    %555 = vmatpush1.bf16.msra.mxu0 0
    %556 = vmatprep.subr.bf16.mxu0 0
    %557 = vmatpush1.bf16.msra.mxu0 0
    %558 = vmatprep.subr.bf16.mxu0 0
    %559 = vmatpush1.bf16.msra.mxu0 0
    %560 = vmatprep.subr.bf16.mxu0 0
    %561 = vmatpush1.bf16.msra.mxu0 0
    %562 = vmatprep.subr.bf16.mxu0 0
    %563 = vmatpush1.bf16.msra.mxu0 0
    %564 = vmatprep.subr.bf16.mxu0 0
    %565 = vmatpush1.bf16.msra.mxu0 0
    %566 = vmatprep.subr.bf16.mxu0 0
    %567 = vmatpush1.bf16.msra.mxu0 0
    %568 = vmatprep.subr.bf16.mxu0 0
    %569 = vmatpush1.bf16.msra.mxu0 0
    %570 = vmatprep.subr.bf16.mxu0 0
    %571 = vmatpush1.bf16.msra.mxu0 0
    %572 = vmatprep.mubr.bf16.mxu0 0
    %573 = vmatmul.mubr.bf16.gmra.mrb[0].mxu0 %v535
    %v574 = vpop.f32.mrb[0].mxu0
    %v575 = vadd.f32 %v520, %v574
    %v576 = vpop.f32.mrb[0].mxu0
    %v577 = vpop.f32.mrb[0].mxu0
    %v578 = vadd.f32 %v520, %v577
    %v579 = vpop.f32.mrb[0].mxu0
    %580 = vmatprep.mubr.bf16.mxu0 0
    %581 = vmatmul.mubr.bf16.gmra.mrb[0].mxu0 %v538
    %v582 = vpop.f32.mrb[0].mxu0
    %v583 = vadd.f32 %v520, %v582
    %v584 = vpop.f32.mrb[0].mxu0
    %v585 = vpop.f32.mrb[0].mxu0
    %v586 = vadd.f32 %v520, %v585
    %v587 = vpop.f32.mrb[0].mxu0
    %588 = vdwg.mxu0
    %v589 = vld [vmem:[%s5] sm:$0xf]
    %v590 = vld [vmem:[%s5 + $0x4] sm:$0xf]
    %v591 = vld [vmem:[%s5 + $0x8] sm:$0xf]
    %v592 = vld [vmem:[%s5 + $0xc] sm:$0xf]
    %v593 = vld [vmem:[#allocation12] sm:$0x1]
    %v595 = vlaneseq
    %v596 = vshrl.u32 %v595, 7
    %v597 = vsub.s32 0, %v596
    %v598 = vrot.slane %v593, %v597
    %v604 = vunpack.c.l.b16 %v589
    %v605 = vunpack.c.l.b16 %v590
    %v606 = vunpack.c.l.b16 %v591
    %v607 = vunpack.c.l.b16 %v592
    %v608 = vpack.c.b16 %v605, %v604
    %v609 = vpack.c.b16 %v607, %v606
    %v613 = vsel %vm465, %v440, 0
    %v616 = vsel %vm465, %v441, 0
    %618 = vmatprep.subr.bf16.mxu0 0
    %619 = vmatpush1.bf16.msra.mxu0 %v608
    %620 = vmatprep.subr.bf16.mxu0 0
    %621 = vmatpush1.bf16.msra.mxu0 %v609
    %622 = vmatprep.subr.bf16.mxu0 0
    %623 = vmatpush1.bf16.msra.mxu0 0
    %624 = vmatprep.subr.bf16.mxu0 0
    %625 = vmatpush1.bf16.msra.mxu0 0
    %626 = vmatprep.subr.bf16.mxu0 0
    %627 = vmatpush1.bf16.msra.mxu0 0
    %628 = vmatprep.subr.bf16.mxu0 0
    %629 = vmatpush1.bf16.msra.mxu0 0
    %630 = vmatprep.subr.bf16.mxu0 0
    %631 = vmatpush1.bf16.msra.mxu0 0
    %632 = vmatprep.subr.bf16.mxu0 0
    %633 = vmatpush1.bf16.msra.mxu0 0
    %634 = vmatprep.subr.bf16.mxu0 0
    %635 = vmatpush1.bf16.msra.mxu0 0
    %636 = vmatprep.subr.bf16.mxu0 0
    %637 = vmatpush1.bf16.msra.mxu0 0
    %638 = vmatprep.subr.bf16.mxu0 0
    %639 = vmatpush1.bf16.msra.mxu0 0
    %640 = vmatprep.subr.bf16.mxu0 0
    %641 = vmatpush1.bf16.msra.mxu0 0
    %642 = vmatprep.subr.bf16.mxu0 0
    %643 = vmatpush1.bf16.msra.mxu0 0
    %644 = vmatprep.subr.bf16.mxu0 0
    %645 = vmatpush1.bf16.msra.mxu0 0
    %646 = vmatprep.subr.bf16.mxu0 0
    %647 = vmatpush1.bf16.msra.mxu0 0
    %648 = vmatprep.subr.bf16.mxu0 0
    %649 = vmatpush1.bf16.msra.mxu0 0
    %650 = vmatprep.mubr.bf16.mxu0 0
    %651 = vmatmul.mubr.bf16.gmra.mrb[0].mxu0 %v613
    %v652 = vpop.f32.mrb[0].mxu0
    %v653 = vadd.f32 %v598, %v652
    %v654 = vpop.f32.mrb[0].mxu0
    %v655 = vpop.f32.mrb[0].mxu0
    %v656 = vadd.f32 %v598, %v655
    %v657 = vpop.f32.mrb[0].mxu0
    %658 = vmatprep.mubr.bf16.mxu0 0
    %659 = vmatmul.mubr.bf16.gmra.mrb[0].mxu0 %v616
    %v660 = vpop.f32.mrb[0].mxu0
    %v661 = vadd.f32 %v598, %v660
    %v662 = vpop.f32.mrb[0].mxu0
    %v663 = vpop.f32.mrb[0].mxu0
    %v664 = vadd.f32 %v598, %v663
    %v665 = vpop.f32.mrb[0].mxu0
    %666 = vdwg.mxu0
    %v667 = vpack.c.bf16 %v656, %v653
    %v668 = vpack.c.bf16 %v664, %v661
    %669 = vxpose.xlu0.b32.start [1/16] %v575, 128
    %670 = vxpose.xlu0.b32.cont [2/16] %v578, 128
    %671 = vxpose.xlu0.b32.cont [3/16] %v583, 128
    %672 = vxpose.xlu0.b32.cont [4/16] %v586, 128
    %673 = vxpose.xlu0.b32.cont [5/16] 0.0, 128
    %674 = vxpose.xlu0.b32.cont [6/16] 0.0, 128
    %675 = vxpose.xlu0.b32.cont [7/16] 0.0, 128
    %676 = vxpose.xlu0.b32.cont [8/16] 0.0, 128
    %677 = vxpose.xlu0.b32.cont [9/16] 0.0, 128
    %678 = vxpose.xlu0.b32.cont [10/16] 0.0, 128
    %679 = vxpose.xlu0.b32.cont [11/16] 0.0, 128
    %680 = vxpose.xlu0.b32.cont [12/16] 0.0, 128
    %681 = vxpose.xlu0.b32.cont [13/16] 0.0, 128
    %682 = vxpose.xlu0.b32.cont [14/16] 0.0, 128
    %683 = vxpose.xlu0.b32.cont [15/16] 0.0, 128
    %684 = vxpose.xlu0.b32.end [16/16] 0.0, 128
    %v685 = vpop.trf.xlu0
    %v686 = vpop.trf.xlu0
    %v687 = vpop.trf.xlu0
    %v688 = vpop.trf.xlu0
    %v689 = vpop.trf.xlu0
    %v690 = vpop.trf.xlu0
    %v691 = vpop.trf.xlu0
    %v692 = vpop.trf.xlu0
    %v693 = vpop.trf.xlu0
    %v694 = vpop.trf.xlu0
    %v695 = vpop.trf.xlu0
    %v696 = vpop.trf.xlu0
    %v697 = vpop.trf.xlu0
    %v698 = vpop.trf.xlu0
    %v699 = vpop.trf.xlu0
    %v700 = vpop.trf.xlu0
    %v701 = vpack.c.bf16 %v686, %v685
    %v702 = vpack.c.bf16 %v688, %v687
    %vm703 = vcmask 64512
    %v705 = vsel %vm703, %v510, 0
    %vm707 = vcmask 1043456
    %v709 = vsel %vm707, %v701, 0
    %711 = vmatprep.subr.bf16.mxu0 0
    %712 = vmatpush1.bf16.msra.mxu0 %v709
    %713 = vmatprep.subr.bf16.mxu0 0
    %714 = vmatpush1.bf16.msra.mxu0 0
    %715 = vmatprep.subr.bf16.mxu0 0
    %716 = vmatpush1.bf16.msra.mxu0 0
    %717 = vmatprep.subr.bf16.mxu0 0
    %718 = vmatpush1.bf16.msra.mxu0 0
    %719 = vmatprep.subr.bf16.mxu0 0
    %720 = vmatpush1.bf16.msra.mxu0 0
    %721 = vmatprep.subr.bf16.mxu0 0
    %722 = vmatpush1.bf16.msra.mxu0 0
    %723 = vmatprep.subr.bf16.mxu0 0
    %724 = vmatpush1.bf16.msra.mxu0 0
    %725 = vmatprep.subr.bf16.mxu0 0
    %726 = vmatpush1.bf16.msra.mxu0 0
    %727 = vmatprep.subr.bf16.mxu0 0
    %728 = vmatpush1.bf16.msra.mxu0 0
    %729 = vmatprep.subr.bf16.mxu0 0
    %730 = vmatpush1.bf16.msra.mxu0 0
    %731 = vmatprep.subr.bf16.mxu0 0
    %732 = vmatpush1.bf16.msra.mxu0 0
    %733 = vmatprep.subr.bf16.mxu0 0
    %734 = vmatpush1.bf16.msra.mxu0 0
    %735 = vmatprep.subr.bf16.mxu0 0
    %736 = vmatpush1.bf16.msra.mxu0 0
    %737 = vmatprep.subr.bf16.mxu0 0
    %738 = vmatpush1.bf16.msra.mxu0 0
    %739 = vmatprep.subr.bf16.mxu0 0
    %740 = vmatpush1.bf16.msra.mxu0 0
    %741 = vmatprep.subr.bf16.mxu0 0
    %742 = vmatpush1.bf16.msra.mxu0 0
    %743 = vmatprep.mubr.bf16.mxu0 0
    %744 = vmatmul.mubr.bf16.gmra.mrb[0].mxu0 %v705
    %v745 = vpop.f32.mrb[0].mxu0
    %v746 = vadd.f32 0.0, %v745
    %v747 = vpop.f32.mrb[0].mxu0
    %v748 = vpop.f32.mrb[0].mxu0
    %v749 = vpop.f32.mrb[0].mxu0
    %750 = vdwg.mxu0
    %vm751 = vcmask 130048
    %v752 = vsel %vm751, %v746, -inf
    %753 = vmax.xlane.f32.xlu0 %v752
    %v754 = vpop.xlane.xlu0 %753
    %v755 = vsub.f32 %v746, %v754
    %v756 = vmul.f32 %v755, 1.442695
    %v757 = vpow.pop %v756
    %v758 = vsel %vm751, %v757, 0.0
    %759 = vadd.xlane.f32.xlu0 %v758
    %v760 = vpop.xlane.xlu0 %759
    %v761 = vrcp.pop %v760
    %v762 = vmul.f32 %v757, %v761
    %v763 = vpack.c.bf16 %v762, %v762
    %v765 = vsel %vm751, %v763, 0
    %767 = vmatprep.subr.bf16.mxu0 0
    %768 = vmatpush1.bf16.msra.mxu0 %v667
    %769 = vmatprep.subr.bf16.mxu0 0
    %770 = vmatpush1.bf16.msra.mxu0 0
    %771 = vmatprep.subr.bf16.mxu0 0
    %772 = vmatpush1.bf16.msra.mxu0 0
    %773 = vmatprep.subr.bf16.mxu0 0
    %774 = vmatpush1.bf16.msra.mxu0 0
    %775 = vmatprep.subr.bf16.mxu0 0
    %776 = vmatpush1.bf16.msra.mxu0 0
    %777 = vmatprep.subr.bf16.mxu0 0
    %778 = vmatpush1.bf16.msra.mxu0 0
    %779 = vmatprep.subr.bf16.mxu0 0
    %780 = vmatpush1.bf16.msra.mxu0 0
    %781 = vmatprep.subr.bf16.mxu0 0
    %782 = vmatpush1.bf16.msra.mxu0 0
    %783 = vmatprep.subr.bf16.mxu0 0
    %784 = vmatpush1.bf16.msra.mxu0 0
    %785 = vmatprep.subr.bf16.mxu0 0
    %786 = vmatpush1.bf16.msra.mxu0 0
    %787 = vmatprep.subr.bf16.mxu0 0
    %788 = vmatpush1.bf16.msra.mxu0 0
    %789 = vmatprep.subr.bf16.mxu0 0
    %790 = vmatpush1.bf16.msra.mxu0 0
    %791 = vmatprep.subr.bf16.mxu0 0
    %792 = vmatpush1.bf16.msra.mxu0 0
    %793 = vmatprep.subr.bf16.mxu0 0
    %794 = vmatpush1.bf16.msra.mxu0 0
    %795 = vmatprep.subr.bf16.mxu0 0
    %796 = vmatpush1.bf16.msra.mxu0 0
    %797 = vmatprep.subr.bf16.mxu0 0
    %798 = vmatpush1.bf16.msra.mxu0 0
    %799 = vmatprep.mubr.bf16.mxu0 0
    %800 = vmatmul.mubr.bf16.gmra.mrb[0].mxu0 %v765
    %v801 = vpop.f32.mrb[0].mxu0
    %v802 = vadd.f32 0.0, %v801
    %v803 = vpop.f32.mrb[0].mxu0
    %v804 = vpop.f32.mrb[0].mxu0
    %v805 = vpop.f32.mrb[0].mxu0
    %806 = vdwg.mxu0
    %v807 = vpack.c.bf16 %v802, %v802
    %vm808 = vcmask 60416
    %809 = vst.msk [vmem:[#allocation2] sm:$0xf] %vm808, %v807
    %811 = vrot.lane.b32.xlu0 %v510, 120
    %v812 = vpop.permute.xlu0 %811
    %v814 = vrot.slane %v701, 4
    %v816 = vsel %vm703, %v812, 0
    %v819 = vsel %vm707, %v814, 0
    %821 = vmatprep.subr.bf16.mxu0 0
    %822 = vmatpush1.bf16.msra.mxu0 %v819
    %823 = vmatprep.subr.bf16.mxu0 0
    %824 = vmatpush1.bf16.msra.mxu0 0
    %825 = vmatprep.subr.bf16.mxu0 0
    %826 = vmatpush1.bf16.msra.mxu0 0
    %827 = vmatprep.subr.bf16.mxu0 0
    %828 = vmatpush1.bf16.msra.mxu0 0
    %829 = vmatprep.subr.bf16.mxu0 0
    %830 = vmatpush1.bf16.msra.mxu0 0
    %831 = vmatprep.subr.bf16.mxu0 0
    %832 = vmatpush1.bf16.msra.mxu0 0
    %833 = vmatprep.subr.bf16.mxu0 0
    %834 = vmatpush1.bf16.msra.mxu0 0
    %835 = vmatprep.subr.bf16.mxu0 0
    %836 = vmatpush1.bf16.msra.mxu0 0
    %837 = vmatprep.subr.bf16.mxu0 0
    %838 = vmatpush1.bf16.msra.mxu0 0
    %839 = vmatprep.subr.bf16.mxu0 0
    %840 = vmatpush1.bf16.msra.mxu0 0
    %841 = vmatprep.subr.bf16.mxu0 0
    %842 = vmatpush1.bf16.msra.mxu0 0
    %843 = vmatprep.subr.bf16.mxu0 0
    %844 = vmatpush1.bf16.msra.mxu0 0
    %845 = vmatprep.subr.bf16.mxu0 0
    %846 = vmatpush1.bf16.msra.mxu0 0
    %847 = vmatprep.subr.bf16.mxu0 0
    %848 = vmatpush1.bf16.msra.mxu0 0
    %849 = vmatprep.subr.bf16.mxu0 0
    %850 = vmatpush1.bf16.msra.mxu0 0
    %851 = vmatprep.subr.bf16.mxu0 0
    %852 = vmatpush1.bf16.msra.mxu0 0
    %853 = vmatprep.mubr.bf16.mxu0 0
    %854 = vmatmul.mubr.bf16.gmra.mrb[0].mxu0 %v816
    %v855 = vpop.f32.mrb[0].mxu0
    %v856 = vadd.f32 0.0, %v855
    %v857 = vpop.f32.mrb[0].mxu0
    %v858 = vpop.f32.mrb[0].mxu0
    %v859 = vpop.f32.mrb[0].mxu0
    %860 = vdwg.mxu0
    %v861 = vsel %vm751, %v856, -inf
    %862 = vmax.xlane.f32.xlu0 %v861
    %v863 = vpop.xlane.xlu0 %862
    %v864 = vsub.f32 %v856, %v863
    %v865 = vmul.f32 %v864, 1.442695
    %v866 = vpow.pop %v865
    %v867 = vsel %vm751, %v866, 0.0
    %868 = vadd.xlane.f32.xlu0 %v867
    %v869 = vpop.xlane.xlu0 %868
    %v870 = vrcp.pop %v869
    %v871 = vmul.f32 %v866, %v870
    %v872 = vpack.c.bf16 %v871, %v871
    %874 = vrot.lane.b32.xlu0 %v667, 120
    %v875 = vpop.permute.xlu0 %874
    %v878 = vsel %vm751, %v872, 0
    %880 = vmatprep.subr.bf16.mxu0 0
    %881 = vmatpush1.bf16.msra.mxu0 %v875
    %882 = vmatprep.subr.bf16.mxu0 0
    %883 = vmatpush1.bf16.msra.mxu0 0
    %884 = vmatprep.subr.bf16.mxu0 0
    %885 = vmatpush1.bf16.msra.mxu0 0
    %886 = vmatprep.subr.bf16.mxu0 0
    %887 = vmatpush1.bf16.msra.mxu0 0
    %888 = vmatprep.subr.bf16.mxu0 0
    %889 = vmatpush1.bf16.msra.mxu0 0
    %890 = vmatprep.subr.bf16.mxu0 0
    %891 = vmatpush1.bf16.msra.mxu0 0
    %892 = vmatprep.subr.bf16.mxu0 0
    %893 = vmatpush1.bf16.msra.mxu0 0
    %894 = vmatprep.subr.bf16.mxu0 0
    %895 = vmatpush1.bf16.msra.mxu0 0
    %896 = vmatprep.subr.bf16.mxu0 0
    %897 = vmatpush1.bf16.msra.mxu0 0
    %898 = vmatprep.subr.bf16.mxu0 0
    %899 = vmatpush1.bf16.msra.mxu0 0
    %900 = vmatprep.subr.bf16.mxu0 0
    %901 = vmatpush1.bf16.msra.mxu0 0
    %902 = vmatprep.subr.bf16.mxu0 0
    %903 = vmatpush1.bf16.msra.mxu0 0
    %904 = vmatprep.subr.bf16.mxu0 0
    %905 = vmatpush1.bf16.msra.mxu0 0
    %906 = vmatprep.subr.bf16.mxu0 0
    %907 = vmatpush1.bf16.msra.mxu0 0
    %908 = vmatprep.subr.bf16.mxu0 0
    %909 = vmatpush1.bf16.msra.mxu0 0
    %910 = vmatprep.subr.bf16.mxu0 0
    %911 = vmatpush1.bf16.msra.mxu0 0
    %912 = vmatprep.mubr.bf16.mxu0 0
    %913 = vmatmul.mubr.bf16.gmra.mrb[0].mxu0 %v878
    %v914 = vpop.f32.mrb[0].mxu0
    %v915 = vadd.f32 0.0, %v914
    %v916 = vpop.f32.mrb[0].mxu0
    %v917 = vpop.f32.mrb[0].mxu0
    %v918 = vpop.f32.mrb[0].mxu0
    %919 = vdwg.mxu0
    %v920 = vpack.c.bf16 %v915, %v915
    %922 = vrot.lane.b32.xlu0 %v920, 8
    %v923 = vpop.permute.xlu0 %922
    %vm925 = vcmask 126016
    %926 = vst.msk [vmem:[#allocation2] sm:$0xf] %vm925, %v923
    %927 = vrot.lane.b32.xlu0 %v510, 112
    %v928 = vpop.permute.xlu0 %927
    %v930 = vsel %vm703, %v928, 0
    %v933 = vsel %vm707, %v702, 0
    %935 = vmatprep.subr.bf16.mxu0 0
    %936 = vmatpush1.bf16.msra.mxu0 %v933
    %937 = vmatprep.subr.bf16.mxu0 0
    %938 = vmatpush1.bf16.msra.mxu0 0
    %939 = vmatprep.subr.bf16.mxu0 0
    %940 = vmatpush1.bf16.msra.mxu0 0
    %941 = vmatprep.subr.bf16.mxu0 0
    %942 = vmatpush1.bf16.msra.mxu0 0
    %943 = vmatprep.subr.bf16.mxu0 0
    %944 = vmatpush1.bf16.msra.mxu0 0
    %945 = vmatprep.subr.bf16.mxu0 0
    %946 = vmatpush1.bf16.msra.mxu0 0
    %947 = vmatprep.subr.bf16.mxu0 0
    %948 = vmatpush1.bf16.msra.mxu0 0
    %949 = vmatprep.subr.bf16.mxu0 0
    %950 = vmatpush1.bf16.msra.mxu0 0
    %951 = vmatprep.subr.bf16.mxu0 0
    %952 = vmatpush1.bf16.msra.mxu0 0
    %953 = vmatprep.subr.bf16.mxu0 0
    %954 = vmatpush1.bf16.msra.mxu0 0
    %955 = vmatprep.subr.bf16.mxu0 0
    %956 = vmatpush1.bf16.msra.mxu0 0
    %957 = vmatprep.subr.bf16.mxu0 0
    %958 = vmatpush1.bf16.msra.mxu0 0
    %959 = vmatprep.subr.bf16.mxu0 0
    %960 = vmatpush1.bf16.msra.mxu0 0
    %961 = vmatprep.subr.bf16.mxu0 0
    %962 = vmatpush1.bf16.msra.mxu0 0
    %963 = vmatprep.subr.bf16.mxu0 0
    %964 = vmatpush1.bf16.msra.mxu0 0
    %965 = vmatprep.subr.bf16.mxu0 0
    %966 = vmatpush1.bf16.msra.mxu0 0
    %967 = vmatprep.mubr.bf16.mxu0 0
    %968 = vmatmul.mubr.bf16.gmra.mrb[0].mxu0 %v930
    %v969 = vpop.f32.mrb[0].mxu0
    %v970 = vadd.f32 0.0, %v969
    %v971 = vpop.f32.mrb[0].mxu0
    %v972 = vpop.f32.mrb[0].mxu0
    %v973 = vpop.f32.mrb[0].mxu0
    %974 = vdwg.mxu0
    %v975 = vsel %vm751, %v970, -inf
    %976 = vmax.xlane.f32.xlu0 %v975
    %v977 = vpop.xlane.xlu0 %976
    %v978 = vsub.f32 %v970, %v977
    %v979 = vmul.f32 %v978, 1.442695
    %v980 = vpow.pop %v979
    %v981 = vsel %vm751, %v980, 0.0
    %982 = vadd.xlane.f32.xlu0 %v981
    %v983 = vpop.xlane.xlu0 %982
    %v984 = vrcp.pop %v983
    %v985 = vmul.f32 %v980, %v984
    %v986 = vpack.c.bf16 %v985, %v985
    %987 = vrot.lane.b32.xlu0 %v667, 112
    %v988 = vpop.permute.xlu0 %987
    %v991 = vsel %vm751, %v986, 0
    %993 = vmatprep.subr.bf16.mxu0 0
    %994 = vmatpush1.bf16.msra.mxu0 %v988
    %995 = vmatprep.subr.bf16.mxu0 0
    %996 = vmatpush1.bf16.msra.mxu0 0
    %997 = vmatprep.subr.bf16.mxu0 0
    %998 = vmatpush1.bf16.msra.mxu0 0
    %999 = vmatprep.subr.bf16.mxu0 0
    %1000 = vmatpush1.bf16.msra.mxu0 0
    %1001 = vmatprep.subr.bf16.mxu0 0
    %1002 = vmatpush1.bf16.msra.mxu0 0
    %1003 = vmatprep.subr.bf16.mxu0 0
    %1004 = vmatpush1.bf16.msra.mxu0 0
    %1005 = vmatprep.subr.bf16.mxu0 0
    %1006 = vmatpush1.bf16.msra.mxu0 0
    %1007 = vmatprep.subr.bf16.mxu0 0
    %1008 = vmatpush1.bf16.msra.mxu0 0
    %1009 = vmatprep.subr.bf16.mxu0 0
    %1010 = vmatpush1.bf16.msra.mxu0 0
    %1011 = vmatprep.subr.bf16.mxu0 0
    %1012 = vmatpush1.bf16.msra.mxu0 0
    %1013 = vmatprep.subr.bf16.mxu0 0
    %1014 = vmatpush1.bf16.msra.mxu0 0
    %1015 = vmatprep.subr.bf16.mxu0 0
    %1016 = vmatpush1.bf16.msra.mxu0 0
    %1017 = vmatprep.subr.bf16.mxu0 0
    %1018 = vmatpush1.bf16.msra.mxu0 0
    %1019 = vmatprep.subr.bf16.mxu0 0
    %1020 = vmatpush1.bf16.msra.mxu0 0
    %1021 = vmatprep.subr.bf16.mxu0 0
    %1022 = vmatpush1.bf16.msra.mxu0 0
    %1023 = vmatprep.subr.bf16.mxu0 0
    %1024 = vmatpush1.bf16.msra.mxu0 0
    %1025 = vmatprep.mubr.bf16.mxu0 0
    %1026 = vmatmul.mubr.bf16.gmra.mrb[0].mxu0 %v991
    %v1027 = vpop.f32.mrb[0].mxu0
    %v1028 = vadd.f32 0.0, %v1027
    %v1029 = vpop.f32.mrb[0].mxu0
    %v1030 = vpop.f32.mrb[0].mxu0
    %v1031 = vpop.f32.mrb[0].mxu0
    %1032 = vdwg.mxu0
    %v1033 = vpack.c.bf16 %v1028, %v1028
    %1035 = vrot.lane.b32.xlu0 %v1033, 16
    %v1036 = vpop.permute.xlu0 %1035
    %vm1038 = vcmask 191616
    %1039 = vst.msk [vmem:[#allocation2] sm:$0xf] %vm1038, %v1036
    %1040 = vrot.lane.b32.xlu0 %v510, 104
    %v1041 = vpop.permute.xlu0 %1040
    %v1043 = vrot.slane %v702, 4
    %v1045 = vsel %vm703, %v1041, 0
    %v1048 = vsel %vm707, %v1043, 0
    %1050 = vmatprep.subr.bf16.mxu0 0
    %1051 = vmatpush1.bf16.msra.mxu0 %v1048
    %1052 = vmatprep.subr.bf16.mxu0 0
    %1053 = vmatpush1.bf16.msra.mxu0 0
    %1054 = vmatprep.subr.bf16.mxu0 0
    %1055 = vmatpush1.bf16.msra.mxu0 0
    %1056 = vmatprep.subr.bf16.mxu0 0
    %1057 = vmatpush1.bf16.msra.mxu0 0
    %1058 = vmatprep.subr.bf16.mxu0 0
    %1059 = vmatpush1.bf16.msra.mxu0 0
    %1060 = vmatprep.subr.bf16.mxu0 0
    %1061 = vmatpush1.bf16.msra.mxu0 0
    %1062 = vmatprep.subr.bf16.mxu0 0
    %1063 = vmatpush1.bf16.msra.mxu0 0
    %1064 = vmatprep.subr.bf16.mxu0 0
    %1065 = vmatpush1.bf16.msra.mxu0 0
    %1066 = vmatprep.subr.bf16.mxu0 0
    %1067 = vmatpush1.bf16.msra.mxu0 0
    %1068 = vmatprep.subr.bf16.mxu0 0
    %1069 = vmatpush1.bf16.msra.mxu0 0
    %1070 = vmatprep.subr.bf16.mxu0 0
    %1071 = vmatpush1.bf16.msra.mxu0 0
    %1072 = vmatprep.subr.bf16.mxu0 0
    %1073 = vmatpush1.bf16.msra.mxu0 0
    %1074 = vmatprep.subr.bf16.mxu0 0
    %1075 = vmatpush1.bf16.msra.mxu0 0
    %1076 = vmatprep.subr.bf16.mxu0 0
    %1077 = vmatpush1.bf16.msra.mxu0 0
    %1078 = vmatprep.subr.bf16.mxu0 0
    %1079 = vmatpush1.bf16.msra.mxu0 0
    %1080 = vmatprep.subr.bf16.mxu0 0
    %1081 = vmatpush1.bf16.msra.mxu0 0
    %1082 = vmatprep.mubr.bf16.mxu0 0
    %1083 = vmatmul.mubr.bf16.gmra.mrb[0].mxu0 %v1045
    %v1084 = vpop.f32.mrb[0].mxu0
    %v1085 = vadd.f32 0.0, %v1084
    %v1086 = vpop.f32.mrb[0].mxu0
    %v1087 = vpop.f32.mrb[0].mxu0
    %v1088 = vpop.f32.mrb[0].mxu0
    %1089 = vdwg.mxu0
    %v1090 = vsel %vm751, %v1085, -inf
    %1091 = vmax.xlane.f32.xlu0 %v1090
    %v1092 = vpop.xlane.xlu0 %1091
    %v1093 = vsub.f32 %v1085, %v1092
    %v1094 = vmul.f32 %v1093, 1.442695
    %v1095 = vpow.pop %v1094
    %v1096 = vsel %vm751, %v1095, 0.0
    %1097 = vadd.xlane.f32.xlu0 %v1096
    %v1098 = vpop.xlane.xlu0 %1097
    %v1099 = vrcp.pop %v1098
    %v1100 = vmul.f32 %v1095, %v1099
    %v1101 = vpack.c.bf16 %v1100, %v1100
    %1102 = vrot.lane.b32.xlu0 %v667, 104
    %v1103 = vpop.permute.xlu0 %1102
    %v1106 = vsel %vm751, %v1101, 0
    %1108 = vmatprep.subr.bf16.mxu0 0
    %1109 = vmatpush1.bf16.msra.mxu0 %v1103
    %1110 = vmatprep.subr.bf16.mxu0 0
    %1111 = vmatpush1.bf16.msra.mxu0 0
    %1112 = vmatprep.subr.bf16.mxu0 0
    %1113 = vmatpush1.bf16.msra.mxu0 0
    %1114 = vmatprep.subr.bf16.mxu0 0
    %1115 = vmatpush1.bf16.msra.mxu0 0
    %1116 = vmatprep.subr.bf16.mxu0 0
    %1117 = vmatpush1.bf16.msra.mxu0 0
    %1118 = vmatprep.subr.bf16.mxu0 0
    %1119 = vmatpush1.bf16.msra.mxu0 0
    %1120 = vmatprep.subr.bf16.mxu0 0
    %1121 = vmatpush1.bf16.msra.mxu0 0
    %1122 = vmatprep.subr.bf16.mxu0 0
    %1123 = vmatpush1.bf16.msra.mxu0 0
    %1124 = vmatprep.subr.bf16.mxu0 0
    %1125 = vmatpush1.bf16.msra.mxu0 0
    %1126 = vmatprep.subr.bf16.mxu0 0
    %1127 = vmatpush1.bf16.msra.mxu0 0
    %1128 = vmatprep.subr.bf16.mxu0 0
    %1129 = vmatpush1.bf16.msra.mxu0 0
    %1130 = vmatprep.subr.bf16.mxu0 0
    %1131 = vmatpush1.bf16.msra.mxu0 0
    %1132 = vmatprep.subr.bf16.mxu0 0
    %1133 = vmatpush1.bf16.msra.mxu0 0
    %1134 = vmatprep.subr.bf16.mxu0 0
    %1135 = vmatpush1.bf16.msra.mxu0 0
    %1136 = vmatprep.subr.bf16.mxu0 0
    %1137 = vmatpush1.bf16.msra.mxu0 0
    %1138 = vmatprep.subr.bf16.mxu0 0
    %1139 = vmatpush1.bf16.msra.mxu0 0
    %1140 = vmatprep.mubr.bf16.mxu0 0
    %1141 = vmatmul.mubr.bf16.gmra.mrb[0].mxu0 %v1106
    %v1142 = vpop.f32.mrb[0].mxu0
    %v1143 = vadd.f32 0.0, %v1142
    %v1144 = vpop.f32.mrb[0].mxu0
    %v1145 = vpop.f32.mrb[0].mxu0
    %v1146 = vpop.f32.mrb[0].mxu0
    %1147 = vdwg.mxu0
    %v1148 = vpack.c.bf16 %v1143, %v1143
    %1150 = vrot.lane.b32.xlu0 %v1148, 24
    %v1151 = vpop.permute.xlu0 %1150
    %vm1153 = vcmask 257216
    %1154 = vst.msk [vmem:[#allocation2] sm:$0xf] %vm1153, %v1151
    %v1155 = vrot.slane %v510, 4
    %1156 = vrot.lane.b32.xlu0 %v701, 112
    %v1157 = vpop.permute.xlu0 %1156
    %v1159 = vsel %vm703, %v1155, 0
    %v1162 = vsel %vm707, %v1157, 0
    %1164 = vmatprep.subr.bf16.mxu0 0
    %1165 = vmatpush1.bf16.msra.mxu0 %v1162
    %1166 = vmatprep.subr.bf16.mxu0 0
    %1167 = vmatpush1.bf16.msra.mxu0 0
    %1168 = vmatprep.subr.bf16.mxu0 0
    %1169 = vmatpush1.bf16.msra.mxu0 0
    %1170 = vmatprep.subr.bf16.mxu0 0
    %1171 = vmatpush1.bf16.msra.mxu0 0
    %1172 = vmatprep.subr.bf16.mxu0 0
    %1173 = vmatpush1.bf16.msra.mxu0 0
    %1174 = vmatprep.subr.bf16.mxu0 0
    %1175 = vmatpush1.bf16.msra.mxu0 0
    %1176 = vmatprep.subr.bf16.mxu0 0
    %1177 = vmatpush1.bf16.msra.mxu0 0
    %1178 = vmatprep.subr.bf16.mxu0 0
    %1179 = vmatpush1.bf16.msra.mxu0 0
    %1180 = vmatprep.subr.bf16.mxu0 0
    %1181 = vmatpush1.bf16.msra.mxu0 0
    %1182 = vmatprep.subr.bf16.mxu0 0
    %1183 = vmatpush1.bf16.msra.mxu0 0
    %1184 = vmatprep.subr.bf16.mxu0 0
    %1185 = vmatpush1.bf16.msra.mxu0 0
    %1186 = vmatprep.subr.bf16.mxu0 0
    %1187 = vmatpush1.bf16.msra.mxu0 0
    %1188 = vmatprep.subr.bf16.mxu0 0
    %1189 = vmatpush1.bf16.msra.mxu0 0
    %1190 = vmatprep.subr.bf16.mxu0 0
    %1191 = vmatpush1.bf16.msra.mxu0 0
    %1192 = vmatprep.subr.bf16.mxu0 0
    %1193 = vmatpush1.bf16.msra.mxu0 0
    %1194 = vmatprep.subr.bf16.mxu0 0
    %1195 = vmatpush1.bf16.msra.mxu0 0
    %1196 = vmatprep.mubr.bf16.mxu0 0
    %1197 = vmatmul.mubr.bf16.gmra.mrb[0].mxu0 %v1159
    %v1198 = vpop.f32.mrb[0].mxu0
    %v1199 = vadd.f32 0.0, %v1198
    %v1200 = vpop.f32.mrb[0].mxu0
    %v1201 = vpop.f32.mrb[0].mxu0
    %v1202 = vpop.f32.mrb[0].mxu0
    %1203 = vdwg.mxu0
    %v1204 = vsel %vm751, %v1199, -inf
    %1205 = vmax.xlane.f32.xlu0 %v1204
    %v1206 = vpop.xlane.xlu0 %1205
    %v1207 = vsub.f32 %v1199, %v1206
    %v1208 = vmul.f32 %v1207, 1.442695
    %v1209 = vpow.pop %v1208
    %v1210 = vsel %vm751, %v1209, 0.0
    %1211 = vadd.xlane.f32.xlu0 %v1210
    %v1212 = vpop.xlane.xlu0 %1211
    %v1213 = vrcp.pop %v1212
    %v1214 = vmul.f32 %v1209, %v1213
    %v1215 = vpack.c.bf16 %v1214, %v1214
    %v1217 = vsel %vm751, %v1215, 0
    %1219 = vmatprep.subr.bf16.mxu0 0
    %1220 = vmatpush1.bf16.msra.mxu0 %v668
    %1221 = vmatprep.subr.bf16.mxu0 0
    %1222 = vmatpush1.bf16.msra.mxu0 0
    %1223 = vmatprep.subr.bf16.mxu0 0
    %1224 = vmatpush1.bf16.msra.mxu0 0
    %1225 = vmatprep.subr.bf16.mxu0 0
    %1226 = vmatpush1.bf16.msra.mxu0 0
    %1227 = vmatprep.subr.bf16.mxu0 0
    %1228 = vmatpush1.bf16.msra.mxu0 0
    %1229 = vmatprep.subr.bf16.mxu0 0
    %1230 = vmatpush1.bf16.msra.mxu0 0
    %1231 = vmatprep.subr.bf16.mxu0 0
    %1232 = vmatpush1.bf16.msra.mxu0 0
    %1233 = vmatprep.subr.bf16.mxu0 0
    %1234 = vmatpush1.bf16.msra.mxu0 0
    %1235 = vmatprep.subr.bf16.mxu0 0
    %1236 = vmatpush1.bf16.msra.mxu0 0
    %1237 = vmatprep.subr.bf16.mxu0 0
    %1238 = vmatpush1.bf16.msra.mxu0 0
    %1239 = vmatprep.subr.bf16.mxu0 0
    %1240 = vmatpush1.bf16.msra.mxu0 0
    %1241 = vmatprep.subr.bf16.mxu0 0
    %1242 = vmatpush1.bf16.msra.mxu0 0
    %1243 = vmatprep.subr.bf16.mxu0 0
    %1244 = vmatpush1.bf16.msra.mxu0 0
    %1245 = vmatprep.subr.bf16.mxu0 0
    %1246 = vmatpush1.bf16.msra.mxu0 0
    %1247 = vmatprep.subr.bf16.mxu0 0
    %1248 = vmatpush1.bf16.msra.mxu0 0
    %1249 = vmatprep.subr.bf16.mxu0 0
    %1250 = vmatpush1.bf16.msra.mxu0 0
    %1251 = vmatprep.mubr.bf16.mxu0 0
    %1252 = vmatmul.mubr.bf16.gmra.mrb[0].mxu0 %v1217
    %v1253 = vpop.f32.mrb[0].mxu0
    %v1254 = vadd.f32 0.0, %v1253
    %v1255 = vpop.f32.mrb[0].mxu0
    %v1256 = vpop.f32.mrb[0].mxu0
    %v1257 = vpop.f32.mrb[0].mxu0
    %1258 = vdwg.mxu0
    %v1259 = vpack.c.bf16 %v1254, %v1254
    %v1261 = vrot.slane %v1259, 4
    %vm1263 = vcmask 64516
    %1264 = vst.msk [vmem:[#allocation2] sm:$0xf0] %vm1263, %v1261
    %1265 = vrot.lane.b32.xlu0 %v1155, 120
    %v1266 = vpop.permute.xlu0 %1265
    %1267 = vrot.lane.b32.xlu0 %v814, 112
    %v1268 = vpop.permute.xlu0 %1267
    %v1270 = vsel %vm703, %v1266, 0
    %v1273 = vsel %vm707, %v1268, 0
    %1275 = vmatprep.subr.bf16.mxu0 0
    %1276 = vmatpush1.bf16.msra.mxu0 %v1273
    %1277 = vmatprep.subr.bf16.mxu0 0
    %1278 = vmatpush1.bf16.msra.mxu0 0
    %1279 = vmatprep.subr.bf16.mxu0 0
    %1280 = vmatpush1.bf16.msra.mxu0 0
    %1281 = vmatprep.subr.bf16.mxu0 0
    %1282 = vmatpush1.bf16.msra.mxu0 0
    %1283 = vmatprep.subr.bf16.mxu0 0
    %1284 = vmatpush1.bf16.msra.mxu0 0
    %1285 = vmatprep.subr.bf16.mxu0 0
    %1286 = vmatpush1.bf16.msra.mxu0 0
    %1287 = vmatprep.subr.bf16.mxu0 0
    %1288 = vmatpush1.bf16.msra.mxu0 0
    %1289 = vmatprep.subr.bf16.mxu0 0
    %1290 = vmatpush1.bf16.msra.mxu0 0
    %1291 = vmatprep.subr.bf16.mxu0 0
    %1292 = vmatpush1.bf16.msra.mxu0 0
    %1293 = vmatprep.subr.bf16.mxu0 0
    %1294 = vmatpush1.bf16.msra.mxu0 0
    %1295 = vmatprep.subr.bf16.mxu0 0
    %1296 = vmatpush1.bf16.msra.mxu0 0
    %1297 = vmatprep.subr.bf16.mxu0 0
    %1298 = vmatpush1.bf16.msra.mxu0 0
    %1299 = vmatprep.subr.bf16.mxu0 0
    %1300 = vmatpush1.bf16.msra.mxu0 0
    %1301 = vmatprep.subr.bf16.mxu0 0
    %1302 = vmatpush1.bf16.msra.mxu0 0
    %1303 = vmatprep.subr.bf16.mxu0 0
    %1304 = vmatpush1.bf16.msra.mxu0 0
    %1305 = vmatprep.subr.bf16.mxu0 0
    %1306 = vmatpush1.bf16.msra.mxu0 0
    %1307 = vmatprep.mubr.bf16.mxu0 0
    %1308 = vmatmul.mubr.bf16.gmra.mrb[0].mxu0 %v1270
    %v1309 = vpop.f32.mrb[0].mxu0
    %v1310 = vadd.f32 0.0, %v1309
    %v1311 = vpop.f32.mrb[0].mxu0
    %v1312 = vpop.f32.mrb[0].mxu0
    %v1313 = vpop.f32.mrb[0].mxu0
    %1314 = vdwg.mxu0
    %v1315 = vsel %vm751, %v1310, -inf
    %1316 = vmax.xlane.f32.xlu0 %v1315
    %v1317 = vpop.xlane.xlu0 %1316
    %v1318 = vsub.f32 %v1310, %v1317
    %v1319 = vmul.f32 %v1318, 1.442695
    %v1320 = vpow.pop %v1319
    %v1321 = vsel %vm751, %v1320, 0.0
    %1322 = vadd.xlane.f32.xlu0 %v1321
    %v1323 = vpop.xlane.xlu0 %1322
    %v1324 = vrcp.pop %v1323
    %v1325 = vmul.f32 %v1320, %v1324
    %v1326 = vpack.c.bf16 %v1325, %v1325
    %1328 = vrot.lane.b32.xlu0 %v668, 120
    %v1329 = vpop.permute.xlu0 %1328
    %v1332 = vsel %vm751, %v1326, 0
    %1334 = vmatprep.subr.bf16.mxu0 0
    %1335 = vmatpush1.bf16.msra.mxu0 %v1329
    %1336 = vmatprep.subr.bf16.mxu0 0
    %1337 = vmatpush1.bf16.msra.mxu0 0
    %1338 = vmatprep.subr.bf16.mxu0 0
    %1339 = vmatpush1.bf16.msra.mxu0 0
    %1340 = vmatprep.subr.bf16.mxu0 0
    %1341 = vmatpush1.bf16.msra.mxu0 0
    %1342 = vmatprep.subr.bf16.mxu0 0
    %1343 = vmatpush1.bf16.msra.mxu0 0
    %1344 = vmatprep.subr.bf16.mxu0 0
    %1345 = vmatpush1.bf16.msra.mxu0 0
    %1346 = vmatprep.subr.bf16.mxu0 0
    %1347 = vmatpush1.bf16.msra.mxu0 0
    %1348 = vmatprep.subr.bf16.mxu0 0
    %1349 = vmatpush1.bf16.msra.mxu0 0
    %1350 = vmatprep.subr.bf16.mxu0 0
    %1351 = vmatpush1.bf16.msra.mxu0 0
    %1352 = vmatprep.subr.bf16.mxu0 0
    %1353 = vmatpush1.bf16.msra.mxu0 0
    %1354 = vmatprep.subr.bf16.mxu0 0
    %1355 = vmatpush1.bf16.msra.mxu0 0
    %1356 = vmatprep.subr.bf16.mxu0 0
    %1357 = vmatpush1.bf16.msra.mxu0 0
    %1358 = vmatprep.subr.bf16.mxu0 0
    %1359 = vmatpush1.bf16.msra.mxu0 0
    %1360 = vmatprep.subr.bf16.mxu0 0
    %1361 = vmatpush1.bf16.msra.mxu0 0
    %1362 = vmatprep.subr.bf16.mxu0 0
    %1363 = vmatpush1.bf16.msra.mxu0 0
    %1364 = vmatprep.subr.bf16.mxu0 0
    %1365 = vmatpush1.bf16.msra.mxu0 0
    %1366 = vmatprep.mubr.bf16.mxu0 0
    %1367 = vmatmul.mubr.bf16.gmra.mrb[0].mxu0 %v1332
    %v1368 = vpop.f32.mrb[0].mxu0
    %v1369 = vadd.f32 0.0, %v1368
    %v1370 = vpop.f32.mrb[0].mxu0
    %v1371 = vpop.f32.mrb[0].mxu0
    %v1372 = vpop.f32.mrb[0].mxu0
    %1373 = vdwg.mxu0
    %v1374 = vpack.c.bf16 %v1369, %v1369
    %v1376 = vrot.slane %v1374, 4
    %1377 = vrot.lane.b32.xlu0 %v1376, 8
    %v1378 = vpop.permute.xlu0 %1377
    %vm1380 = vcmask 130116
    %1381 = vst.msk [vmem:[#allocation2] sm:$0xf0] %vm1380, %v1378
    %1382 = vrot.lane.b32.xlu0 %v1155, 112
    %v1383 = vpop.permute.xlu0 %1382
    %1384 = vrot.lane.b32.xlu0 %v702, 112
    %v1385 = vpop.permute.xlu0 %1384
    %v1387 = vsel %vm703, %v1383, 0
    %v1390 = vsel %vm707, %v1385, 0
    %1392 = vmatprep.subr.bf16.mxu0 0
    %1393 = vmatpush1.bf16.msra.mxu0 %v1390
    %1394 = vmatprep.subr.bf16.mxu0 0
    %1395 = vmatpush1.bf16.msra.mxu0 0
    %1396 = vmatprep.subr.bf16.mxu0 0
    %1397 = vmatpush1.bf16.msra.mxu0 0
    %1398 = vmatprep.subr.bf16.mxu0 0
    %1399 = vmatpush1.bf16.msra.mxu0 0
    %1400 = vmatprep.subr.bf16.mxu0 0
    %1401 = vmatpush1.bf16.msra.mxu0 0
    %1402 = vmatprep.subr.bf16.mxu0 0
    %1403 = vmatpush1.bf16.msra.mxu0 0
    %1404 = vmatprep.subr.bf16.mxu0 0
    %1405 = vmatpush1.bf16.msra.mxu0 0
    %1406 = vmatprep.subr.bf16.mxu0 0
    %1407 = vmatpush1.bf16.msra.mxu0 0
    %1408 = vmatprep.subr.bf16.mxu0 0
    %1409 = vmatpush1.bf16.msra.mxu0 0
    %1410 = vmatprep.subr.bf16.mxu0 0
    %1411 = vmatpush1.bf16.msra.mxu0 0
    %1412 = vmatprep.subr.bf16.mxu0 0
    %1413 = vmatpush1.bf16.msra.mxu0 0
    %1414 = vmatprep.subr.bf16.mxu0 0
    %1415 = vmatpush1.bf16.msra.mxu0 0
    %1416 = vmatprep.subr.bf16.mxu0 0
    %1417 = vmatpush1.bf16.msra.mxu0 0
    %1418 = vmatprep.subr.bf16.mxu0 0
    %1419 = vmatpush1.bf16.msra.mxu0 0
    %1420 = vmatprep.subr.bf16.mxu0 0
    %1421 = vmatpush1.bf16.msra.mxu0 0
    %1422 = vmatprep.subr.bf16.mxu0 0
    %1423 = vmatpush1.bf16.msra.mxu0 0
    %1424 = vmatprep.mubr.bf16.mxu0 0
    %1425 = vmatmul.mubr.bf16.gmra.mrb[0].mxu0 %v1387
    %v1426 = vpop.f32.mrb[0].mxu0
    %v1427 = vadd.f32 0.0, %v1426
    %v1428 = vpop.f32.mrb[0].mxu0
    %v1429 = vpop.f32.mrb[0].mxu0
    %v1430 = vpop.f32.mrb[0].mxu0
    %1431 = vdwg.mxu0
    %v1432 = vsel %vm751, %v1427, -inf
    %1433 = vmax.xlane.f32.xlu0 %v1432
    %v1434 = vpop.xlane.xlu0 %1433
    %v1435 = vsub.f32 %v1427, %v1434
    %v1436 = vmul.f32 %v1435, 1.442695
    %v1437 = vpow.pop %v1436
    %v1438 = vsel %vm751, %v1437, 0.0
    %1439 = vadd.xlane.f32.xlu0 %v1438
    %v1440 = vpop.xlane.xlu0 %1439
    %v1441 = vrcp.pop %v1440
    %v1442 = vmul.f32 %v1437, %v1441
    %v1443 = vpack.c.bf16 %v1442, %v1442
    %1444 = vrot.lane.b32.xlu0 %v668, 112
    %v1445 = vpop.permute.xlu0 %1444
    %v1448 = vsel %vm751, %v1443, 0
    %1450 = vmatprep.subr.bf16.mxu0 0
    %1451 = vmatpush1.bf16.msra.mxu0 %v1445
    %1452 = vmatprep.subr.bf16.mxu0 0
    %1453 = vmatpush1.bf16.msra.mxu0 0
    %1454 = vmatprep.subr.bf16.mxu0 0
    %1455 = vmatpush1.bf16.msra.mxu0 0
    %1456 = vmatprep.subr.bf16.mxu0 0
    %1457 = vmatpush1.bf16.msra.mxu0 0
    %1458 = vmatprep.subr.bf16.mxu0 0
    %1459 = vmatpush1.bf16.msra.mxu0 0
    %1460 = vmatprep.subr.bf16.mxu0 0
    %1461 = vmatpush1.bf16.msra.mxu0 0
    %1462 = vmatprep.subr.bf16.mxu0 0
    %1463 = vmatpush1.bf16.msra.mxu0 0
    %1464 = vmatprep.subr.bf16.mxu0 0
    %1465 = vmatpush1.bf16.msra.mxu0 0
    %1466 = vmatprep.subr.bf16.mxu0 0
    %1467 = vmatpush1.bf16.msra.mxu0 0
    %1468 = vmatprep.subr.bf16.mxu0 0
    %1469 = vmatpush1.bf16.msra.mxu0 0
    %1470 = vmatprep.subr.bf16.mxu0 0
    %1471 = vmatpush1.bf16.msra.mxu0 0
    %1472 = vmatprep.subr.bf16.mxu0 0
    %1473 = vmatpush1.bf16.msra.mxu0 0
    %1474 = vmatprep.subr.bf16.mxu0 0
    %1475 = vmatpush1.bf16.msra.mxu0 0
    %1476 = vmatprep.subr.bf16.mxu0 0
    %1477 = vmatpush1.bf16.msra.mxu0 0
    %1478 = vmatprep.subr.bf16.mxu0 0
    %1479 = vmatpush1.bf16.msra.mxu0 0
    %1480 = vmatprep.subr.bf16.mxu0 0
    %1481 = vmatpush1.bf16.msra.mxu0 0
    %1482 = vmatprep.mubr.bf16.mxu0 0
    %1483 = vmatmul.mubr.bf16.gmra.mrb[0].mxu0 %v1448
    %v1484 = vpop.f32.mrb[0].mxu0
    %v1485 = vadd.f32 0.0, %v1484
    %v1486 = vpop.f32.mrb[0].mxu0
    %v1487 = vpop.f32.mrb[0].mxu0
    %v1488 = vpop.f32.mrb[0].mxu0
    %1489 = vdwg.mxu0
    %v1490 = vpack.c.bf16 %v1485, %v1485
    %v1492 = vrot.slane %v1490, 4
    %1493 = vrot.lane.b32.xlu0 %v1492, 16
    %v1494 = vpop.permute.xlu0 %1493
    %vm1496 = vcmask 195716
    %1497 = vst.msk [vmem:[#allocation2] sm:$0xf0] %vm1496, %v1494
    %1498 = vrot.lane.b32.xlu0 %v1155, 104
    %v1499 = vpop.permute.xlu0 %1498
    %1500 = vrot.lane.b32.xlu0 %v1043, 112
    %v1501 = vpop.permute.xlu0 %1500
    %v1503 = vsel %vm703, %v1499, 0
    %v1506 = vsel %vm707, %v1501, 0
    %1508 = vmatprep.subr.bf16.mxu0 0
    %1509 = vmatpush1.bf16.msra.mxu0 %v1506
    %1510 = vmatprep.subr.bf16.mxu0 0
    %1511 = vmatpush1.bf16.msra.mxu0 0
    %1512 = vmatprep.subr.bf16.mxu0 0
    %1513 = vmatpush1.bf16.msra.mxu0 0
    %1514 = vmatprep.subr.bf16.mxu0 0
    %1515 = vmatpush1.bf16.msra.mxu0 0
    %1516 = vmatprep.subr.bf16.mxu0 0
    %1517 = vmatpush1.bf16.msra.mxu0 0
    %1518 = vmatprep.subr.bf16.mxu0 0
    %1519 = vmatpush1.bf16.msra.mxu0 0
    %1520 = vmatprep.subr.bf16.mxu0 0
    %1521 = vmatpush1.bf16.msra.mxu0 0
    %1522 = vmatprep.subr.bf16.mxu0 0
    %1523 = vmatpush1.bf16.msra.mxu0 0
    %1524 = vmatprep.subr.bf16.mxu0 0
    %1525 = vmatpush1.bf16.msra.mxu0 0
    %1526 = vmatprep.subr.bf16.mxu0 0
    %1527 = vmatpush1.bf16.msra.mxu0 0
    %1528 = vmatprep.subr.bf16.mxu0 0
    %1529 = vmatpush1.bf16.msra.mxu0 0
    %1530 = vmatprep.subr.bf16.mxu0 0
    %1531 = vmatpush1.bf16.msra.mxu0 0
    %1532 = vmatprep.subr.bf16.mxu0 0
    %1533 = vmatpush1.bf16.msra.mxu0 0
    %1534 = vmatprep.subr.bf16.mxu0 0
    %1535 = vmatpush1.bf16.msra.mxu0 0
    %1536 = vmatprep.subr.bf16.mxu0 0
    %1537 = vmatpush1.bf16.msra.mxu0 0
    %1538 = vmatprep.subr.bf16.mxu0 0
    %1539 = vmatpush1.bf16.msra.mxu0 0
    %1540 = vmatprep.mubr.bf16.mxu0 0
    %1541 = vmatmul.mubr.bf16.gmra.mrb[0].mxu0 %v1503
    %v1542 = vpop.f32.mrb[0].mxu0
    %v1543 = vadd.f32 0.0, %v1542
    %v1544 = vpop.f32.mrb[0].mxu0
    %v1545 = vpop.f32.mrb[0].mxu0
    %v1546 = vpop.f32.mrb[0].mxu0
    %1547 = vdwg.mxu0
    %v1548 = vsel %vm751, %v1543, -inf
    %1549 = vmax.xlane.f32.xlu0 %v1548
    %v1550 = vpop.xlane.xlu0 %1549
    %v1551 = vsub.f32 %v1543, %v1550
    %v1552 = vmul.f32 %v1551, 1.442695
    %v1553 = vpow.pop %v1552
    %v1554 = vsel %vm751, %v1553, 0.0
    %1555 = vadd.xlane.f32.xlu0 %v1554
    %v1556 = vpop.xlane.xlu0 %1555
    %v1557 = vrcp.pop %v1556
    %v1558 = vmul.f32 %v1553, %v1557
    %v1559 = vpack.c.bf16 %v1558, %v1558
    %1560 = vrot.lane.b32.xlu0 %v668, 104
    %v1561 = vpop.permute.xlu0 %1560
    %v1564 = vsel %vm751, %v1559, 0
    %1566 = vmatprep.subr.bf16.mxu0 0
    %1567 = vmatpush1.bf16.msra.mxu0 %v1561
    %1568 = vmatprep.subr.bf16.mxu0 0
    %1569 = vmatpush1.bf16.msra.mxu0 0
    %1570 = vmatprep.subr.bf16.mxu0 0
    %1571 = vmatpush1.bf16.msra.mxu0 0
    %1572 = vmatprep.subr.bf16.mxu0 0
    %1573 = vmatpush1.bf16.msra.mxu0 0
    %1574 = vmatprep.subr.bf16.mxu0 0
    %1575 = vmatpush1.bf16.msra.mxu0 0
    %1576 = vmatprep.subr.bf16.mxu0 0
    %1577 = vmatpush1.bf16.msra.mxu0 0
    %1578 = vmatprep.subr.bf16.mxu0 0
    %1579 = vmatpush1.bf16.msra.mxu0 0
    %1580 = vmatprep.subr.bf16.mxu0 0
    %1581 = vmatpush1.bf16.msra.mxu0 0
    %1582 = vmatprep.subr.bf16.mxu0 0
    %1583 = vmatpush1.bf16.msra.mxu0 0
    %1584 = vmatprep.subr.bf16.mxu0 0
    %1585 = vmatpush1.bf16.msra.mxu0 0
    %1586 = vmatprep.subr.bf16.mxu0 0
    %1587 = vmatpush1.bf16.msra.mxu0 0
    %1588 = vmatprep.subr.bf16.mxu0 0
    %1589 = vmatpush1.bf16.msra.mxu0 0
    %1590 = vmatprep.subr.bf16.mxu0 0
    %1591 = vmatpush1.bf16.msra.mxu0 0
    %1592 = vmatprep.subr.bf16.mxu0 0
    %1593 = vmatpush1.bf16.msra.mxu0 0
    %1594 = vmatprep.subr.bf16.mxu0 0
    %1595 = vmatpush1.bf16.msra.mxu0 0
    %1596 = vmatprep.subr.bf16.mxu0 0
    %1597 = vmatpush1.bf16.msra.mxu0 0
    %1598 = vmatprep.mubr.bf16.mxu0 0
    %1599 = vmatmul.mubr.bf16.gmra.mrb[0].mxu0 %v1564
    %v1600 = vpop.f32.mrb[0].mxu0
    %v1601 = vadd.f32 0.0, %v1600
    %v1602 = vpop.f32.mrb[0].mxu0
    %v1603 = vpop.f32.mrb[0].mxu0
    %v1604 = vpop.f32.mrb[0].mxu0
    %1605 = vdwg.mxu0
    %v1606 = vpack.c.bf16 %v1601, %v1601
    %v1608 = vrot.slane %v1606, 4
    %1609 = vrot.lane.b32.xlu0 %v1608, 24
    %v1610 = vpop.permute.xlu0 %1609
    %vm1612 = vcmask 261316
    %1613 = vst.msk [vmem:[#allocation2] sm:$0xf0] %vm1612, %v1610
    %v1614 = vld [vmem:[#allocation2] sm:$0xff]
    %v1615 = vld [vmem:[%s9] sm:$0xf]
    %v1616 = vld [vmem:[%s9 + $0x4] sm:$0xf]
    %v1617 = vld [vmem:[%s9 + $0x8] sm:$0xf]
    %v1618 = vld [vmem:[%s9 + $0xc] sm:$0xf]
    %v1619 = vld [vmem:[%s10] sm:$0x1]
    %v1621 = vlaneseq
    %v1622 = vshrl.u32 %v1621, 7
    %v1623 = vsub.s32 0, %v1622
    %v1624 = vrot.slane %v1619, %v1623
    %v1630 = vunpack.c.l.b16 %v1615
    %v1631 = vunpack.c.l.b16 %v1616
    %v1632 = vunpack.c.l.b16 %v1617
    %v1633 = vunpack.c.l.b16 %v1618
    %v1634 = vpack.c.b16 %v1631, %v1630
    %v1635 = vpack.c.b16 %v1633, %v1632
    %v1639 = vsel %vm465, %v1614, 0
    %1641 = vmatprep.subr.bf16.mxu0 0
    %1642 = vmatpush1.bf16.msra.mxu0 %v1634
    %1643 = vmatprep.subr.bf16.mxu0 0
    %1644 = vmatpush1.bf16.msra.mxu0 %v1635
    %1645 = vmatprep.subr.bf16.mxu0 0
    %1646 = vmatpush1.bf16.msra.mxu0 0
    %1647 = vmatprep.subr.bf16.mxu0 0
    %1648 = vmatpush1.bf16.msra.mxu0 0
    %1649 = vmatprep.subr.bf16.mxu0 0
    %1650 = vmatpush1.bf16.msra.mxu0 0
    %1651 = vmatprep.subr.bf16.mxu0 0
    %1652 = vmatpush1.bf16.msra.mxu0 0
    %1653 = vmatprep.subr.bf16.mxu0 0
    %1654 = vmatpush1.bf16.msra.mxu0 0
    %1655 = vmatprep.subr.bf16.mxu0 0
    %1656 = vmatpush1.bf16.msra.mxu0 0
    %1657 = vmatprep.subr.bf16.mxu0 0
    %1658 = vmatpush1.bf16.msra.mxu0 0
    %1659 = vmatprep.subr.bf16.mxu0 0
    %1660 = vmatpush1.bf16.msra.mxu0 0
    %1661 = vmatprep.subr.bf16.mxu0 0
    %1662 = vmatpush1.bf16.msra.mxu0 0
    %1663 = vmatprep.subr.bf16.mxu0 0
    %1664 = vmatpush1.bf16.msra.mxu0 0
    %1665 = vmatprep.subr.bf16.mxu0 0
    %1666 = vmatpush1.bf16.msra.mxu0 0
    %1667 = vmatprep.subr.bf16.mxu0 0
    %1668 = vmatpush1.bf16.msra.mxu0 0
    %1669 = vmatprep.subr.bf16.mxu0 0
    %1670 = vmatpush1.bf16.msra.mxu0 0
    %1671 = vmatprep.subr.bf16.mxu0 0
    %1672 = vmatpush1.bf16.msra.mxu0 0
    %1673 = vmatprep.mubr.bf16.mxu0 0
    %1674 = vmatmul.mubr.bf16.gmra.mrb[0].mxu0 %v1639
    %v1675 = vpop.f32.mrb[0].mxu0
    %v1676 = vadd.f32 %v1624, %v1675
    %v1677 = vpop.f32.mrb[0].mxu0
    %v1678 = vpop.f32.mrb[0].mxu0
    %v1679 = vadd.f32 %v1624, %v1678
    %v1680 = vpop.f32.mrb[0].mxu0
    %1681 = vdwg.mxu0
    %v1683 = vcombine.high %v1676, %v1676
    %v1685 = vunpack.c.l.s4 1966171168
    %v1686 = vunpack.c.0.s8 %v1685
    %v1687 = vlaneseq
    %v1688 = vshrl.u32 %v1687, 7
    %v1689 = vsub.s32 %v1686, %v1688
    %v1690 = vrot.slane %v1676, %v1689
    %v1692 = vunpack.c.l.s4 1966171168
    %v1693 = vunpack.c.0.s8 %v1692
    %v1694 = vlaneseq
    %v1695 = vshrl.u32 %v1694, 7
    %v1696 = vsub.s32 %v1693, %v1695
    %v1697 = vrot.slane %v1683, %v1696
    %v1698 = vcombine.high %v1690, %v1690
    %v1699 = vcombine.high %v1697, %v1697
    %v1701 = vunpack.c.l.s4 1966171168
    %v1702 = vunpack.c.0.s8 %v1701
    %v1703 = vlaneseq
    %v1704 = vshrl.u32 %v1703, 7
    %v1705 = vsub.s32 %v1702, %v1704
    %v1706 = vrot.slane %v1690, %v1705
    %v1708 = vunpack.c.l.s4 1966171168
    %v1709 = vunpack.c.0.s8 %v1708
    %v1710 = vlaneseq
    %v1711 = vshrl.u32 %v1710, 7
    %v1712 = vsub.s32 %v1709, %v1711
    %v1713 = vrot.slane %v1697, %v1712
    %v1715 = vunpack.c.l.s4 1966171168
    %v1716 = vunpack.c.0.s8 %v1715
    %v1717 = vlaneseq
    %v1718 = vshrl.u32 %v1717, 7
    %v1719 = vsub.s32 %v1716, %v1718
    %v1720 = vrot.slane %v1698, %v1719
    %v1722 = vunpack.c.l.s4 1966171168
    %v1723 = vunpack.c.0.s8 %v1722
    %v1724 = vlaneseq
    %v1725 = vshrl.u32 %v1724, 7
    %v1726 = vsub.s32 %v1723, %v1725
    %v1727 = vrot.slane %v1699, %v1726
    %v1728 = vcombine.high %v1706, %v1706
    %v1729 = vcombine.high %v1713, %v1713
    %v1730 = vcombine.high %v1720, %v1720
    %v1731 = vcombine.high %v1727, %v1727
    %vm1740 = vcmask 253952
    %1741 = vst.msk [vmem:[#allocation14] sm:$0x1] %vm1740, %v1706
    %1742 = vst.msk [vmem:[#allocation14 + $0x2] sm:$0x1] %vm1740, %v1720
    %1743 = vst.msk [vmem:[#allocation14 + $0x4] sm:$0x1] %vm1740, %v1728
    %1744 = vst.msk [vmem:[#allocation14 + $0x6] sm:$0x1] %vm1740, %v1730
    %1745 = vst.msk [vmem:[#allocation14 + $0x8] sm:$0x1] %vm1740, %v1713
    %1746 = vst.msk [vmem:[#allocation14 + $0xa] sm:$0x1] %vm1740, %v1727
    %1747 = vst.msk [vmem:[#allocation14 + $0xc] sm:$0x1] %vm1740, %v1729
    %1748 = vst.msk [vmem:[#allocation14 + $0xe] sm:$0x1] %vm1740, %v1731
    %v1750 = vcombine.high %v1679, %v1679
    %v1752 = vunpack.c.l.s4 1966171168
    %v1753 = vunpack.c.0.s8 %v1752
    %v1754 = vlaneseq
    %v1755 = vshrl.u32 %v1754, 7
    %v1756 = vsub.s32 %v1753, %v1755
    %v1757 = vrot.slane %v1679, %v1756
    %v1759 = vunpack.c.l.s4 1966171168
    %v1760 = vunpack.c.0.s8 %v1759
    %v1761 = vlaneseq
    %v1762 = vshrl.u32 %v1761, 7
    %v1763 = vsub.s32 %v1760, %v1762
    %v1764 = vrot.slane %v1750, %v1763
    %v1765 = vcombine.high %v1757, %v1757
    %v1766 = vcombine.high %v1764, %v1764
    %v1768 = vunpack.c.l.s4 1966171168
    %v1769 = vunpack.c.0.s8 %v1768
    %v1770 = vlaneseq
    %v1771 = vshrl.u32 %v1770, 7
    %v1772 = vsub.s32 %v1769, %v1771
    %v1773 = vrot.slane %v1757, %v1772
    %v1775 = vunpack.c.l.s4 1966171168
    %v1776 = vunpack.c.0.s8 %v1775
    %v1777 = vlaneseq
    %v1778 = vshrl.u32 %v1777, 7
    %v1779 = vsub.s32 %v1776, %v1778
    %v1780 = vrot.slane %v1764, %v1779
    %v1782 = vunpack.c.l.s4 1966171168
    %v1783 = vunpack.c.0.s8 %v1782
    %v1784 = vlaneseq
    %v1785 = vshrl.u32 %v1784, 7
    %v1786 = vsub.s32 %v1783, %v1785
    %v1787 = vrot.slane %v1765, %v1786
    %v1789 = vunpack.c.l.s4 1966171168
    %v1790 = vunpack.c.0.s8 %v1789
    %v1791 = vlaneseq
    %v1792 = vshrl.u32 %v1791, 7
    %v1793 = vsub.s32 %v1790, %v1792
    %v1794 = vrot.slane %v1766, %v1793
    %v1795 = vcombine.high %v1773, %v1773
    %v1796 = vcombine.high %v1780, %v1780
    %v1797 = vcombine.high %v1787, %v1787
    %v1798 = vcombine.high %v1794, %v1794
    %1807 = vst.msk [vmem:[#allocation14 + $0x1] sm:$0x1] %vm1740, %v1773
    %1808 = vst.msk [vmem:[#allocation14 + $0x3] sm:$0x1] %vm1740, %v1787
    %1809 = vst.msk [vmem:[#allocation14 + $0x5] sm:$0x1] %vm1740, %v1795
    %1810 = vst.msk [vmem:[#allocation14 + $0x7] sm:$0x1] %vm1740, %v1797
    %1811 = vst.msk [vmem:[#allocation14 + $0x9] sm:$0x1] %vm1740, %v1780
    %1812 = vst.msk [vmem:[#allocation14 + $0xb] sm:$0x1] %vm1740, %v1794
    %1813 = vst.msk [vmem:[#allocation14 + $0xd] sm:$0x1] %vm1740, %v1796
    %1814 = vst.msk [vmem:[#allocation14 + $0xf] sm:$0x1] %vm1740, %v1798
    // Predicated region
    $region70: #{tpu_custom_call.1} parent=1 // pred_check
      _
    $region71: #{tpu_custom_call.1} parent=1 // pred_check_branch
      %1816 = sbr.rel (0) target = $region73
    $region72: #{tpu_custom_call.1} parent=1 // pred_region
      %s1818 = ssub.s32 256, 256
      %1819 = vsyncadd [#allocation5], %s1818
      %s1820 = sshll.u32 [#allocation14], 4
      %s1821 = int_to_ptr.vmem [resolvable:$true] %s1820
      %1826 = dma.vmem_to_hbm [thread:$0]  %s1821, 256, %s11, [#allocation5], 32, 32, 2
    $region73: #{tpu_custom_call.1} parent=1 // pred_fallthru
      _
    // Predicated region
    $region74: #{tpu_custom_call.1} parent=1 // pred_check
      _
    $region75: #{tpu_custom_call.1} parent=1 // pred_check_branch
      %1828 = sbr.rel (0) target = $region77
    $region76: #{tpu_custom_call.1} parent=1 // pred_region
      %1829 = dma.done [#allocation5], 256
    $region77: #{tpu_custom_call.1} parent=1 // pred_fallthru
      _
    %1830 = vsyncpa [#allocation4], 1
    %1831 = vsyncpa [#allocation7], 1
    %1832 = vsyncpa [#allocation10], 1
    %1833 = vsyncpa [#allocation13], 1
    %1834 = vsyncpa [#allocation5], 1

// kernel: tpu_custom_call.1
$region0: #{tpu_custom_call.1}
  #allocation0 [shape = 'u32[]', space=smem, size = 0x4, offset = 0x4, fixed_abs, tag = 'smem constant byte address 0x4 - core index']
  #allocation1 [shape = 'u32[144,128]{1,0:T(1,128)}', space=vmem, size = 0x12000, scoped, tag = 'internal scratch']
  #allocation2 [shape = 'bf16[16,32]{1,0:T(16,128)(2,1)}', space=vmem, size = 0x1000, scoped, tag = 'scratch operand']
  %s0 = inlined_call_operand.hbm [shape: f32[8,2,32], index: 0, kind: input, shape index: {}]
  %s1 = inlined_call_operand.hbm [shape: f32[16,2,32], index: 1, kind: input, shape index: {}]
  %s2 = inlined_call_operand.hbm [shape: f32[16,2,32], index: 2, kind: input, shape index: {}]
  %s3 = inlined_call_operand.hbm [shape: bf16[32,32], index: 3, kind: input, shape index: {}]
  %s4 = inlined_call_operand.hbm [shape: bf16[32,32], index: 4, kind: input, shape index: {}]
  %s5 = inlined_call_operand.vmem [shape: bf16[32,32], index: 5, kind: input, shape index: {}]
  %s6 = inlined_call_operand.vmem [shape: f32[1,32], index: 6, kind: input, shape index: {}]
  %s7 = inlined_call_operand.vmem [shape: f32[1,32], index: 7, kind: input, shape index: {}]
  %s8 = inlined_call_operand.hbm [shape: f32[1,32], index: 8, kind: input, shape index: {}]
  %s9 = inlined_call_operand.vmem [shape: bf16[32,32], index: 9, kind: input, shape index: {}]
  %s10 = inlined_call_operand.vmem [shape: f32[1,32], index: 10, kind: input, shape index: {}]
  %s11 = inlined_call_operand.hbm [shape: f32[8,2,32], index: 11, kind: output, shape index: {}]
  %s12 = sld [smem:[#allocation0]]
  $region78: #{tpu_custom_call.1} parent=0
    _
  %s14 = ssub.s32 1, %s12
  %s15 = scalar_select 0, %s14, %s12
  $region1: #{tpu_custom_call.1} parent=0
    #allocation3 [shape = 'u8[8192]{0}', space=vmem, size = 0x2000, scoped, tag = 'input window, operand 0, single buffered']
    #allocation4 [shape = 's32[1]{0}', space=sflag, size = 0x4, scoped, tag = 'scoped memory for tpu_custom_call.1']
    #allocation5 [shape = 's32[1]{0}', space=sflag, size = 0x4, scoped, tag = 'scoped memory for tpu_custom_call.1']
    #allocation6 [shape = 'u8[16384]{0}', space=vmem, size = 0x4000, scoped, tag = 'input window, operand 1, single buffered']
    #allocation7 [shape = 's32[1]{0}', space=sflag, size = 0x4, scoped, tag = 'scoped memory for tpu_custom_call.1']
    #allocation8 [shape = 'u8[16384]{0}', space=vmem, size = 0x4000, scoped, tag = 'input window, operand 2, single buffered']
    #allocation9 [shape = 'u8[8192]{0}', space=vmem, size = 0x2000, scoped, tag = 'input window, operand 3, single buffered']
    #allocation10 [shape = 's32[1]{0}', space=sflag, size = 0x4, scoped, tag = 'scoped memory for tpu_custom_call.1']
    #allocation11 [shape = 'u8[8192]{0}', space=vmem, size = 0x2000, scoped, tag = 'input window, operand 4, single buffered']
    #allocation12 [shape = 'u8[512]{0}', space=vmem, size = 0x400, scoped, tag = 'input window, operand 8, single buffered']
    #allocation13 [shape = 's32[1]{0}', space=sflag, size = 0x4, scoped, tag = 'scoped memory for tpu_custom_call.1']
    #allocation14 [shape = 'u8[8192]{0}', space=vmem, size = 0x2000, scoped, tag = 'output window, operand 0, single buffered']
    %16 = vsyncpa [#allocation4], 0
    %17 = vsyncpa [#allocation7], 0
    %18 = vsyncpa [#allocation10], 0
    %19 = vsyncpa [#allocation13], 0
    %20 = vsyncpa [#allocation5], 0
    // Predicated region
    $region2: #{tpu_custom_call.1} parent=1 // pred_check
      _
    $region3: #{tpu_custom_call.1} parent=1 // pred_check_branch
      %22 = sbr.rel (0) target = $region5
    $region4: #{tpu_custom_call.1} parent=1 // pred_region
      %s24 = ssub.s32 256, 256
      %25 = vsyncadd [#allocation4], %s24
      %s26 = sshll.u32 [#allocation3], 4
      %s27 = int_to_ptr.vmem [resolvable:$true] %s26
      %32 = dma.hbm_to_vmem [thread:$0]  %s0, 256, %s27, [#allocation4], 32, 32, 2
    $region5: #{tpu_custom_call.1} parent=1 // pred_fallthru
      _
    // Predicated region
    $region6: #{tpu_custom_call.1} parent=1 // pred_check
      _
    $region7: #{tpu_custom_call.1} parent=1 // pred_check_branch
      %34 = sbr.rel (0) target = $region9
    $region8: #{tpu_custom_call.1} parent=1 // pred_region
      %s36 = ssub.s32 512, 512
      %37 = vsyncadd [#allocation7], %s36
      %s38 = sshll.u32 [#allocation6], 4
      %s39 = int_to_ptr.vmem [resolvable:$true] %s38
      %44 = dma.hbm_to_vmem [thread:$0]  %s1, 512, %s39, [#allocation7], 32, 32, 2
    $region9: #{tpu_custom_call.1} parent=1 // pred_fallthru
      _
    // Predicated region
    $region10: #{tpu_custom_call.1} parent=1 // pred_check
      _
    $region11: #{tpu_custom_call.1} parent=1 // pred_check_branch
      %46 = sbr.rel (0) target = $region13
    $region12: #{tpu_custom_call.1} parent=1 // pred_region
      %s48 = ssub.s32 512, 512
      %49 = vsyncadd [#allocation7], %s48
      %s50 = sshll.u32 [#allocation8], 4
      %s51 = int_to_ptr.vmem [resolvable:$true] %s50
      %56 = dma.hbm_to_vmem [thread:$0]  %s2, 512, %s51, [#allocation7], 32, 32, 2
    $region13: #{tpu_custom_call.1} parent=1 // pred_fallthru
      _
    // Predicated region
    $region14: #{tpu_custom_call.1} parent=1 // pred_check
      _
    $region15: #{tpu_custom_call.1} parent=1 // pred_check_branch
      %58 = sbr.rel (0) target = $region17
    $region16: #{tpu_custom_call.1} parent=1 // pred_region
      %s60 = ssub.s32 256, 256
      %61 = vsyncadd [#allocation10], %s60
      %s62 = sshll.u32 [#allocation9], 4
      %s63 = int_to_ptr.vmem [resolvable:$true] %s62
      %68 = dma.hbm_to_vmem [thread:$0]  %s3, 256, %s63, [#allocation10], 64, 64, 4
    $region17: #{tpu_custom_call.1} parent=1 // pred_fallthru
      _
    // Predicated region
    $region18: #{tpu_custom_call.1} parent=1 // pred_check
      _
    $region19: #{tpu_custom_call.1} parent=1 // pred_check_branch
      %70 = sbr.rel (0) target = $region21
    $region20: #{tpu_custom_call.1} parent=1 // pred_region
      %s72 = ssub.s32 256, 256
      %73 = vsyncadd [#allocation10], %s72
      %s74 = sshll.u32 [#allocation11], 4
      %s75 = int_to_ptr.vmem [resolvable:$true] %s74
      %80 = dma.hbm_to_vmem [thread:$0]  %s4, 256, %s75, [#allocation10], 64, 64, 4
    $region21: #{tpu_custom_call.1} parent=1 // pred_fallthru
      _
    // Predicated region
    $region22: #{tpu_custom_call.1} parent=1 // pred_check
      _
    $region23: #{tpu_custom_call.1} parent=1 // pred_check_branch
      %82 = sbr.rel (0) target = $region25
    $region24: #{tpu_custom_call.1} parent=1 // pred_region
      _
    $region25: #{tpu_custom_call.1} parent=1 // pred_fallthru
      _
    // Predicated region
    $region26: #{tpu_custom_call.1} parent=1 // pred_check
      _
    $region27: #{tpu_custom_call.1} parent=1 // pred_check_branch
      %84 = sbr.rel (0) target = $region29
    $region28: #{tpu_custom_call.1} parent=1 // pred_region
      _
    $region29: #{tpu_custom_call.1} parent=1 // pred_fallthru
      _
    // Predicated region
    $region30: #{tpu_custom_call.1} parent=1 // pred_check
      _
    $region31: #{tpu_custom_call.1} parent=1 // pred_check_branch
      %86 = sbr.rel (0) target = $region33
    $region32: #{tpu_custom_call.1} parent=1 // pred_region
      _
    $region33: #{tpu_custom_call.1} parent=1 // pred_fallthru
      _
    // Predicated region
    $region34: #{tpu_custom_call.1} parent=1 // pred_check
      _
    $region35: #{tpu_custom_call.1} parent=1 // pred_check_branch
      %88 = sbr.rel (0) target = $region37
    $region36: #{tpu_custom_call.1} parent=1 // pred_region
      %s90 = ssub.s32 16, 16
      %91 = vsyncadd [#allocation13], %s90
      %s93 = sshll.u32 [#allocation12], 4
      %s94 = int_to_ptr.vmem [resolvable:$true] %s93
      %96 = dma.hbm_to_vmem [thread:$0]  %s8, 16, %s94, [#allocation13]
    $region37: #{tpu_custom_call.1} parent=1 // pred_fallthru
      _
    // Predicated region
    $region38: #{tpu_custom_call.1} parent=1 // pred_check
      _
    $region39: #{tpu_custom_call.1} parent=1 // pred_check_branch
      %98 = sbr.rel (0) target = $region41
    $region40: #{tpu_custom_call.1} parent=1 // pred_region
      _
    $region41: #{tpu_custom_call.1} parent=1 // pred_fallthru
      _
    // Predicated region
    $region42: #{tpu_custom_call.1} parent=1 // pred_check
      _
    $region43: #{tpu_custom_call.1} parent=1 // pred_check_branch
      %100 = sbr.rel (0) target = $region45
    $region44: #{tpu_custom_call.1} parent=1 // pred_region
      _
    $region45: #{tpu_custom_call.1} parent=1 // pred_fallthru
      _
    // Predicated region
    $region46: #{tpu_custom_call.1} parent=1 // pred_check
      _
    $region47: #{tpu_custom_call.1} parent=1 // pred_check_branch
      %102 = sbr.rel (0) target = $region49
    $region48: #{tpu_custom_call.1} parent=1 // pred_region
      %103 = dma.done [#allocation4], 256
    $region49: #{tpu_custom_call.1} parent=1 // pred_fallthru
      _
    // Predicated region
    $region50: #{tpu_custom_call.1} parent=1 // pred_check
      _
    $region51: #{tpu_custom_call.1} parent=1 // pred_check_branch
      %105 = sbr.rel (0) target = $region53
    $region52: #{tpu_custom_call.1} parent=1 // pred_region
      %106 = dma.done [#allocation7], 512
    $region53: #{tpu_custom_call.1} parent=1 // pred_fallthru
      _
    // Predicated region
    $region54: #{tpu_custom_call.1} parent=1 // pred_check
      _
    $region55: #{tpu_custom_call.1} parent=1 // pred_check_branch
      %108 = sbr.rel (0) target = $region57
    $region56: #{tpu_custom_call.1} parent=1 // pred_region
      %109 = dma.done [#allocation7], 512
    $region57: #{tpu_custom_call.1} parent=1 // pred_fallthru
      _
    // Predicated region
    $region58: #{tpu_custom_call.1} parent=1 // pred_check
      _
    $region59: #{tpu_custom_call.1} parent=1 // pred_check_branch
      %111 = sbr.rel (0) target = $region61
    $region60: #{tpu_custom_call.1} parent=1 // pred_region
      %112 = dma.done [#allocation10], 256
    $region61: #{tpu_custom_call.1} parent=1 // pred_fallthru
      _
    // Predicated region
    $region62: #{tpu_custom_call.1} parent=1 // pred_check
      _
    $region63: #{tpu_custom_call.1} parent=1 // pred_check_branch
      %114 = sbr.rel (0) target = $region65
    $region64: #{tpu_custom_call.1} parent=1 // pred_region
      %115 = dma.done [#allocation10], 256
    $region65: #{tpu_custom_call.1} parent=1 // pred_fallthru
      _
    // Predicated region
    $region66: #{tpu_custom_call.1} parent=1 // pred_check
      _
    $region67: #{tpu_custom_call.1} parent=1 // pred_check_branch
      %117 = sbr.rel (0) target = $region69
    $region68: #{tpu_custom_call.1} parent=1 // pred_region
      %118 = dma.done [#allocation13], 16
    $region69: #{tpu_custom_call.1} parent=1 // pred_fallthru
      _
    %v120 = vld [vmem:[#allocation3] sm:$0x1]
    %v121 = vld [vmem:[#allocation3 + $0x2] sm:$0x1]
    %v122 = vld [vmem:[#allocation3 + $0x4] sm:$0x1]
    %v123 = vld [vmem:[#allocation3 + $0x6] sm:$0x1]
    %v124 = vld [vmem:[#allocation3 + $0x8] sm:$0x1]
    %v125 = vld [vmem:[#allocation3 + $0xa] sm:$0x1]
    %v126 = vld [vmem:[#allocation3 + $0xc] sm:$0x1]
    %v127 = vld [vmem:[#allocation3 + $0xe] sm:$0x1]
    %v128 = vld [vmem:[#allocation3 + $0x1] sm:$0x1]
    %v129 = vld [vmem:[#allocation3 + $0x3] sm:$0x1]
    %v130 = vld [vmem:[#allocation3 + $0x5] sm:$0x1]
    %v131 = vld [vmem:[#allocation3 + $0x7] sm:$0x1]
    %v132 = vld [vmem:[#allocation3 + $0x9] sm:$0x1]
    %v133 = vld [vmem:[#allocation3 + $0xb] sm:$0x1]
    %v134 = vld [vmem:[#allocation3 + $0xd] sm:$0x1]
    %v135 = vld [vmem:[#allocation3 + $0xf] sm:$0x1]
    %v144 = vrot.slane %v121, 7
    %vm145 = vcmask 1041409
    %v146 = vsel %vm145, %v144, %v120
    %v147 = vrot.slane %v122, 6
    %vm148 = vcmask 1042434
    %v149 = vsel %vm148, %v147, %v146
    %v150 = vrot.slane %v123, 5
    %vm151 = vcmask 1043459
    %v152 = vsel %vm151, %v150, %v149
    %v153 = vrot.slane %v124, 4
    %vm154 = vcmask 1044484
    %v155 = vsel %vm154, %v153, %v152
    %v156 = vrot.slane %v125, 3
    %vm157 = vcmask 1045509
    %v158 = vsel %vm157, %v156, %v155
    %v159 = vrot.slane %v126, 2
    %vm160 = vcmask 1046534
    %v161 = vsel %vm160, %v159, %v158
    %v162 = vrot.slane %v127, 1
    %vm163 = vcmask 1047559
    %v164 = vsel %vm163, %v162, %v161
    %v174 = vrot.slane %v129, 7
    %v175 = vsel %vm145, %v174, %v128
    %v176 = vrot.slane %v130, 6
    %v177 = vsel %vm148, %v176, %v175
    %v178 = vrot.slane %v131, 5
    %v179 = vsel %vm151, %v178, %v177
    %v180 = vrot.slane %v132, 4
    %v181 = vsel %vm154, %v180, %v179
    %v182 = vrot.slane %v133, 3
    %v183 = vsel %vm157, %v182, %v181
    %v184 = vrot.slane %v134, 2
    %v185 = vsel %vm160, %v184, %v183
    %v186 = vrot.slane %v135, 1
    %v187 = vsel %vm163, %v186, %v185
    %v189 = vpack.c.bf16 %v187, %v164
    %v190 = vld [vmem:[#allocation6] sm:$0x1]
    %v191 = vld [vmem:[#allocation6 + $0x2] sm:$0x1]
    %v192 = vld [vmem:[#allocation6 + $0x4] sm:$0x1]
    %v193 = vld [vmem:[#allocation6 + $0x6] sm:$0x1]
    %v194 = vld [vmem:[#allocation6 + $0x8] sm:$0x1]
    %v195 = vld [vmem:[#allocation6 + $0xa] sm:$0x1]
    %v196 = vld [vmem:[#allocation6 + $0xc] sm:$0x1]
    %v197 = vld [vmem:[#allocation6 + $0xe] sm:$0x1]
    %v198 = vld [vmem:[#allocation6 + $0x10] sm:$0x1]
    %v199 = vld [vmem:[#allocation6 + $0x12] sm:$0x1]
    %v200 = vld [vmem:[#allocation6 + $0x14] sm:$0x1]
    %v201 = vld [vmem:[#allocation6 + $0x16] sm:$0x1]
    %v202 = vld [vmem:[#allocation6 + $0x18] sm:$0x1]
    %v203 = vld [vmem:[#allocation6 + $0x1a] sm:$0x1]
    %v204 = vld [vmem:[#allocation6 + $0x1c] sm:$0x1]
    %v205 = vld [vmem:[#allocation6 + $0x1e] sm:$0x1]
    %v206 = vld [vmem:[#allocation6 + $0x1] sm:$0x1]
    %v207 = vld [vmem:[#allocation6 + $0x3] sm:$0x1]
    %v208 = vld [vmem:[#allocation6 + $0x5] sm:$0x1]
    %v209 = vld [vmem:[#allocation6 + $0x7] sm:$0x1]
    %v210 = vld [vmem:[#allocation6 + $0x9] sm:$0x1]
    %v211 = vld [vmem:[#allocation6 + $0xb] sm:$0x1]
    %v212 = vld [vmem:[#allocation6 + $0xd] sm:$0x1]
    %v213 = vld [vmem:[#allocation6 + $0xf] sm:$0x1]
    %v214 = vld [vmem:[#allocation6 + $0x11] sm:$0x1]
    %v215 = vld [vmem:[#allocation6 + $0x13] sm:$0x1]
    %v216 = vld [vmem:[#allocation6 + $0x15] sm:$0x1]
    %v217 = vld [vmem:[#allocation6 + $0x17] sm:$0x1]
    %v218 = vld [vmem:[#allocation6 + $0x19] sm:$0x1]
    %v219 = vld [vmem:[#allocation6 + $0x1b] sm:$0x1]
    %v220 = vld [vmem:[#allocation6 + $0x1d] sm:$0x1]
    %v221 = vld [vmem:[#allocation6 + $0x1f] sm:$0x1]
    %v238 = vrot.slane %v191, 7
    %v239 = vsel %vm145, %v238, %v190
    %v240 = vrot.slane %v192, 6
    %v241 = vsel %vm148, %v240, %v239
    %v242 = vrot.slane %v193, 5
    %v243 = vsel %vm151, %v242, %v241
    %v244 = vrot.slane %v194, 4
    %v245 = vsel %vm154, %v244, %v243
    %v246 = vrot.slane %v195, 3
    %v247 = vsel %vm157, %v246, %v245
    %v248 = vrot.slane %v196, 2
    %v249 = vsel %vm160, %v248, %v247
    %v250 = vrot.slane %v197, 1
    %v251 = vsel %vm163, %v250, %v249
    %v252 = vrot.slane %v199, 7
    %v253 = vsel %vm145, %v252, %v198
    %v254 = vrot.slane %v200, 6
    %v255 = vsel %vm148, %v254, %v253
    %v256 = vrot.slane %v201, 5
    %v257 = vsel %vm151, %v256, %v255
    %v258 = vrot.slane %v202, 4
    %v259 = vsel %vm154, %v258, %v257
    %v260 = vrot.slane %v203, 3
    %v261 = vsel %vm157, %v260, %v259
    %v262 = vrot.slane %v204, 2
    %v263 = vsel %vm160, %v262, %v261
    %v264 = vrot.slane %v205, 1
    %v265 = vsel %vm163, %v264, %v263
    %v284 = vrot.slane %v207, 7
    %v285 = vsel %vm145, %v284, %v206
    %v286 = vrot.slane %v208, 6
    %v287 = vsel %vm148, %v286, %v285
    %v288 = vrot.slane %v209, 5
    %v289 = vsel %vm151, %v288, %v287
    %v290 = vrot.slane %v210, 4
    %v291 = vsel %vm154, %v290, %v289
    %v292 = vrot.slane %v211, 3
    %v293 = vsel %vm157, %v292, %v291
    %v294 = vrot.slane %v212, 2
    %v295 = vsel %vm160, %v294, %v293
    %v296 = vrot.slane %v213, 1
    %v297 = vsel %vm163, %v296, %v295
    %v298 = vrot.slane %v215, 7
    %v299 = vsel %vm145, %v298, %v214
    %v300 = vrot.slane %v216, 6
    %v301 = vsel %vm148, %v300, %v299
    %v302 = vrot.slane %v217, 5
    %v303 = vsel %vm151, %v302, %v301
    %v304 = vrot.slane %v218, 4
    %v305 = vsel %vm154, %v304, %v303
    %v306 = vrot.slane %v219, 3
    %v307 = vsel %vm157, %v306, %v305
    %v308 = vrot.slane %v220, 2
    %v309 = vsel %vm160, %v308, %v307
    %v310 = vrot.slane %v221, 1
    %v311 = vsel %vm163, %v310, %v309
    %v314 = vpack.c.bf16 %v265, %v251
    %v315 = vpack.c.bf16 %v311, %v297
    %v316 = vld [vmem:[#allocation8] sm:$0x1]
    %v317 = vld [vmem:[#allocation8 + $0x2] sm:$0x1]
    %v318 = vld [vmem:[#allocation8 + $0x4] sm:$0x1]
    %v319 = vld [vmem:[#allocation8 + $0x6] sm:$0x1]
    %v320 = vld [vmem:[#allocation8 + $0x8] sm:$0x1]
    %v321 = vld [vmem:[#allocation8 + $0xa] sm:$0x1]
    %v322 = vld [vmem:[#allocation8 + $0xc] sm:$0x1]
    %v323 = vld [vmem:[#allocation8 + $0xe] sm:$0x1]
    %v324 = vld [vmem:[#allocation8 + $0x10] sm:$0x1]
    %v325 = vld [vmem:[#allocation8 + $0x12] sm:$0x1]
    %v326 = vld [vmem:[#allocation8 + $0x14] sm:$0x1]
    %v327 = vld [vmem:[#allocation8 + $0x16] sm:$0x1]
    %v328 = vld [vmem:[#allocation8 + $0x18] sm:$0x1]
    %v329 = vld [vmem:[#allocation8 + $0x1a] sm:$0x1]
    %v330 = vld [vmem:[#allocation8 + $0x1c] sm:$0x1]
    %v331 = vld [vmem:[#allocation8 + $0x1e] sm:$0x1]
    %v332 = vld [vmem:[#allocation8 + $0x1] sm:$0x1]
    %v333 = vld [vmem:[#allocation8 + $0x3] sm:$0x1]
    %v334 = vld [vmem:[#allocation8 + $0x5] sm:$0x1]
    %v335 = vld [vmem:[#allocation8 + $0x7] sm:$0x1]
    %v336 = vld [vmem:[#allocation8 + $0x9] sm:$0x1]
    %v337 = vld [vmem:[#allocation8 + $0xb] sm:$0x1]
    %v338 = vld [vmem:[#allocation8 + $0xd] sm:$0x1]
    %v339 = vld [vmem:[#allocation8 + $0xf] sm:$0x1]
    %v340 = vld [vmem:[#allocation8 + $0x11] sm:$0x1]
    %v341 = vld [vmem:[#allocation8 + $0x13] sm:$0x1]
    %v342 = vld [vmem:[#allocation8 + $0x15] sm:$0x1]
    %v343 = vld [vmem:[#allocation8 + $0x17] sm:$0x1]
    %v344 = vld [vmem:[#allocation8 + $0x19] sm:$0x1]
    %v345 = vld [vmem:[#allocation8 + $0x1b] sm:$0x1]
    %v346 = vld [vmem:[#allocation8 + $0x1d] sm:$0x1]
    %v347 = vld [vmem:[#allocation8 + $0x1f] sm:$0x1]
    %v364 = vrot.slane %v317, 7
    %v365 = vsel %vm145, %v364, %v316
    %v366 = vrot.slane %v318, 6
    %v367 = vsel %vm148, %v366, %v365
    %v368 = vrot.slane %v319, 5
    %v369 = vsel %vm151, %v368, %v367
    %v370 = vrot.slane %v320, 4
    %v371 = vsel %vm154, %v370, %v369
    %v372 = vrot.slane %v321, 3
    %v373 = vsel %vm157, %v372, %v371
    %v374 = vrot.slane %v322, 2
    %v375 = vsel %vm160, %v374, %v373
    %v376 = vrot.slane %v323, 1
    %v377 = vsel %vm163, %v376, %v375
    %v378 = vrot.slane %v325, 7
    %v379 = vsel %vm145, %v378, %v324
    %v380 = vrot.slane %v326, 6
    %v381 = vsel %vm148, %v380, %v379
    %v382 = vrot.slane %v327, 5
    %v383 = vsel %vm151, %v382, %v381
    %v384 = vrot.slane %v328, 4
    %v385 = vsel %vm154, %v384, %v383
    %v386 = vrot.slane %v329, 3
    %v387 = vsel %vm157, %v386, %v385
    %v388 = vrot.slane %v330, 2
    %v389 = vsel %vm160, %v388, %v387
    %v390 = vrot.slane %v331, 1
    %v391 = vsel %vm163, %v390, %v389
    %v410 = vrot.slane %v333, 7
    %v411 = vsel %vm145, %v410, %v332
    %v412 = vrot.slane %v334, 6
    %v413 = vsel %vm148, %v412, %v411
    %v414 = vrot.slane %v335, 5
    %v415 = vsel %vm151, %v414, %v413
    %v416 = vrot.slane %v336, 4
    %v417 = vsel %vm154, %v416, %v415
    %v418 = vrot.slane %v337, 3
    %v419 = vsel %vm157, %v418, %v417
    %v420 = vrot.slane %v338, 2
    %v421 = vsel %vm160, %v420, %v419
    %v422 = vrot.slane %v339, 1
    %v423 = vsel %vm163, %v422, %v421
    %v424 = vrot.slane %v341, 7
    %v425 = vsel %vm145, %v424, %v340
    %v426 = vrot.slane %v342, 6
    %v427 = vsel %vm148, %v426, %v425
    %v428 = vrot.slane %v343, 5
    %v429 = vsel %vm151, %v428, %v427
    %v430 = vrot.slane %v344, 4
    %v431 = vsel %vm154, %v430, %v429
    %v432 = vrot.slane %v345, 3
    %v433 = vsel %vm157, %v432, %v431
    %v434 = vrot.slane %v346, 2
    %v435 = vsel %vm160, %v434, %v433
    %v436 = vrot.slane %v347, 1
    %v437 = vsel %vm163, %v436, %v435
    %v440 = vpack.c.bf16 %v391, %v377
    %v441 = vpack.c.bf16 %v437, %v423
    %v442 = vld [vmem:[#allocation9] sm:$0xf]
    %v443 = vld [vmem:[#allocation9 + $0x4] sm:$0xf]
    %v444 = vld [vmem:[#allocation9 + $0x8] sm:$0xf]
    %v445 = vld [vmem:[#allocation9 + $0xc] sm:$0xf]
    %v446 = vld [vmem:[%s6] sm:$0x1]
    %v448 = vlaneseq
    %v449 = vshrl.u32 %v448, 7
    %v450 = vsub.s32 0, %v449
    %v451 = vrot.slane %v446, %v450
    %v457 = vunpack.c.l.b16 %v442
    %v458 = vunpack.c.l.b16 %v443
    %v459 = vunpack.c.l.b16 %v444
    %v460 = vunpack.c.l.b16 %v445
    %v461 = vpack.c.b16 %v458, %v457
    %v462 = vpack.c.b16 %v460, %v459
    %vm465 = vcmask 261120
    %v467 = vsel %vm465, %v189, 0
    %469 = vmatprep.subr.bf16.mxu0 0
    %470 = vmatpush1.bf16.msra.mxu0 %v461
    %471 = vmatprep.subr.bf16.mxu0 0
    %472 = vmatpush1.bf16.msra.mxu0 %v462
    %473 = vmatprep.subr.bf16.mxu0 0
    %474 = vmatpush1.bf16.msra.mxu0 0
    %475 = vmatprep.subr.bf16.mxu0 0
    %476 = vmatpush1.bf16.msra.mxu0 0
    %477 = vmatprep.subr.bf16.mxu0 0
    %478 = vmatpush1.bf16.msra.mxu0 0
    %479 = vmatprep.subr.bf16.mxu0 0
    %480 = vmatpush1.bf16.msra.mxu0 0
    %481 = vmatprep.subr.bf16.mxu0 0
    %482 = vmatpush1.bf16.msra.mxu0 0
    %483 = vmatprep.subr.bf16.mxu0 0
    %484 = vmatpush1.bf16.msra.mxu0 0
    %485 = vmatprep.subr.bf16.mxu0 0
    %486 = vmatpush1.bf16.msra.mxu0 0
    %487 = vmatprep.subr.bf16.mxu0 0
    %488 = vmatpush1.bf16.msra.mxu0 0
    %489 = vmatprep.subr.bf16.mxu0 0
    %490 = vmatpush1.bf16.msra.mxu0 0
    %491 = vmatprep.subr.bf16.mxu0 0
    %492 = vmatpush1.bf16.msra.mxu0 0
    %493 = vmatprep.subr.bf16.mxu0 0
    %494 = vmatpush1.bf16.msra.mxu0 0
    %495 = vmatprep.subr.bf16.mxu0 0
    %496 = vmatpush1.bf16.msra.mxu0 0
    %497 = vmatprep.subr.bf16.mxu0 0
    %498 = vmatpush1.bf16.msra.mxu0 0
    %499 = vmatprep.subr.bf16.mxu0 0
    %500 = vmatpush1.bf16.msra.mxu0 0
    %501 = vmatprep.mubr.bf16.mxu0 0
    %502 = vmatmul.mubr.bf16.gmra.mrb[0].mxu0 %v467
    %v503 = vpop.f32.mrb[0].mxu0
    %v504 = vadd.f32 %v451, %v503
    %v505 = vpop.f32.mrb[0].mxu0
    %v506 = vpop.f32.mrb[0].mxu0
    %v507 = vadd.f32 %v451, %v506
    %v508 = vpop.f32.mrb[0].mxu0
    %509 = vdwg.mxu0
    %v510 = vpack.c.bf16 %v507, %v504
    %v511 = vld [vmem:[#allocation11] sm:$0xf]
    %v512 = vld [vmem:[#allocation11 + $0x4] sm:$0xf]
    %v513 = vld [vmem:[#allocation11 + $0x8] sm:$0xf]
    %v514 = vld [vmem:[#allocation11 + $0xc] sm:$0xf]
    %v515 = vld [vmem:[%s7] sm:$0x1]
    %v517 = vlaneseq
    %v518 = vshrl.u32 %v517, 7
    %v519 = vsub.s32 0, %v518
    %v520 = vrot.slane %v515, %v519
    %v526 = vunpack.c.l.b16 %v511
    %v527 = vunpack.c.l.b16 %v512
    %v528 = vunpack.c.l.b16 %v513
    %v529 = vunpack.c.l.b16 %v514
    %v530 = vpack.c.b16 %v527, %v526
    %v531 = vpack.c.b16 %v529, %v528
    %v535 = vsel %vm465, %v314, 0
    %v538 = vsel %vm465, %v315, 0
    %540 = vmatprep.subr.bf16.mxu0 0
    %541 = vmatpush1.bf16.msra.mxu0 %v530
    %542 = vmatprep.subr.bf16.mxu0 0
    %543 = vmatpush1.bf16.msra.mxu0 %v531
    %544 = vmatprep.subr.bf16.mxu0 0
    %545 = vmatpush1.bf16.msra.mxu0 0
    %546 = vmatprep.subr.bf16.mxu0 0
    %547 = vmatpush1.bf16.msra.mxu0 0
    %548 = vmatprep.subr.bf16.mxu0 0
    %549 = vmatpush1.bf16.msra.mxu0 0
    %550 = vmatprep.subr.bf16.mxu0 0
    %551 = vmatpush1.bf16.msra.mxu0 0
    %552 = vmatprep.subr.bf16.mxu0 0
    %553 = vmatpush1.bf16.msra.mxu0 0
    %554 = vmatprep.subr.bf16.mxu0 0
    %555 = vmatpush1.bf16.msra.mxu0 0
    %556 = vmatprep.subr.bf16.mxu0 0
    %557 = vmatpush1.bf16.msra.mxu0 0
    %558 = vmatprep.subr.bf16.mxu0 0
    %559 = vmatpush1.bf16.msra.mxu0 0
    %560 = vmatprep.subr.bf16.mxu0 0
    %561 = vmatpush1.bf16.msra.mxu0 0
    %562 = vmatprep.subr.bf16.mxu0 0
    %563 = vmatpush1.bf16.msra.mxu0 0
    %564 = vmatprep.subr.bf16.mxu0 0
    %565 = vmatpush1.bf16.msra.mxu0 0
    %566 = vmatprep.subr.bf16.mxu0 0
    %567 = vmatpush1.bf16.msra.mxu0 0
    %568 = vmatprep.subr.bf16.mxu0 0
    %569 = vmatpush1.bf16.msra.mxu0 0
    %570 = vmatprep.subr.bf16.mxu0 0
    %571 = vmatpush1.bf16.msra.mxu0 0
    %572 = vmatprep.mubr.bf16.mxu0 0
    %573 = vmatmul.mubr.bf16.gmra.mrb[0].mxu0 %v535
    %v574 = vpop.f32.mrb[0].mxu0
    %v575 = vadd.f32 %v520, %v574
    %v576 = vpop.f32.mrb[0].mxu0
    %v577 = vpop.f32.mrb[0].mxu0
    %v578 = vadd.f32 %v520, %v577
    %v579 = vpop.f32.mrb[0].mxu0
    %580 = vmatprep.mubr.bf16.mxu0 0
    %581 = vmatmul.mubr.bf16.gmra.mrb[0].mxu0 %v538
    %v582 = vpop.f32.mrb[0].mxu0
    %v583 = vadd.f32 %v520, %v582
    %v584 = vpop.f32.mrb[0].mxu0
    %v585 = vpop.f32.mrb[0].mxu0
    %v586 = vadd.f32 %v520, %v585
    %v587 = vpop.f32.mrb[0].mxu0
    %588 = vdwg.mxu0
    %v589 = vld [vmem:[%s5] sm:$0xf]
    %v590 = vld [vmem:[%s5 + $0x4] sm:$0xf]
    %v591 = vld [vmem:[%s5 + $0x8] sm:$0xf]
    %v592 = vld [vmem:[%s5 + $0xc] sm:$0xf]
    %v593 = vld [vmem:[#allocation12] sm:$0x1]
    %v595 = vlaneseq
    %v596 = vshrl.u32 %v595, 7
    %v597 = vsub.s32 0, %v596
    %v598 = vrot.slane %v593, %v597
    %v604 = vunpack.c.l.b16 %v589
    %v605 = vunpack.c.l.b16 %v590
    %v606 = vunpack.c.l.b16 %v591
    %v607 = vunpack.c.l.b16 %v592
    %v608 = vpack.c.b16 %v605, %v604
    %v609 = vpack.c.b16 %v607, %v606
    %v613 = vsel %vm465, %v440, 0
    %v616 = vsel %vm465, %v441, 0
    %618 = vmatprep.subr.bf16.mxu0 0
    %619 = vmatpush1.bf16.msra.mxu0 %v608
    %620 = vmatprep.subr.bf16.mxu0 0
    %621 = vmatpush1.bf16.msra.mxu0 %v609
    %622 = vmatprep.subr.bf16.mxu0 0
    %623 = vmatpush1.bf16.msra.mxu0 0
    %624 = vmatprep.subr.bf16.mxu0 0
    %625 = vmatpush1.bf16.msra.mxu0 0
    %626 = vmatprep.subr.bf16.mxu0 0
    %627 = vmatpush1.bf16.msra.mxu0 0
    %628 = vmatprep.subr.bf16.mxu0 0
    %629 = vmatpush1.bf16.msra.mxu0 0
    %630 = vmatprep.subr.bf16.mxu0 0
    %631 = vmatpush1.bf16.msra.mxu0 0
    %632 = vmatprep.subr.bf16.mxu0 0
    %633 = vmatpush1.bf16.msra.mxu0 0
    %634 = vmatprep.subr.bf16.mxu0 0
    %635 = vmatpush1.bf16.msra.mxu0 0
    %636 = vmatprep.subr.bf16.mxu0 0
    %637 = vmatpush1.bf16.msra.mxu0 0
    %638 = vmatprep.subr.bf16.mxu0 0
    %639 = vmatpush1.bf16.msra.mxu0 0
    %640 = vmatprep.subr.bf16.mxu0 0
    %641 = vmatpush1.bf16.msra.mxu0 0
    %642 = vmatprep.subr.bf16.mxu0 0
    %643 = vmatpush1.bf16.msra.mxu0 0
    %644 = vmatprep.subr.bf16.mxu0 0
    %645 = vmatpush1.bf16.msra.mxu0 0
    %646 = vmatprep.subr.bf16.mxu0 0
    %647 = vmatpush1.bf16.msra.mxu0 0
    %648 = vmatprep.subr.bf16.mxu0 0
    %649 = vmatpush1.bf16.msra.mxu0 0
    %650 = vmatprep.mubr.bf16.mxu0 0
    %651 = vmatmul.mubr.bf16.gmra.mrb[0].mxu0 %v613
    %v652 = vpop.f32.mrb[0].mxu0
    %v653 = vadd.f32 %v598, %v652
    %v654 = vpop.f32.mrb[0].mxu0
    %v655 = vpop.f32.mrb[0].mxu0
    %v656 = vadd.f32 %v598, %v655
    %v657 = vpop.f32.mrb[0].mxu0
    %658 = vmatprep.mubr.bf16.mxu0 0
    %659 = vmatmul.mubr.bf16.gmra.mrb[0].mxu0 %v616
    %v660 = vpop.f32.mrb[0].mxu0
    %v661 = vadd.f32 %v598, %v660
    %v662 = vpop.f32.mrb[0].mxu0
    %v663 = vpop.f32.mrb[0].mxu0
    %v664 = vadd.f32 %v598, %v663
    %v665 = vpop.f32.mrb[0].mxu0
    %666 = vdwg.mxu0
    %v667 = vpack.c.bf16 %v656, %v653
    %v668 = vpack.c.bf16 %v664, %v661
    %669 = vxpose.xlu0.b32.start [1/16] %v575, 128
    %670 = vxpose.xlu0.b32.cont [2/16] %v578, 128
    %671 = vxpose.xlu0.b32.cont [3/16] %v583, 128
    %672 = vxpose.xlu0.b32.cont [4/16] %v586, 128
    %673 = vxpose.xlu0.b32.cont [5/16] 0.0, 128
    %674 = vxpose.xlu0.b32.cont [6/16] 0.0, 128
    %675 = vxpose.xlu0.b32.cont [7/16] 0.0, 128
    %676 = vxpose.xlu0.b32.cont [8/16] 0.0, 128
    %677 = vxpose.xlu0.b32.cont [9/16] 0.0, 128
    %678 = vxpose.xlu0.b32.cont [10/16] 0.0, 128
    %679 = vxpose.xlu0.b32.cont [11/16] 0.0, 128
    %680 = vxpose.xlu0.b32.cont [12/16] 0.0, 128
    %681 = vxpose.xlu0.b32.cont [13/16] 0.0, 128
    %682 = vxpose.xlu0.b32.cont [14/16] 0.0, 128
    %683 = vxpose.xlu0.b32.cont [15/16] 0.0, 128
    %684 = vxpose.xlu0.b32.end [16/16] 0.0, 128
    %v685 = vpop.trf.xlu0
    %v686 = vpop.trf.xlu0
    %v687 = vpop.trf.xlu0
    %v688 = vpop.trf.xlu0
    %v689 = vpop.trf.xlu0
    %v690 = vpop.trf.xlu0
    %v691 = vpop.trf.xlu0
    %v692 = vpop.trf.xlu0
    %v693 = vpop.trf.xlu0
    %v694 = vpop.trf.xlu0
    %v695 = vpop.trf.xlu0
    %v696 = vpop.trf.xlu0
    %v697 = vpop.trf.xlu0
    %v698 = vpop.trf.xlu0
    %v699 = vpop.trf.xlu0
    %v700 = vpop.trf.xlu0
    %v701 = vpack.c.bf16 %v686, %v685
    %v702 = vpack.c.bf16 %v688, %v687
    %vm703 = vcmask 64512
    %v705 = vsel %vm703, %v510, 0
    %vm707 = vcmask 1043456
    %v709 = vsel %vm707, %v701, 0
    %711 = vmatprep.subr.bf16.mxu0 0
    %712 = vmatpush1.bf16.msra.mxu0 %v709
    %713 = vmatprep.subr.bf16.mxu0 0
    %714 = vmatpush1.bf16.msra.mxu0 0
    %715 = vmatprep.subr.bf16.mxu0 0
    %716 = vmatpush1.bf16.msra.mxu0 0
    %717 = vmatprep.subr.bf16.mxu0 0
    %718 = vmatpush1.bf16.msra.mxu0 0
    %719 = vmatprep.subr.bf16.mxu0 0
    %720 = vmatpush1.bf16.msra.mxu0 0
    %721 = vmatprep.subr.bf16.mxu0 0
    %722 = vmatpush1.bf16.msra.mxu0 0
    %723 = vmatprep.subr.bf16.mxu0 0
    %724 = vmatpush1.bf16.msra.mxu0 0
    %725 = vmatprep.subr.bf16.mxu0 0
    %726 = vmatpush1.bf16.msra.mxu0 0
    %727 = vmatprep.subr.bf16.mxu0 0
    %728 = vmatpush1.bf16.msra.mxu0 0
    %729 = vmatprep.subr.bf16.mxu0 0
    %730 = vmatpush1.bf16.msra.mxu0 0
    %731 = vmatprep.subr.bf16.mxu0 0
    %732 = vmatpush1.bf16.msra.mxu0 0
    %733 = vmatprep.subr.bf16.mxu0 0
    %734 = vmatpush1.bf16.msra.mxu0 0
    %735 = vmatprep.subr.bf16.mxu0 0
    %736 = vmatpush1.bf16.msra.mxu0 0
    %737 = vmatprep.subr.bf16.mxu0 0
    %738 = vmatpush1.bf16.msra.mxu0 0
    %739 = vmatprep.subr.bf16.mxu0 0
    %740 = vmatpush1.bf16.msra.mxu0 0
    %741 = vmatprep.subr.bf16.mxu0 0
    %742 = vmatpush1.bf16.msra.mxu0 0
    %743 = vmatprep.mubr.bf16.mxu0 0
    %744 = vmatmul.mubr.bf16.gmra.mrb[0].mxu0 %v705
    %v745 = vpop.f32.mrb[0].mxu0
    %v746 = vadd.f32 0.0, %v745
    %v747 = vpop.f32.mrb[0].mxu0
    %v748 = vpop.f32.mrb[0].mxu0
    %v749 = vpop.f32.mrb[0].mxu0
    %750 = vdwg.mxu0
    %vm751 = vcmask 130048
    %v752 = vsel %vm751, %v746, -inf
    %753 = vmax.xlane.f32.xlu0 %v752
    %v754 = vpop.xlane.xlu0 %753
    %v755 = vsub.f32 %v746, %v754
    %v756 = vmul.f32 %v755, 1.442695
    %v757 = vpow.pop %v756
    %v758 = vsel %vm751, %v757, 0.0
    %759 = vadd.xlane.f32.xlu0 %v758
    %v760 = vpop.xlane.xlu0 %759
    %v761 = vrcp.pop %v760
    %v762 = vmul.f32 %v757, %v761
    %v763 = vpack.c.bf16 %v762, %v762
    %v765 = vsel %vm751, %v763, 0
    %767 = vmatprep.subr.bf16.mxu0 0
    %768 = vmatpush1.bf16.msra.mxu0 %v667
    %769 = vmatprep.subr.bf16.mxu0 0
    %770 = vmatpush1.bf16.msra.mxu0 0
    %771 = vmatprep.subr.bf16.mxu0 0
    %772 = vmatpush1.bf16.msra.mxu0 0
    %773 = vmatprep.subr.bf16.mxu0 0
    %774 = vmatpush1.bf16.msra.mxu0 0
    %775 = vmatprep.subr.bf16.mxu0 0
    %776 = vmatpush1.bf16.msra.mxu0 0
    %777 = vmatprep.subr.bf16.mxu0 0
    %778 = vmatpush1.bf16.msra.mxu0 0
    %779 = vmatprep.subr.bf16.mxu0 0
    %780 = vmatpush1.bf16.msra.mxu0 0
    %781 = vmatprep.subr.bf16.mxu0 0
    %782 = vmatpush1.bf16.msra.mxu0 0
    %783 = vmatprep.subr.bf16.mxu0 0
    %784 = vmatpush1.bf16.msra.mxu0 0
    %785 = vmatprep.subr.bf16.mxu0 0
    %786 = vmatpush1.bf16.msra.mxu0 0
    %787 = vmatprep.subr.bf16.mxu0 0
    %788 = vmatpush1.bf16.msra.mxu0 0
    %789 = vmatprep.subr.bf16.mxu0 0
    %790 = vmatpush1.bf16.msra.mxu0 0
    %791 = vmatprep.subr.bf16.mxu0 0
    %792 = vmatpush1.bf16.msra.mxu0 0
    %793 = vmatprep.subr.bf16.mxu0 0
    %794 = vmatpush1.bf16.msra.mxu0 0
    %795 = vmatprep.subr.bf16.mxu0 0
    %796 = vmatpush1.bf16.msra.mxu0 0
    %797 = vmatprep.subr.bf16.mxu0 0
    %798 = vmatpush1.bf16.msra.mxu0 0
    %799 = vmatprep.mubr.bf16.mxu0 0
    %800 = vmatmul.mubr.bf16.gmra.mrb[0].mxu0 %v765
    %v801 = vpop.f32.mrb[0].mxu0
    %v802 = vadd.f32 0.0, %v801
    %v803 = vpop.f32.mrb[0].mxu0
    %v804 = vpop.f32.mrb[0].mxu0
    %v805 = vpop.f32.mrb[0].mxu0
    %806 = vdwg.mxu0
    %v807 = vpack.c.bf16 %v802, %v802
    %vm808 = vcmask 60416
    %809 = vst.msk [vmem:[#allocation2] sm:$0xf] %vm808, %v807
    %811 = vrot.lane.b32.xlu0 %v510, 120
    %v812 = vpop.permute.xlu0 %811
    %v814 = vrot.slane %v701, 4
    %v816 = vsel %vm703, %v812, 0
    %v819 = vsel %vm707, %v814, 0
    %821 = vmatprep.subr.bf16.mxu0 0
    %822 = vmatpush1.bf16.msra.mxu0 %v819
    %823 = vmatprep.subr.bf16.mxu0 0
    %824 = vmatpush1.bf16.msra.mxu0 0
    %825 = vmatprep.subr.bf16.mxu0 0
    %826 = vmatpush1.bf16.msra.mxu0 0
    %827 = vmatprep.subr.bf16.mxu0 0
    %828 = vmatpush1.bf16.msra.mxu0 0
    %829 = vmatprep.subr.bf16.mxu0 0
    %830 = vmatpush1.bf16.msra.mxu0 0
    %831 = vmatprep.subr.bf16.mxu0 0
    %832 = vmatpush1.bf16.msra.mxu0 0
    %833 = vmatprep.subr.bf16.mxu0 0
    %834 = vmatpush1.bf16.msra.mxu0 0
    %835 = vmatprep.subr.bf16.mxu0 0
    %836 = vmatpush1.bf16.msra.mxu0 0
    %837 = vmatprep.subr.bf16.mxu0 0
    %838 = vmatpush1.bf16.msra.mxu0 0
    %839 = vmatprep.subr.bf16.mxu0 0
    %840 = vmatpush1.bf16.msra.mxu0 0
    %841 = vmatprep.subr.bf16.mxu0 0
    %842 = vmatpush1.bf16.msra.mxu0 0
    %843 = vmatprep.subr.bf16.mxu0 0
    %844 = vmatpush1.bf16.msra.mxu0 0
    %845 = vmatprep.subr.bf16.mxu0 0
    %846 = vmatpush1.bf16.msra.mxu0 0
    %847 = vmatprep.subr.bf16.mxu0 0
    %848 = vmatpush1.bf16.msra.mxu0 0
    %849 = vmatprep.subr.bf16.mxu0 0
    %850 = vmatpush1.bf16.msra.mxu0 0
    %851 = vmatprep.subr.bf16.mxu0 0
    %852 = vmatpush1.bf16.msra.mxu0 0
    %853 = vmatprep.mubr.bf16.mxu0 0
    %854 = vmatmul.mubr.bf16.gmra.mrb[0].mxu0 %v816
    %v855 = vpop.f32.mrb[0].mxu0
    %v856 = vadd.f32 0.0, %v855
    %v857 = vpop.f32.mrb[0].mxu0
    %v858 = vpop.f32.mrb[0].mxu0
    %v859 = vpop.f32.mrb[0].mxu0
    %860 = vdwg.mxu0
    %v861 = vsel %vm751, %v856, -inf
    %862 = vmax.xlane.f32.xlu0 %v861
    %v863 = vpop.xlane.xlu0 %862
    %v864 = vsub.f32 %v856, %v863
    %v865 = vmul.f32 %v864, 1.442695
    %v866 = vpow.pop %v865
    %v867 = vsel %vm751, %v866, 0.0
    %868 = vadd.xlane.f32.xlu0 %v867
    %v869 = vpop.xlane.xlu0 %868
    %v870 = vrcp.pop %v869
    %v871 = vmul.f32 %v866, %v870
    %v872 = vpack.c.bf16 %v871, %v871
    %874 = vrot.lane.b32.xlu0 %v667, 120
    %v875 = vpop.permute.xlu0 %874
    %v878 = vsel %vm751, %v872, 0
    %880 = vmatprep.subr.bf16.mxu0 0
    %881 = vmatpush1.bf16.msra.mxu0 %v875
    %882 = vmatprep.subr.bf16.mxu0 0
    %883 = vmatpush1.bf16.msra.mxu0 0
    %884 = vmatprep.subr.bf16.mxu0 0
    %885 = vmatpush1.bf16.msra.mxu0 0
    %886 = vmatprep.subr.bf16.mxu0 0
    %887 = vmatpush1.bf16.msra.mxu0 0
    %888 = vmatprep.subr.bf16.mxu0 0
    %889 = vmatpush1.bf16.msra.mxu0 0
    %890 = vmatprep.subr.bf16.mxu0 0
    %891 = vmatpush1.bf16.msra.mxu0 0
    %892 = vmatprep.subr.bf16.mxu0 0
    %893 = vmatpush1.bf16.msra.mxu0 0
    %894 = vmatprep.subr.bf16.mxu0 0
    %895 = vmatpush1.bf16.msra.mxu0 0
    %896 = vmatprep.subr.bf16.mxu0 0
    %897 = vmatpush1.bf16.msra.mxu0 0
    %898 = vmatprep.subr.bf16.mxu0 0
    %899 = vmatpush1.bf16.msra.mxu0 0
    %900 = vmatprep.subr.bf16.mxu0 0
    %901 = vmatpush1.bf16.msra.mxu0 0
    %902 = vmatprep.subr.bf16.mxu0 0
    %903 = vmatpush1.bf16.msra.mxu0 0
    %904 = vmatprep.subr.bf16.mxu0 0
    %905 = vmatpush1.bf16.msra.mxu0 0
    %906 = vmatprep.subr.bf16.mxu0 0
    %907 = vmatpush1.bf16.msra.mxu0 0
    %908 = vmatprep.subr.bf16.mxu0 0
    %909 = vmatpush1.bf16.msra.mxu0 0
    %910 = vmatprep.subr.bf16.mxu0 0
    %911 = vmatpush1.bf16.msra.mxu0 0
    %912 = vmatprep.mubr.bf16.mxu0 0
    %913 = vmatmul.mubr.bf16.gmra.mrb[0].mxu0 %v878
    %v914 = vpop.f32.mrb[0].mxu0
    %v915 = vadd.f32 0.0, %v914
    %v916 = vpop.f32.mrb[0].mxu0
    %v917 = vpop.f32.mrb[0].mxu0
    %v918 = vpop.f32.mrb[0].mxu0
    %919 = vdwg.mxu0
    %v920 = vpack.c.bf16 %v915, %v915
    %922 = vrot.lane.b32.xlu0 %v920, 8
    %v923 = vpop.permute.xlu0 %922
    %vm925 = vcmask 126016
    %926 = vst.msk [vmem:[#allocation2] sm:$0xf] %vm925, %v923
    %927 = vrot.lane.b32.xlu0 %v510, 112
    %v928 = vpop.permute.xlu0 %927
    %v930 = vsel %vm703, %v928, 0
    %v933 = vsel %vm707, %v702, 0
    %935 = vmatprep.subr.bf16.mxu0 0
    %936 = vmatpush1.bf16.msra.mxu0 %v933
    %937 = vmatprep.subr.bf16.mxu0 0
    %938 = vmatpush1.bf16.msra.mxu0 0
    %939 = vmatprep.subr.bf16.mxu0 0
    %940 = vmatpush1.bf16.msra.mxu0 0
    %941 = vmatprep.subr.bf16.mxu0 0
    %942 = vmatpush1.bf16.msra.mxu0 0
    %943 = vmatprep.subr.bf16.mxu0 0
    %944 = vmatpush1.bf16.msra.mxu0 0
    %945 = vmatprep.subr.bf16.mxu0 0
    %946 = vmatpush1.bf16.msra.mxu0 0
    %947 = vmatprep.subr.bf16.mxu0 0
    %948 = vmatpush1.bf16.msra.mxu0 0
    %949 = vmatprep.subr.bf16.mxu0 0
    %950 = vmatpush1.bf16.msra.mxu0 0
    %951 = vmatprep.subr.bf16.mxu0 0
    %952 = vmatpush1.bf16.msra.mxu0 0
    %953 = vmatprep.subr.bf16.mxu0 0
    %954 = vmatpush1.bf16.msra.mxu0 0
    %955 = vmatprep.subr.bf16.mxu0 0
    %956 = vmatpush1.bf16.msra.mxu0 0
    %957 = vmatprep.subr.bf16.mxu0 0
    %958 = vmatpush1.bf16.msra.mxu0 0
    %959 = vmatprep.subr.bf16.mxu0 0
    %960 = vmatpush1.bf16.msra.mxu0 0
    %961 = vmatprep.subr.bf16.mxu0 0
    %962 = vmatpush1.bf16.msra.mxu0 0
    %963 = vmatprep.subr.bf16.mxu0 0
    %964 = vmatpush1.bf16.msra.mxu0 0
    %965 = vmatprep.subr.bf16.mxu0 0
    %966 = vmatpush1.bf16.msra.mxu0 0
    %967 = vmatprep.mubr.bf16.mxu0 0
    %968 = vmatmul.mubr.bf16.gmra.mrb[0].mxu0 %v930
    %v969 = vpop.f32.mrb[0].mxu0
    %v970 = vadd.f32 0.0, %v969
    %v971 = vpop.f32.mrb[0].mxu0
    %v972 = vpop.f32.mrb[0].mxu0
    %v973 = vpop.f32.mrb[0].mxu0
    %974 = vdwg.mxu0
    %v975 = vsel %vm751, %v970, -inf
    %976 = vmax.xlane.f32.xlu0 %v975
    %v977 = vpop.xlane.xlu0 %976
    %v978 = vsub.f32 %v970, %v977
    %v979 = vmul.f32 %v978, 1.442695
    %v980 = vpow.pop %v979
    %v981 = vsel %vm751, %v980, 0.0
    %982 = vadd.xlane.f32.xlu0 %v981
    %v983 = vpop.xlane.xlu0 %982
    %v984 = vrcp.pop %v983
    %v985 = vmul.f32 %v980, %v984
    %v986 = vpack.c.bf16 %v985, %v985
    %987 = vrot.lane.b32.xlu0 %v667, 112
    %v988 = vpop.permute.xlu0 %987
    %v991 = vsel %vm751, %v986, 0
    %993 = vmatprep.subr.bf16.mxu0 0
    %994 = vmatpush1.bf16.msra.mxu0 %v988
    %995 = vmatprep.subr.bf16.mxu0 0
    %996 = vmatpush1.bf16.msra.mxu0 0
    %997 = vmatprep.subr.bf16.mxu0 0
    %998 = vmatpush1.bf16.msra.mxu0 0
    %999 = vmatprep.subr.bf16.mxu0 0
    %1000 = vmatpush1.bf16.msra.mxu0 0
    %1001 = vmatprep.subr.bf16.mxu0 0
    %1002 = vmatpush1.bf16.msra.mxu0 0
    %1003 = vmatprep.subr.bf16.mxu0 0
    %1004 = vmatpush1.bf16.msra.mxu0 0
    %1005 = vmatprep.subr.bf16.mxu0 0
    %1006 = vmatpush1.bf16.msra.mxu0 0
    %1007 = vmatprep.subr.bf16.mxu0 0
    %1008 = vmatpush1.bf16.msra.mxu0 0
    %1009 = vmatprep.subr.bf16.mxu0 0
    %1010 = vmatpush1.bf16.msra.mxu0 0
    %1011 = vmatprep.subr.bf16.mxu0 0
    %1012 = vmatpush1.bf16.msra.mxu0 0
    %1013 = vmatprep.subr.bf16.mxu0 0
    %1014 = vmatpush1.bf16.msra.mxu0 0
    %1015 = vmatprep.subr.bf16.mxu0 0
    %1016 = vmatpush1.bf16.msra.mxu0 0
    %1017 = vmatprep.subr.bf16.mxu0 0
    %1018 = vmatpush1.bf16.msra.mxu0 0
    %1019 = vmatprep.subr.bf16.mxu0 0
    %1020 = vmatpush1.bf16.msra.mxu0 0
    %1021 = vmatprep.subr.bf16.mxu0 0
    %1022 = vmatpush1.bf16.msra.mxu0 0
    %1023 = vmatprep.subr.bf16.mxu0 0
    %1024 = vmatpush1.bf16.msra.mxu0 0
    %1025 = vmatprep.mubr.bf16.mxu0 0
    %1026 = vmatmul.mubr.bf16.gmra.mrb[0].mxu0 %v991
    %v1027 = vpop.f32.mrb[0].mxu0
    %v1028 = vadd.f32 0.0, %v1027
    %v1029 = vpop.f32.mrb[0].mxu0
    %v1030 = vpop.f32.mrb[0].mxu0
    %v1031 = vpop.f32.mrb[0].mxu0
    %1032 = vdwg.mxu0
    %v1033 = vpack.c.bf16 %v1028, %v1028
    %1035 = vrot.lane.b32.xlu0 %v1033, 16
    %v1036 = vpop.permute.xlu0 %1035
    %vm1038 = vcmask 191616
    %1039 = vst.msk [vmem:[#allocation2] sm:$0xf] %vm1038, %v1036
    %1040 = vrot.lane.b32.xlu0 %v510, 104
    %v1041 = vpop.permute.xlu0 %1040
    %v1043 = vrot.slane %v702, 4
    %v1045 = vsel %vm703, %v1041, 0
    %v1048 = vsel %vm707, %v1043, 0
    %1050 = vmatprep.subr.bf16.mxu0 0
    %1051 = vmatpush1.bf16.msra.mxu0 %v1048
    %1052 = vmatprep.subr.bf16.mxu0 0
    %1053 = vmatpush1.bf16.msra.mxu0 0
    %1054 = vmatprep.subr.bf16.mxu0 0
    %1055 = vmatpush1.bf16.msra.mxu0 0
    %1056 = vmatprep.subr.bf16.mxu0 0
    %1057 = vmatpush1.bf16.msra.mxu0 0
    %1058 = vmatprep.subr.bf16.mxu0 0
    %1059 = vmatpush1.bf16.msra.mxu0 0
    %1060 = vmatprep.subr.bf16.mxu0 0
    %1061 = vmatpush1.bf16.msra.mxu0 0
    %1062 = vmatprep.subr.bf16.mxu0 0
    %1063 = vmatpush1.bf16.msra.mxu0 0
    %1064 = vmatprep.subr.bf16.mxu0 0
    %1065 = vmatpush1.bf16.msra.mxu0 0
    %1066 = vmatprep.subr.bf16.mxu0 0
    %1067 = vmatpush1.bf16.msra.mxu0 0
    %1068 = vmatprep.subr.bf16.mxu0 0
    %1069 = vmatpush1.bf16.msra.mxu0 0
    %1070 = vmatprep.subr.bf16.mxu0 0
    %1071 = vmatpush1.bf16.msra.mxu0 0
    %1072 = vmatprep.subr.bf16.mxu0 0
    %1073 = vmatpush1.bf16.msra.mxu0 0
    %1074 = vmatprep.subr.bf16.mxu0 0
    %1075 = vmatpush1.bf16.msra.mxu0 0
    %1076 = vmatprep.subr.bf16.mxu0 0
    %1077 = vmatpush1.bf16.msra.mxu0 0
    %1078 = vmatprep.subr.bf16.mxu0 0
    %1079 = vmatpush1.bf16.msra.mxu0 0
    %1080 = vmatprep.subr.bf16.mxu0 0
    %1081 = vmatpush1.bf16.msra.mxu0 0
    %1082 = vmatprep.mubr.bf16.mxu0 0
    %1083 = vmatmul.mubr.bf16.gmra.mrb[0].mxu0 %v1045
    %v1084 = vpop.f32.mrb[0].mxu0
    %v1085 = vadd.f32 0.0, %v1084
    %v1086 = vpop.f32.mrb[0].mxu0
    %v1087 = vpop.f32.mrb[0].mxu0
    %v1088 = vpop.f32.mrb[0].mxu0
    %1089 = vdwg.mxu0
    %v1090 = vsel %vm751, %v1085, -inf
    %1091 = vmax.xlane.f32.xlu0 %v1090
    %v1092 = vpop.xlane.xlu0 %1091
    %v1093 = vsub.f32 %v1085, %v1092
    %v1094 = vmul.f32 %v1093, 1.442695
    %v1095 = vpow.pop %v1094
    %v1096 = vsel %vm751, %v1095, 0.0
    %1097 = vadd.xlane.f32.xlu0 %v1096
    %v1098 = vpop.xlane.xlu0 %1097
    %v1099 = vrcp.pop %v1098
    %v1100 = vmul.f32 %v1095, %v1099
    %v1101 = vpack.c.bf16 %v1100, %v1100
    %1102 = vrot.lane.b32.xlu0 %v667, 104
    %v1103 = vpop.permute.xlu0 %1102
    %v1106 = vsel %vm751, %v1101, 0
    %1108 = vmatprep.subr.bf16.mxu0 0
    %1109 = vmatpush1.bf16.msra.mxu0 %v1103
    %1110 = vmatprep.subr.bf16.mxu0 0
    %1111 = vmatpush1.bf16.msra.mxu0 0
    %1112 = vmatprep.subr.bf16.mxu0 0
    %1113 = vmatpush1.bf16.msra.mxu0 0
    %1114 = vmatprep.subr.bf16.mxu0 0
    %1115 = vmatpush1.bf16.msra.mxu0 0
    %1116 = vmatprep.subr.bf16.mxu0 0
    %1117 = vmatpush1.bf16.msra.mxu0 0
    %1118 = vmatprep.subr.bf16.mxu0 0
    %1119 = vmatpush1.bf16.msra.mxu0 0
    %1120 = vmatprep.subr.bf16.mxu0 0
    %1121 = vmatpush1.bf16.msra.mxu0 0
    %1122 = vmatprep.subr.bf16.mxu0 0
    %1123 = vmatpush1.bf16.msra.mxu0 0
    %1124 = vmatprep.subr.bf16.mxu0 0
    %1125 = vmatpush1.bf16.msra.mxu0 0
    %1126 = vmatprep.subr.bf16.mxu0 0
    %1127 = vmatpush1.bf16.msra.mxu0 0
    %1128 = vmatprep.subr.bf16.mxu0 0
    %1129 = vmatpush1.bf16.msra.mxu0 0
    %1130 = vmatprep.subr.bf16.mxu0 0
    %1131 = vmatpush1.bf16.msra.mxu0 0
    %1132 = vmatprep.subr.bf16.mxu0 0
    %1133 = vmatpush1.bf16.msra.mxu0 0
    %1134 = vmatprep.subr.bf16.mxu0 0
    %1135 = vmatpush1.bf16.msra.mxu0 0
    %1136 = vmatprep.subr.bf16.mxu0 0
    %1137 = vmatpush1.bf16.msra.mxu0 0
    %1138 = vmatprep.subr.bf16.mxu0 0
    %1139 = vmatpush1.bf16.msra.mxu0 0
    %1140 = vmatprep.mubr.bf16.mxu0 0
    %1141 = vmatmul.mubr.bf16.gmra.mrb[0].mxu0 %v1106
    %v1142 = vpop.f32.mrb[0].mxu0
    %v1143 = vadd.f32 0.0, %v1142
    %v1144 = vpop.f32.mrb[0].mxu0
    %v1145 = vpop.f32.mrb[0].mxu0
    %v1146 = vpop.f32.mrb[0].mxu0
    %1147 = vdwg.mxu0
    %v1148 = vpack.c.bf16 %v1143, %v1143
    %1150 = vrot.lane.b32.xlu0 %v1148, 24
    %v1151 = vpop.permute.xlu0 %1150
    %vm1153 = vcmask 257216
    %1154 = vst.msk [vmem:[#allocation2] sm:$0xf] %vm1153, %v1151
    %v1155 = vrot.slane %v510, 4
    %1156 = vrot.lane.b32.xlu0 %v701, 112
    %v1157 = vpop.permute.xlu0 %1156
    %v1159 = vsel %vm703, %v1155, 0
    %v1162 = vsel %vm707, %v1157, 0
    %1164 = vmatprep.subr.bf16.mxu0 0
    %1165 = vmatpush1.bf16.msra.mxu0 %v1162
    %1166 = vmatprep.subr.bf16.mxu0 0
    %1167 = vmatpush1.bf16.msra.mxu0 0
    %1168 = vmatprep.subr.bf16.mxu0 0
    %1169 = vmatpush1.bf16.msra.mxu0 0
    %1170 = vmatprep.subr.bf16.mxu0 0
    %1171 = vmatpush1.bf16.msra.mxu0 0
    %1172 = vmatprep.subr.bf16.mxu0 0
    %1173 = vmatpush1.bf16.msra.mxu0 0
    %1174 = vmatprep.subr.bf16.mxu0 0
    %1175 = vmatpush1.bf16.msra.mxu0 0
    %1176 = vmatprep.subr.bf16.mxu0 0
    %1177 = vmatpush1.bf16.msra.mxu0 0
    %1178 = vmatprep.subr.bf16.mxu0 0
    %1179 = vmatpush1.bf16.msra.mxu0 0
    %1180 = vmatprep.subr.bf16.mxu0 0
    %1181 = vmatpush1.bf16.msra.mxu0 0
    %1182 = vmatprep.subr.bf16.mxu0 0
    %1183 = vmatpush1.bf16.msra.mxu0 0
    %1184 = vmatprep.subr.bf16.mxu0 0
    %1185 = vmatpush1.bf16.msra.mxu0 0
    %1186 = vmatprep.subr.bf16.mxu0 0
    %1187 = vmatpush1.bf16.msra.mxu0 0
    %1188 = vmatprep.subr.bf16.mxu0 0
    %1189 = vmatpush1.bf16.msra.mxu0 0
    %1190 = vmatprep.subr.bf16.mxu0 0
    %1191 = vmatpush1.bf16.msra.mxu0 0
    %1192 = vmatprep.subr.bf16.mxu0 0
    %1193 = vmatpush1.bf16.msra.mxu0 0
    %1194 = vmatprep.subr.bf16.mxu0 0
    %1195 = vmatpush1.bf16.msra.mxu0 0
    %1196 = vmatprep.mubr.bf16.mxu0 0
    %1197 = vmatmul.mubr.bf16.gmra.mrb[0].mxu0 %v1159
    %v1198 = vpop.f32.mrb[0].mxu0
    %v1199 = vadd.f32 0.0, %v1198
    %v1200 = vpop.f32.mrb[0].mxu0
    %v1201 = vpop.f32.mrb[0].mxu0
    %v1202 = vpop.f32.mrb[0].mxu0
    %1203 = vdwg.mxu0
    %v1204 = vsel %vm751, %v1199, -inf
    %1205 = vmax.xlane.f32.xlu0 %v1204
    %v1206 = vpop.xlane.xlu0 %1205
    %v1207 = vsub.f32 %v1199, %v1206
    %v1208 = vmul.f32 %v1207, 1.442695
    %v1209 = vpow.pop %v1208
    %v1210 = vsel %vm751, %v1209, 0.0
    %1211 = vadd.xlane.f32.xlu0 %v1210
    %v1212 = vpop.xlane.xlu0 %1211
    %v1213 = vrcp.pop %v1212
    %v1214 = vmul.f32 %v1209, %v1213
    %v1215 = vpack.c.bf16 %v1214, %v1214
    %v1217 = vsel %vm751, %v1215, 0
    %1219 = vmatprep.subr.bf16.mxu0 0
    %1220 = vmatpush1.bf16.msra.mxu0 %v668
    %1221 = vmatprep.subr.bf16.mxu0 0
    %1222 = vmatpush1.bf16.msra.mxu0 0
    %1223 = vmatprep.subr.bf16.mxu0 0
    %1224 = vmatpush1.bf16.msra.mxu0 0
    %1225 = vmatprep.subr.bf16.mxu0 0
    %1226 = vmatpush1.bf16.msra.mxu0 0
    %1227 = vmatprep.subr.bf16.mxu0 0
    %1228 = vmatpush1.bf16.msra.mxu0 0
    %1229 = vmatprep.subr.bf16.mxu0 0
    %1230 = vmatpush1.bf16.msra.mxu0 0
    %1231 = vmatprep.subr.bf16.mxu0 0
    %1232 = vmatpush1.bf16.msra.mxu0 0
    %1233 = vmatprep.subr.bf16.mxu0 0
    %1234 = vmatpush1.bf16.msra.mxu0 0
    %1235 = vmatprep.subr.bf16.mxu0 0
    %1236 = vmatpush1.bf16.msra.mxu0 0
    %1237 = vmatprep.subr.bf16.mxu0 0
    %1238 = vmatpush1.bf16.msra.mxu0 0
    %1239 = vmatprep.subr.bf16.mxu0 0
    %1240 = vmatpush1.bf16.msra.mxu0 0
    %1241 = vmatprep.subr.bf16.mxu0 0
    %1242 = vmatpush1.bf16.msra.mxu0 0
    %1243 = vmatprep.subr.bf16.mxu0 0
    %1244 = vmatpush1.bf16.msra.mxu0 0
    %1245 = vmatprep.subr.bf16.mxu0 0
    %1246 = vmatpush1.bf16.msra.mxu0 0
    %1247 = vmatprep.subr.bf16.mxu0 0
    %1248 = vmatpush1.bf16.msra.mxu0 0
    %1249 = vmatprep.subr.bf16.mxu0 0
    %1250 = vmatpush1.bf16.msra.mxu0 0
    %1251 = vmatprep.mubr.bf16.mxu0 0
    %1252 = vmatmul.mubr.bf16.gmra.mrb[0].mxu0 %v1217
    %v1253 = vpop.f32.mrb[0].mxu0
    %v1254 = vadd.f32 0.0, %v1253
    %v1255 = vpop.f32.mrb[0].mxu0
    %v1256 = vpop.f32.mrb[0].mxu0
    %v1257 = vpop.f32.mrb[0].mxu0
    %1258 = vdwg.mxu0
    %v1259 = vpack.c.bf16 %v1254, %v1254
    %v1261 = vrot.slane %v1259, 4
    %vm1263 = vcmask 64516
    %1264 = vst.msk [vmem:[#allocation2] sm:$0xf0] %vm1263, %v1261
    %1265 = vrot.lane.b32.xlu0 %v1155, 120
    %v1266 = vpop.permute.xlu0 %1265
    %1267 = vrot.lane.b32.xlu0 %v814, 112
    %v1268 = vpop.permute.xlu0 %1267
    %v1270 = vsel %vm703, %v1266, 0
    %v1273 = vsel %vm707, %v1268, 0
    %1275 = vmatprep.subr.bf16.mxu0 0
    %1276 = vmatpush1.bf16.msra.mxu0 %v1273
    %1277 = vmatprep.subr.bf16.mxu0 0
    %1278 = vmatpush1.bf16.msra.mxu0 0
    %1279 = vmatprep.subr.bf16.mxu0 0
    %1280 = vmatpush1.bf16.msra.mxu0 0
    %1281 = vmatprep.subr.bf16.mxu0 0
    %1282 = vmatpush1.bf16.msra.mxu0 0
    %1283 = vmatprep.subr.bf16.mxu0 0
    %1284 = vmatpush1.bf16.msra.mxu0 0
    %1285 = vmatprep.subr.bf16.mxu0 0
    %1286 = vmatpush1.bf16.msra.mxu0 0
    %1287 = vmatprep.subr.bf16.mxu0 0
    %1288 = vmatpush1.bf16.msra.mxu0 0
    %1289 = vmatprep.subr.bf16.mxu0 0
    %1290 = vmatpush1.bf16.msra.mxu0 0
    %1291 = vmatprep.subr.bf16.mxu0 0
    %1292 = vmatpush1.bf16.msra.mxu0 0
    %1293 = vmatprep.subr.bf16.mxu0 0
    %1294 = vmatpush1.bf16.msra.mxu0 0
    %1295 = vmatprep.subr.bf16.mxu0 0
    %1296 = vmatpush1.bf16.msra.mxu0 0
    %1297 = vmatprep.subr.bf16.mxu0 0
    %1298 = vmatpush1.bf16.msra.mxu0 0
    %1299 = vmatprep.subr.bf16.mxu0 0
    %1300 = vmatpush1.bf16.msra.mxu0 0
    %1301 = vmatprep.subr.bf16.mxu0 0
    %1302 = vmatpush1.bf16.msra.mxu0 0
    %1303 = vmatprep.subr.bf16.mxu0 0
    %1304 = vmatpush1.bf16.msra.mxu0 0
    %1305 = vmatprep.subr.bf16.mxu0 0
    %1306 = vmatpush1.bf16.msra.mxu0 0
    %1307 = vmatprep.mubr.bf16.mxu0 0
    %1308 = vmatmul.mubr.bf16.gmra.mrb[0].mxu0 %v1270
    %v1309 = vpop.f32.mrb[0].mxu0
    %v1310 = vadd.f32 0.0, %v1309
    %v1311 = vpop.f32.mrb[0].mxu0
    %v1312 = vpop.f32.mrb[0].mxu0
    %v1313 = vpop.f32.mrb[0].mxu0
    %1314 = vdwg.mxu0
    %v1315 = vsel %vm751, %v1310, -inf
    %1316 = vmax.xlane.f32.xlu0 %v1315
    %v1317 = vpop.xlane.xlu0 %1316
    %v1318 = vsub.f32 %v1310, %v1317
    %v1319 = vmul.f32 %v1318, 1.442695
    %v1320 = vpow.pop %v1319
    %v1321 = vsel %vm751, %v1320, 0.0
    %1322 = vadd.xlane.f32.xlu0 %v1321
    %v1323 = vpop.xlane.xlu0 %1322
    %v1324 = vrcp.pop %v1323
    %v1325 = vmul.f32 %v1320, %v1324
    %v1326 = vpack.c.bf16 %v1325, %v1325
    %1328 = vrot.lane.b32.xlu0 %v668, 120
    %v1329 = vpop.permute.xlu0 %1328
    %v1332 = vsel %vm751, %v1326, 0
    %1334 = vmatprep.subr.bf16.mxu0 0
    %1335 = vmatpush1.bf16.msra.mxu0 %v1329
    %1336 = vmatprep.subr.bf16.mxu0 0
    %1337 = vmatpush1.bf16.msra.mxu0 0
    %1338 = vmatprep.subr.bf16.mxu0 0
    %1339 = vmatpush1.bf16.msra.mxu0 0
    %1340 = vmatprep.subr.bf16.mxu0 0
    %1341 = vmatpush1.bf16.msra.mxu0 0
    %1342 = vmatprep.subr.bf16.mxu0 0
    %1343 = vmatpush1.bf16.msra.mxu0 0
    %1344 = vmatprep.subr.bf16.mxu0 0
    %1345 = vmatpush1.bf16.msra.mxu0 0
    %1346 = vmatprep.subr.bf16.mxu0 0
    %1347 = vmatpush1.bf16.msra.mxu0 0
    %1348 = vmatprep.subr.bf16.mxu0 0
    %1349 = vmatpush1.bf16.msra.mxu0 0
    %1350 = vmatprep.subr.bf16.mxu0 0
    %1351 = vmatpush1.bf16.msra.mxu0 0
    %1352 = vmatprep.subr.bf16.mxu0 0
    %1353 = vmatpush1.bf16.msra.mxu0 0
    %1354 = vmatprep.subr.bf16.mxu0 0
    %1355 = vmatpush1.bf16.msra.mxu0 0
    %1356 = vmatprep.subr.bf16.mxu0 0
    %1357 = vmatpush1.bf16.msra.mxu0 0
    %1358 = vmatprep.subr.bf16.mxu0 0
    %1359 = vmatpush1.bf16.msra.mxu0 0
    %1360 = vmatprep.subr.bf16.mxu0 0
    %1361 = vmatpush1.bf16.msra.mxu0 0
    %1362 = vmatprep.subr.bf16.mxu0 0
    %1363 = vmatpush1.bf16.msra.mxu0 0
    %1364 = vmatprep.subr.bf16.mxu0 0
    %1365 = vmatpush1.bf16.msra.mxu0 0
    %1366 = vmatprep.mubr.bf16.mxu0 0
    %1367 = vmatmul.mubr.bf16.gmra.mrb[0].mxu0 %v1332
    %v1368 = vpop.f32.mrb[0].mxu0
    %v1369 = vadd.f32 0.0, %v1368
    %v1370 = vpop.f32.mrb[0].mxu0
    %v1371 = vpop.f32.mrb[0].mxu0
    %v1372 = vpop.f32.mrb[0].mxu0
    %1373 = vdwg.mxu0
    %v1374 = vpack.c.bf16 %v1369, %v1369
    %v1376 = vrot.slane %v1374, 4
    %1377 = vrot.lane.b32.xlu0 %v1376, 8
    %v1378 = vpop.permute.xlu0 %1377
    %vm1380 = vcmask 130116
    %1381 = vst.msk [vmem:[#allocation2] sm:$0xf0] %vm1380, %v1378
    %1382 = vrot.lane.b32.xlu0 %v1155, 112
    %v1383 = vpop.permute.xlu0 %1382
    %1384 = vrot.lane.b32.xlu0 %v702, 112
    %v1385 = vpop.permute.xlu0 %1384
    %v1387 = vsel %vm703, %v1383, 0
    %v1390 = vsel %vm707, %v1385, 0
    %1392 = vmatprep.subr.bf16.mxu0 0
    %1393 = vmatpush1.bf16.msra.mxu0 %v1390
    %1394 = vmatprep.subr.bf16.mxu0 0
    %1395 = vmatpush1.bf16.msra.mxu0 0
    %1396 = vmatprep.subr.bf16.mxu0 0
    %1397 = vmatpush1.bf16.msra.mxu0 0
    %1398 = vmatprep.subr.bf16.mxu0 0
    %1399 = vmatpush1.bf16.msra.mxu0 0
    %1400 = vmatprep.subr.bf16.mxu0 0
    %1401 = vmatpush1.bf16.msra.mxu0 0
    %1402 = vmatprep.subr.bf16.mxu0 0
    %1403 = vmatpush1.bf16.msra.mxu0 0
    %1404 = vmatprep.subr.bf16.mxu0 0
    %1405 = vmatpush1.bf16.msra.mxu0 0
    %1406 = vmatprep.subr.bf16.mxu0 0
    %1407 = vmatpush1.bf16.msra.mxu0 0
    %1408 = vmatprep.subr.bf16.mxu0 0
    %1409 = vmatpush1.bf16.msra.mxu0 0
    %1410 = vmatprep.subr.bf16.mxu0 0
    %1411 = vmatpush1.bf16.msra.mxu0 0
    %1412 = vmatprep.subr.bf16.mxu0 0
    %1413 = vmatpush1.bf16.msra.mxu0 0
    %1414 = vmatprep.subr.bf16.mxu0 0
    %1415 = vmatpush1.bf16.msra.mxu0 0
    %1416 = vmatprep.subr.bf16.mxu0 0
    %1417 = vmatpush1.bf16.msra.mxu0 0
    %1418 = vmatprep.subr.bf16.mxu0 0
    %1419 = vmatpush1.bf16.msra.mxu0 0
    %1420 = vmatprep.subr.bf16.mxu0 0
    %1421 = vmatpush1.bf16.msra.mxu0 0
    %1422 = vmatprep.subr.bf16.mxu0 0
    %1423 = vmatpush1.bf16.msra.mxu0 0
    %1424 = vmatprep.mubr.bf16.mxu0 0
    %1425 = vmatmul.mubr.bf16.gmra.mrb[0].mxu0 %v1387
    %v1426 = vpop.f32.mrb[0].mxu0
    %v1427 = vadd.f32 0.0, %v1426
    %v1428 = vpop.f32.mrb[0].mxu0
    %v1429 = vpop.f32.mrb[0].mxu0
    %v1430 = vpop.f32.mrb[0].mxu0
    %1431 = vdwg.mxu0
    %v1432 = vsel %vm751, %v1427, -inf
    %1433 = vmax.xlane.f32.xlu0 %v1432
    %v1434 = vpop.xlane.xlu0 %1433
    %v1435 = vsub.f32 %v1427, %v1434
    %v1436 = vmul.f32 %v1435, 1.442695
    %v1437 = vpow.pop %v1436
    %v1438 = vsel %vm751, %v1437, 0.0
    %1439 = vadd.xlane.f32.xlu0 %v1438
    %v1440 = vpop.xlane.xlu0 %1439
    %v1441 = vrcp.pop %v1440
    %v1442 = vmul.f32 %v1437, %v1441
    %v1443 = vpack.c.bf16 %v1442, %v1442
    %1444 = vrot.lane.b32.xlu0 %v668, 112
    %v1445 = vpop.permute.xlu0 %1444
    %v1448 = vsel %vm751, %v1443, 0
    %1450 = vmatprep.subr.bf16.mxu0 0
    %1451 = vmatpush1.bf16.msra.mxu0 %v1445
    %1452 = vmatprep.subr.bf16.mxu0 0
    %1453 = vmatpush1.bf16.msra.mxu0 0
    %1454 = vmatprep.subr.bf16.mxu0 0
    %1455 = vmatpush1.bf16.msra.mxu0 0
    %1456 = vmatprep.subr.bf16.mxu0 0
    %1457 = vmatpush1.bf16.msra.mxu0 0
    %1458 = vmatprep.subr.bf16.mxu0 0
    %1459 = vmatpush1.bf16.msra.mxu0 0
    %1460 = vmatprep.subr.bf16.mxu0 0
    %1461 = vmatpush1.bf16.msra.mxu0 0
    %1462 = vmatprep.subr.bf16.mxu0 0
    %1463 = vmatpush1.bf16.msra.mxu0 0
    %1464 = vmatprep.subr.bf16.mxu0 0
    %1465 = vmatpush1.bf16.msra.mxu0 0
    %1466 = vmatprep.subr.bf16.mxu0 0
    %1467 = vmatpush1.bf16.msra.mxu0 0
    %1468 = vmatprep.subr.bf16.mxu0 0
    %1469 = vmatpush1.bf16.msra.mxu0 0
    %1470 = vmatprep.subr.bf16.mxu0 0
    %1471 = vmatpush1.bf16.msra.mxu0 0
    %1472 = vmatprep.subr.bf16.mxu0 0
    %1473 = vmatpush1.bf16.msra.mxu0 0
    %1474 = vmatprep.subr.bf16.mxu0 0
    %1475 = vmatpush1.bf16.msra.mxu0 0
    %1476 = vmatprep.subr.bf16.mxu0 0
    %1477 = vmatpush1.bf16.msra.mxu0 0
    %1478 = vmatprep.subr.bf16.mxu0 0
    %1479 = vmatpush1.bf16.msra.mxu0 0
    %1480 = vmatprep.subr.bf16.mxu0 0
    %1481 = vmatpush1.bf16.msra.mxu0 0
    %1482 = vmatprep.mubr.bf16.mxu0 0
    %1483 = vmatmul.mubr.bf16.gmra.mrb[0].mxu0 %v1448
    %v1484 = vpop.f32.mrb[0].mxu0
    %v1485 = vadd.f32 0.0, %v1484
    %v1486 = vpop.f32.mrb[0].mxu0
    %v1487 = vpop.f32.mrb[0].mxu0
    %v1488 = vpop.f32.mrb[0].mxu0
    %1489 = vdwg.mxu0
    %v1490 = vpack.c.bf16 %v1485, %v1485
    %v1492 = vrot.slane %v1490, 4
    %1493 = vrot.lane.b32.xlu0 %v1492, 16
    %v1494 = vpop.permute.xlu0 %1493
    %vm1496 = vcmask 195716
    %1497 = vst.msk [vmem:[#allocation2] sm:$0xf0] %vm1496, %v1494
    %1498 = vrot.lane.b32.xlu0 %v1155, 104
    %v1499 = vpop.permute.xlu0 %1498
    %1500 = vrot.lane.b32.xlu0 %v1043, 112
    %v1501 = vpop.permute.xlu0 %1500
    %v1503 = vsel %vm703, %v1499, 0
    %v1506 = vsel %vm707, %v1501, 0
    %1508 = vmatprep.subr.bf16.mxu0 0
    %1509 = vmatpush1.bf16.msra.mxu0 %v1506
    %1510 = vmatprep.subr.bf16.mxu0 0
    %1511 = vmatpush1.bf16.msra.mxu0 0
    %1512 = vmatprep.subr.bf16.mxu0 0
    %1513 = vmatpush1.bf16.msra.mxu0 0
    %1514 = vmatprep.subr.bf16.mxu0 0
    %1515 = vmatpush1.bf16.msra.mxu0 0
    %1516 = vmatprep.subr.bf16.mxu0 0
    %1517 = vmatpush1.bf16.msra.mxu0 0
    %1518 = vmatprep.subr.bf16.mxu0 0
    %1519 = vmatpush1.bf16.msra.mxu0 0
    %1520 = vmatprep.subr.bf16.mxu0 0
    %1521 = vmatpush1.bf16.msra.mxu0 0
    %1522 = vmatprep.subr.bf16.mxu0 0
    %1523 = vmatpush1.bf16.msra.mxu0 0
    %1524 = vmatprep.subr.bf16.mxu0 0
    %1525 = vmatpush1.bf16.msra.mxu0 0
    %1526 = vmatprep.subr.bf16.mxu0 0
    %1527 = vmatpush1.bf16.msra.mxu0 0
    %1528 = vmatprep.subr.bf16.mxu0 0
    %1529 = vmatpush1.bf16.msra.mxu0 0
    %1530 = vmatprep.subr.bf16.mxu0 0
    %1531 = vmatpush1.bf16.msra.mxu0 0
    %1532 = vmatprep.subr.bf16.mxu0 0
    %1533 = vmatpush1.bf16.msra.mxu0 0
    %1534 = vmatprep.subr.bf16.mxu0 0
    %1535 = vmatpush1.bf16.msra.mxu0 0
    %1536 = vmatprep.subr.bf16.mxu0 0
    %1537 = vmatpush1.bf16.msra.mxu0 0
    %1538 = vmatprep.subr.bf16.mxu0 0
    %1539 = vmatpush1.bf16.msra.mxu0 0
    %1540 = vmatprep.mubr.bf16.mxu0 0
    %1541 = vmatmul.mubr.bf16.gmra.mrb[0].mxu0 %v1503
    %v1542 = vpop.f32.mrb[0].mxu0
    %v1543 = vadd.f32 0.0, %v1542
    %v1544 = vpop.f32.mrb[0].mxu0
    %v1545 = vpop.f32.mrb[0].mxu0
    %v1546 = vpop.f32.mrb[0].mxu0
    %1547 = vdwg.mxu0
    %v1548 = vsel %vm751, %v1543, -inf
    %1549 = vmax.xlane.f32.xlu0 %v1548
    %v1550 = vpop.xlane.xlu0 %1549
    %v1551 = vsub.f32 %v1543, %v1550
    %v1552 = vmul.f32 %v1551, 1.442695
    %v1553 = vpow.pop %v1552
    %v1554 = vsel %vm751, %v1553, 0.0
    %1555 = vadd.xlane.f32.xlu0 %v1554
    %v1556 = vpop.xlane.xlu0 %1555
    %v1557 = vrcp.pop %v1556
    %v1558 = vmul.f32 %v1553, %v1557
    %v1559 = vpack.c.bf16 %v1558, %v1558
    %1560 = vrot.lane.b32.xlu0 %v668, 104
    %v1561 = vpop.permute.xlu0 %1560
    %v1564 = vsel %vm751, %v1559, 0
    %1566 = vmatprep.subr.bf16.mxu0 0
    %1567 = vmatpush1.bf16.msra.mxu0 %v1561
    %1568 = vmatprep.subr.bf16.mxu0 0
    %1569 = vmatpush1.bf16.msra.mxu0 0
    %1570 = vmatprep.subr.bf16.mxu0 0
    %1571 = vmatpush1.bf16.msra.mxu0 0
    %1572 = vmatprep.subr.bf16.mxu0 0
    %1573 = vmatpush1.bf16.msra.mxu0 0
    %1574 = vmatprep.subr.bf16.mxu0 0
    %1575 = vmatpush1.bf16.msra.mxu0 0
    %1576 = vmatprep.subr.bf16.mxu0 0
    %1577 = vmatpush1.bf16.msra.mxu0 0
    %1578 = vmatprep.subr.bf16.mxu0 0
    %1579 = vmatpush1.bf16.msra.mxu0 0
    %1580 = vmatprep.subr.bf16.mxu0 0
    %1581 = vmatpush1.bf16.msra.mxu0 0
    %1582 = vmatprep.subr.bf16.mxu0 0
    %1583 = vmatpush1.bf16.msra.mxu0 0
    %1584 = vmatprep.subr.bf16.mxu0 0
    %1585 = vmatpush1.bf16.msra.mxu0 0
    %1586 = vmatprep.subr.bf16.mxu0 0
    %1587 = vmatpush1.bf16.msra.mxu0 0
    %1588 = vmatprep.subr.bf16.mxu0 0
    %1589 = vmatpush1.bf16.msra.mxu0 0
    %1590 = vmatprep.subr.bf16.mxu0 0
    %1591 = vmatpush1.bf16.msra.mxu0 0
    %1592 = vmatprep.subr.bf16.mxu0 0
    %1593 = vmatpush1.bf16.msra.mxu0 0
    %1594 = vmatprep.subr.bf16.mxu0 0
    %1595 = vmatpush1.bf16.msra.mxu0 0
    %1596 = vmatprep.subr.bf16.mxu0 0
    %1597 = vmatpush1.bf16.msra.mxu0 0
    %1598 = vmatprep.mubr.bf16.mxu0 0
    %1599 = vmatmul.mubr.bf16.gmra.mrb[0].mxu0 %v1564
    %v1600 = vpop.f32.mrb[0].mxu0
    %v1601 = vadd.f32 0.0, %v1600
    %v1602 = vpop.f32.mrb[0].mxu0
    %v1603 = vpop.f32.mrb[0].mxu0
    %v1604 = vpop.f32.mrb[0].mxu0
    %1605 = vdwg.mxu0
    %v1606 = vpack.c.bf16 %v1601, %v1601
    %v1608 = vrot.slane %v1606, 4
    %1609 = vrot.lane.b32.xlu0 %v1608, 24
    %v1610 = vpop.permute.xlu0 %1609
    %vm1612 = vcmask 261316
    %1613 = vst.msk [vmem:[#allocation2] sm:$0xf0] %vm1612, %v1610
    %v1614 = vld [vmem:[#allocation2] sm:$0xff]
    %v1615 = vld [vmem:[%s9] sm:$0xf]
    %v1616 = vld [vmem:[%s9 + $0x4] sm:$0xf]
    %v1617 = vld [vmem:[%s9 + $0x8] sm:$0xf]
    %v1618 = vld [vmem:[%s9 + $0xc] sm:$0xf]
    %v1619 = vld [vmem:[%s10] sm:$0x1]
    %v1621 = vlaneseq
    %v1622 = vshrl.u32 %v1621, 7
    %v1623 = vsub.s32 0, %v1622
    %v1624 = vrot.slane %v1619, %v1623
    %v1630 = vunpack.c.l.b16 %v1615
    %v1631 = vunpack.c.l.b16 %v1616
    %v1632 = vunpack.c.l.b16 %v1617
    %v1633 = vunpack.c.l.b16 %v1618
    %v1634 = vpack.c.b16 %v1631, %v1630
    %v1635 = vpack.c.b16 %v1633, %v1632
    %v1639 = vsel %vm465, %v1614, 0
    %1641 = vmatprep.subr.bf16.mxu0 0
    %1642 = vmatpush1.bf16.msra.mxu0 %v1634
    %1643 = vmatprep.subr.bf16.mxu0 0
    %1644 = vmatpush1.bf16.msra.mxu0 %v1635
    %1645 = vmatprep.subr.bf16.mxu0 0
    %1646 = vmatpush1.bf16.msra.mxu0 0
    %1647 = vmatprep.subr.bf16.mxu0 0
    %1648 = vmatpush1.bf16.msra.mxu0 0
    %1649 = vmatprep.subr.bf16.mxu0 0
    %1650 = vmatpush1.bf16.msra.mxu0 0
    %1651 = vmatprep.subr.bf16.mxu0 0
    %1652 = vmatpush1.bf16.msra.mxu0 0
    %1653 = vmatprep.subr.bf16.mxu0 0
    %1654 = vmatpush1.bf16.msra.mxu0 0
    %1655 = vmatprep.subr.bf16.mxu0 0
    %1656 = vmatpush1.bf16.msra.mxu0 0
    %1657 = vmatprep.subr.bf16.mxu0 0
    %1658 = vmatpush1.bf16.msra.mxu0 0
    %1659 = vmatprep.subr.bf16.mxu0 0
    %1660 = vmatpush1.bf16.msra.mxu0 0
    %1661 = vmatprep.subr.bf16.mxu0 0
    %1662 = vmatpush1.bf16.msra.mxu0 0
    %1663 = vmatprep.subr.bf16.mxu0 0
    %1664 = vmatpush1.bf16.msra.mxu0 0
    %1665 = vmatprep.subr.bf16.mxu0 0
    %1666 = vmatpush1.bf16.msra.mxu0 0
    %1667 = vmatprep.subr.bf16.mxu0 0
    %1668 = vmatpush1.bf16.msra.mxu0 0
    %1669 = vmatprep.subr.bf16.mxu0 0
    %1670 = vmatpush1.bf16.msra.mxu0 0
    %1671 = vmatprep.subr.bf16.mxu0 0
    %1672 = vmatpush1.bf16.msra.mxu0 0
    %1673 = vmatprep.mubr.bf16.mxu0 0
    %1674 = vmatmul.mubr.bf16.gmra.mrb[0].mxu0 %v1639
    %v1675 = vpop.f32.mrb[0].mxu0
    %v1676 = vadd.f32 %v1624, %v1675
    %v1677 = vpop.f32.mrb[0].mxu0
    %v1678 = vpop.f32.mrb[0].mxu0
    %v1679 = vadd.f32 %v1624, %v1678
    %v1680 = vpop.f32.mrb[0].mxu0
    %1681 = vdwg.mxu0
    %v1683 = vcombine.high %v1676, %v1676
    %v1685 = vunpack.c.l.s4 1966171168
    %v1686 = vunpack.c.0.s8 %v1685
    %v1687 = vlaneseq
    %v1688 = vshrl.u32 %v1687, 7
    %v1689 = vsub.s32 %v1686, %v1688
    %v1690 = vrot.slane %v1676, %v1689
    %v1692 = vunpack.c.l.s4 1966171168
    %v1693 = vunpack.c.0.s8 %v1692
    %v1694 = vlaneseq
    %v1695 = vshrl.u32 %v1694, 7
    %v1696 = vsub.s32 %v1693, %v1695
    %v1697 = vrot.slane %v1683, %v1696
    %v1698 = vcombine.high %v1690, %v1690
    %v1699 = vcombine.high %v1697, %v1697
    %v1701 = vunpack.c.l.s4 1966171168
    %v1702 = vunpack.c.0.s8 %v1701
    %v1703 = vlaneseq
    %v1704 = vshrl.u32 %v1703, 7
    %v1705 = vsub.s32 %v1702, %v1704
    %v1706 = vrot.slane %v1690, %v1705
    %v1708 = vunpack.c.l.s4 1966171168
    %v1709 = vunpack.c.0.s8 %v1708
    %v1710 = vlaneseq
    %v1711 = vshrl.u32 %v1710, 7
    %v1712 = vsub.s32 %v1709, %v1711
    %v1713 = vrot.slane %v1697, %v1712
    %v1715 = vunpack.c.l.s4 1966171168
    %v1716 = vunpack.c.0.s8 %v1715
    %v1717 = vlaneseq
    %v1718 = vshrl.u32 %v1717, 7
    %v1719 = vsub.s32 %v1716, %v1718
    %v1720 = vrot.slane %v1698, %v1719
    %v1722 = vunpack.c.l.s4 1966171168
    %v1723 = vunpack.c.0.s8 %v1722
    %v1724 = vlaneseq
    %v1725 = vshrl.u32 %v1724, 7
    %v1726 = vsub.s32 %v1723, %v1725
    %v1727 = vrot.slane %v1699, %v1726
    %v1728 = vcombine.high %v1706, %v1706
    %v1729 = vcombine.high %v1713, %v1713
    %v1730 = vcombine.high %v1720, %v1720
    %v1731 = vcombine.high %v1727, %v1727
    %vm1740 = vcmask 253952
    %1741 = vst.msk [vmem:[#allocation14] sm:$0x1] %vm1740, %v1706
    %1742 = vst.msk [vmem:[#allocation14 + $0x2] sm:$0x1] %vm1740, %v1720
    %1743 = vst.msk [vmem:[#allocation14 + $0x4] sm:$0x1] %vm1740, %v1728
    %1744 = vst.msk [vmem:[#allocation14 + $0x6] sm:$0x1] %vm1740, %v1730
    %1745 = vst.msk [vmem:[#allocation14 + $0x8] sm:$0x1] %vm1740, %v1713
    %1746 = vst.msk [vmem:[#allocation14 + $0xa] sm:$0x1] %vm1740, %v1727
    %1747 = vst.msk [vmem:[#allocation14 + $0xc] sm:$0x1] %vm1740, %v1729
    %1748 = vst.msk [vmem:[#allocation14 + $0xe] sm:$0x1] %vm1740, %v1731
    %v1750 = vcombine.high %v1679, %v1679
    %v1752 = vunpack.c.l.s4 1966171168
    %v1753 = vunpack.c.0.s8 %v1752
    %v1754 = vlaneseq
    %v1755 = vshrl.u32 %v1754, 7
    %v1756 = vsub.s32 %v1753, %v1755
    %v1757 = vrot.slane %v1679, %v1756
    %v1759 = vunpack.c.l.s4 1966171168
    %v1760 = vunpack.c.0.s8 %v1759
    %v1761 = vlaneseq
    %v1762 = vshrl.u32 %v1761, 7
    %v1763 = vsub.s32 %v1760, %v1762
    %v1764 = vrot.slane %v1750, %v1763
    %v1765 = vcombine.high %v1757, %v1757
    %v1766 = vcombine.high %v1764, %v1764
    %v1768 = vunpack.c.l.s4 1966171168
    %v1769 = vunpack.c.0.s8 %v1768
    %v1770 = vlaneseq
    %v1771 = vshrl.u32 %v1770, 7
    %v1772 = vsub.s32 %v1769, %v1771
    %v1773 = vrot.slane %v1757, %v1772
    %v1775 = vunpack.c.l.s4 1966171168
    %v1776 = vunpack.c.0.s8 %v1775
    %v1777 = vlaneseq
    %v1778 = vshrl.u32 %v1777, 7
    %v1779 = vsub.s32 %v1776, %v1778
    %v1780 = vrot.slane %v1764, %v1779
    %v1782 = vunpack.c.l.s4 1966171168
    %v1783 = vunpack.c.0.s8 %v1782
    %v1784 = vlaneseq
    %v1785 = vshrl.u32 %v1784, 7
    %v1786 = vsub.s32 %v1783, %v1785
    %v1787 = vrot.slane %v1765, %v1786
    %v1789 = vunpack.c.l.s4 1966171168
    %v1790 = vunpack.c.0.s8 %v1789
    %v1791 = vlaneseq
    %v1792 = vshrl.u32 %v1791, 7
    %v1793 = vsub.s32 %v1790, %v1792
    %v1794 = vrot.slane %v1766, %v1793
    %v1795 = vcombine.high %v1773, %v1773
    %v1796 = vcombine.high %v1780, %v1780
    %v1797 = vcombine.high %v1787, %v1787
    %v1798 = vcombine.high %v1794, %v1794
    %1807 = vst.msk [vmem:[#allocation14 + $0x1] sm:$0x1] %vm1740, %v1773
    %1808 = vst.msk [vmem:[#allocation14 + $0x3] sm:$0x1] %vm1740, %v1787
    %1809 = vst.msk [vmem:[#allocation14 + $0x5] sm:$0x1] %vm1740, %v1795
    %1810 = vst.msk [vmem:[#allocation14 + $0x7] sm:$0x1] %vm1740, %v1797
    %1811 = vst.msk [vmem:[#allocation14 + $0x9] sm:$0x1] %vm1740, %v1780
    %1812 = vst.msk [vmem:[#allocation14 + $0xb] sm:$0x1] %vm1740, %v1794
    %1813 = vst.msk [vmem:[#allocation14 + $0xd] sm:$0x1] %vm1740, %v1796
    %1814 = vst.msk [vmem:[#allocation14 + $0xf] sm:$0x1] %vm1740, %v1798
    // Predicated region
    $region70: #{tpu_custom_call.1} parent=1 // pred_check
      _
    $region71: #{tpu_custom_call.1} parent=1 // pred_check_branch
      %1816 = sbr.rel (0) target = $region73
    $region72: #{tpu_custom_call.1} parent=1 // pred_region
      %s1818 = ssub.s32 256, 256
      %1819 = vsyncadd [#allocation5], %s1818
      %s1820 = sshll.u32 [#allocation14], 4
      %s1821 = int_to_ptr.vmem [resolvable:$true] %s1820
      %1826 = dma.vmem_to_hbm [thread:$0]  %s1821, 256, %s11, [#allocation5], 32, 32, 2
    $region73: #{tpu_custom_call.1} parent=1 // pred_fallthru
      _
    // Predicated region
    $region74: #{tpu_custom_call.1} parent=1 // pred_check
      _
    $region75: #{tpu_custom_call.1} parent=1 // pred_check_branch
      %1828 = sbr.rel (0) target = $region77
    $region76: #{tpu_custom_call.1} parent=1 // pred_region
      %1829 = dma.done [#allocation5], 256
    $region77: #{tpu_custom_call.1} parent=1 // pred_fallthru
      _
    %1830 = vsyncpa [#allocation4], 1
    %1831 = vsyncpa [#allocation7], 1
    %1832 = vsyncpa [#allocation10], 1
    %1833 = vsyncpa [#allocation13], 1
    %1834 = vsyncpa [#allocation5], 1

</llo_original>
